<compile_context>
chip_gen: v6e
topology: v6e:2x2x1
jax: 0.10.0
libtpu: 0.0.40
codegen_flags: <defaults>
</compile_context>

<pallas_src>
import functools

import jax
import jax.numpy as jnp
from jax.experimental import pallas as pl

EPS = 1e-5


def _fused_kernel(gate_ref, x383_ref, x377_ref,
                  w1_ref, g1_ref, b1_ref,
                  w2_ref, g2_ref, b2_ref,
                  out_ref, *, s_real):
    inv_s = 1.0 / s_real

    # --- sigmoid gate folded into w1's input-channel (column) axis ----------
    # y[o,s] = sum_i w1[o,i] * sigmoid(gate[i]) * x383[i,s]
    gate = jax.nn.sigmoid(gate_ref[...])                          # (1, C) f32
    w1s = (w1_ref[...] * gate).astype(jnp.bfloat16)               # (C, C) bf16

    # --- conv2d123: 1x1 conv == channel matmul (bf16 MXU, f32 accumulate) ---
    y = jnp.dot(w1s, x383_ref[...],
                preferred_element_type=jnp.float32)               # (C, Sp) f32

    # --- batchnorm2d75 (training): single-pass sum / sumsq stats ------------
    # Padded lanes of x383 are exact zeros, so columns of y beyond s_real are
    # exact zeros and the sums over the padded width equal sums over s_real.
    mean1 = jnp.sum(y, axis=1, keepdims=True) * inv_s
    msq1 = jnp.sum(y * y, axis=1, keepdims=True) * inv_s
    var1 = msq1 - mean1 * mean1                                   # biased var
    y = (y - mean1) * jax.lax.rsqrt(var1 + EPS) * g1_ref[...] + b1_ref[...]

    # --- residual add + relu; zero padded lanes so BN2 stats stay exact -----
    lane = jax.lax.broadcasted_iota(jnp.int32, y.shape, 1)
    z = jnp.where(lane < s_real,
                  jnp.maximum(x377_ref[...] + y, 0.0),
                  0.0)

    # --- conv2d124 -----------------------------------------------------------
    y2 = jnp.dot(w2_ref[...], z.astype(jnp.bfloat16),
                 preferred_element_type=jnp.float32)              # (C, Sp) f32

    # --- batchnorm2d76 (training) --------------------------------------------
    mean2 = jnp.sum(y2, axis=1, keepdims=True) * inv_s
    msq2 = jnp.sum(y2 * y2, axis=1, keepdims=True) * inv_s
    var2 = msq2 - mean2 * mean2
    out_ref[...] = ((y2 - mean2) * jax.lax.rsqrt(var2 + EPS) * g2_ref[...]
                    + b2_ref[...]).astype(out_ref.dtype)


def fused_forward(x387, x383, x377, w1, g1, b1, w2, g2, b2):
    """Inputs in NCHW (PyTorch convention); returns NCHW float32 output."""
    N, C, H, W = x383.shape
    # TODO(synk): N>1 needs a per-sample gate and an S-tiled two-pass BN (grid
    # over spatial tiles with VMEM sum/sumsq accumulators) to fit v7x VMEM at
    # real batch sizes; the module spec is batch-1, so specialize to N == 1.
    assert N == 1, "kernel currently specialized to batch size 1"
    S = N * H * W
    Sp = ((S + 127) // 128) * 128          # lane-dense (multiple of 128)

    def to_cs(a, dtype):
        a = jnp.transpose(a, (1, 0, 2, 3)).reshape(C, S).astype(dtype)
        return jnp.pad(a, ((0, 0), (0, Sp - S)))

    gate = x387.reshape(1, C).astype(jnp.float32)        # (1, C) row of gates
    x383_cs = to_cs(x383, jnp.bfloat16)                  # (C, Sp) matmul RHS
    x377_cs = to_cs(x377, jnp.float32)                   # (C, Sp) residual

    # bf16 weights: halves the dominant HBM traffic; f32 accumulation in-kernel.
    w1b = w1.astype(jnp.bfloat16)
    w2b = w2.astype(jnp.bfloat16)
    g1c, b1c = g1.reshape(C, 1), b1.reshape(C, 1)
    g2c, b2c = g2.reshape(C, 1), b2.reshape(C, 1)

    full = lambda shape: pl.BlockSpec(shape, lambda: (0,) * len(shape))

    out_cs = pl.pallas_call(
        functools.partial(_fused_kernel, s_real=S),
        out_shape=jax.ShapeDtypeStruct((C, Sp), jnp.float32),
        grid=(),
        in_specs=[
            full((1, C)),     # gate (pre-sigmoid)
            full((C, Sp)),    # x383 (bf16)
            full((C, Sp)),    # x377 (f32)
            full((C, C)),     # w1 (bf16)
            full((C, 1)),     # gamma1
            full((C, 1)),     # beta1
            full((C, C)),     # w2 (bf16)
            full((C, 1)),     # gamma2
            full((C, 1)),     # beta2
        ],
        out_specs=full((C, Sp)),
    )(gate, x383_cs, x377_cs, w1b, g1c, b1c, w2b, g2c, b2c)

    # (C, Sp) -> strip lane padding -> NCHW
    return jnp.transpose(out_cs[:, :S].reshape(C, N, H, W), (1, 0, 2, 3))


if __name__ == "__main__":
    C, H, W, N = 336, 14, 14, 1

    key = jax.random.PRNGKey(0)
    k1, k2, k3, k4, k5 = jax.random.split(key, 5)

    # module inputs (same shapes as the PyTorch script)
    x387 = jax.random.normal(k1, (N, C, 1, 1), dtype=jnp.float32)
    x383 = jax.random.normal(k2, (N, C, H, W), dtype=jnp.float32)
    x377 = jax.random.normal(k3, (N, C, H, W), dtype=jnp.float32)

    # deterministic params (conv weights: small random; BN default gamma=1, beta=0)
    w1 = jax.random.normal(k4, (C, C), dtype=jnp.float32) * (1.0 / jnp.sqrt(C))
    w2 = jax.random.normal(k5, (C, C), dtype=jnp.float32) * (1.0 / jnp.sqrt(C))
    g1 = jnp.ones((C,), jnp.float32)
    b1 = jnp.zeros((C,), jnp.float32)
    g2 = jnp.ones((C,), jnp.float32)
    b2 = jnp.zeros((C,), jnp.float32)

    out = fused_forward(x387, x383, x377, w1, g1, b1, w2, g2, b2)
    jax.block_until_ready(out)
    assert out.shape == (N, C, H, W)
    print("KERNEL_OK")
</pallas_src>

<mosaic_0001>
module attributes {stable_mosaic.version = 11 : i64} {
  func.func @_fused_kernel(%arg0: memref<1x336xf32, #tpu.memory_space<vmem>>, %arg1: memref<336x256xbf16, #tpu.memory_space<vmem>>, %arg2: memref<336x256xf32, #tpu.memory_space<vmem>>, %arg3: memref<336x336xbf16, #tpu.memory_space<vmem>>, %arg4: memref<336x1xf32, #tpu.memory_space<vmem>>, %arg5: memref<336x1xf32, #tpu.memory_space<vmem>>, %arg6: memref<336x336xbf16, #tpu.memory_space<vmem>>, %arg7: memref<336x1xf32, #tpu.memory_space<vmem>>, %arg8: memref<336x1xf32, #tpu.memory_space<vmem>>, %arg9: memref<336x256xf32, #tpu.memory_space<vmem>>) attributes {dimension_semantics = [], scalar_prefetch = 0 : i64, scratch_operands = 0 : i64, tpu.core_type = #tpu.core_type<tc>} {
    %c0 = arith.constant 0 : index
    %c0_0 = arith.constant 0 : index
    %0 = vector.load %arg0[%c0, %c0_0] : memref<1x336xf32, #tpu.memory_space<vmem>>, vector<1x336xf32>
    %1 = arith.negf %0 : vector<1x336xf32>
    %2 = math.exp %1 : vector<1x336xf32>
    %cst = arith.constant 1.000000e+00 : f32
    %3 = vector.broadcast %cst : f32 to vector<1x336xf32>
    %4 = arith.addf %3, %2 : vector<1x336xf32>
    %5 = arith.divf %3, %4 : vector<1x336xf32>
    %c0_1 = arith.constant 0 : index
    %c0_2 = arith.constant 0 : index
    %6 = vector.load %arg3[%c0_1, %c0_2] : memref<336x336xbf16, #tpu.memory_space<vmem>>, vector<336x336xbf16>
    %7 = arith.extf %6 : vector<336x336xbf16> to vector<336x336xf32>
    %8 = vector.broadcast %5 : vector<1x336xf32> to vector<336x336xf32>
    %9 = arith.mulf %7, %8 : vector<336x336xf32>
    %10 = arith.truncf %9 : vector<336x336xf32> to vector<336x336xbf16>
    %c0_3 = arith.constant 0 : index
    %c0_4 = arith.constant 0 : index
    %11 = vector.load %arg1[%c0_3, %c0_4] : memref<336x256xbf16, #tpu.memory_space<vmem>>, vector<336x256xbf16>
    %cst_5 = arith.constant dense<0.000000e+00> : vector<336x256xf32>
    %12 = tpu.matmul %10, %11, %cst_5 {dimension_numbers = #tpu.dot_dimension_numbers<[1], [0], [0], [1], [0, 0, 1, 1], [], []>} : vector<336x336xbf16>, vector<336x256xbf16>, vector<336x256xf32> -> vector<336x256xf32>
    %cst_6 = arith.constant dense<0.000000e+00> : vector<336xf32>
    %13 = vector.multi_reduction <add>, %12, %cst_6 [1] : vector<336x256xf32> to vector<336xf32>
    %14 = vector.shape_cast %13 : vector<336xf32> to vector<336x1xf32>
    %cst_7 = arith.constant 0.00510204071 : f32
    %15 = vector.broadcast %cst_7 : f32 to vector<336x1xf32>
    %16 = arith.mulf %14, %15 : vector<336x1xf32>
    %17 = arith.mulf %12, %12 : vector<336x256xf32>
    %cst_8 = arith.constant dense<0.000000e+00> : vector<336xf32>
    %18 = vector.multi_reduction <add>, %17, %cst_8 [1] : vector<336x256xf32> to vector<336xf32>
    %19 = vector.shape_cast %18 : vector<336xf32> to vector<336x1xf32>
    %cst_9 = arith.constant 0.00510204071 : f32
    %20 = vector.broadcast %cst_9 : f32 to vector<336x1xf32>
    %21 = arith.mulf %19, %20 : vector<336x1xf32>
    %22 = arith.mulf %16, %16 : vector<336x1xf32>
    %23 = arith.subf %21, %22 : vector<336x1xf32>
    %24 = vector.broadcast %16 : vector<336x1xf32> to vector<336x256xf32>
    %25 = arith.subf %12, %24 : vector<336x256xf32>
    %cst_10 = arith.constant 9.99999974E-6 : f32
    %26 = vector.broadcast %cst_10 : f32 to vector<336x1xf32>
    %27 = arith.addf %23, %26 : vector<336x1xf32>
    %28 = math.rsqrt %27 : vector<336x1xf32>
    %29 = vector.broadcast %28 : vector<336x1xf32> to vector<336x256xf32>
    %30 = arith.mulf %25, %29 : vector<336x256xf32>
    %c0_11 = arith.constant 0 : index
    %c0_12 = arith.constant 0 : index
    %31 = vector.load %arg4[%c0_11, %c0_12] : memref<336x1xf32, #tpu.memory_space<vmem>>, vector<336x1xf32>
    %32 = vector.broadcast %31 : vector<336x1xf32> to vector<336x256xf32>
    %33 = arith.mulf %30, %32 : vector<336x256xf32>
    %c0_13 = arith.constant 0 : index
    %c0_14 = arith.constant 0 : index
    %34 = vector.load %arg5[%c0_13, %c0_14] : memref<336x1xf32, #tpu.memory_space<vmem>>, vector<336x1xf32>
    %35 = vector.broadcast %34 : vector<336x1xf32> to vector<336x256xf32>
    %36 = arith.addf %33, %35 : vector<336x256xf32>
    %37 = tpu.iota {dimensions = array<i32: 1>} : vector<336x256xi32>
    %c196_i32 = arith.constant 196 : i32
    %38 = vector.broadcast %c196_i32 : i32 to vector<336x256xi32>
    %39 = arith.cmpi slt, %37, %38 : vector<336x256xi32>
    %c0_15 = arith.constant 0 : index
    %c0_16 = arith.constant 0 : index
    %40 = vector.load %arg2[%c0_15, %c0_16] : memref<336x256xf32, #tpu.memory_space<vmem>>, vector<336x256xf32>
    %41 = arith.addf %40, %36 : vector<336x256xf32>
    %cst_17 = arith.constant 0.000000e+00 : f32
    %42 = vector.broadcast %cst_17 : f32 to vector<336x256xf32>
    %43 = arith.maximumf %41, %42 : vector<336x256xf32>
    %cst_18 = arith.constant 0.000000e+00 : f32
    %44 = vector.broadcast %cst_18 : f32 to vector<336x256xf32>
    %45 = arith.select %39, %43, %44 : vector<336x256xi1>, vector<336x256xf32>
    %c0_19 = arith.constant 0 : index
    %c0_20 = arith.constant 0 : index
    %46 = vector.load %arg6[%c0_19, %c0_20] : memref<336x336xbf16, #tpu.memory_space<vmem>>, vector<336x336xbf16>
    %47 = arith.truncf %45 : vector<336x256xf32> to vector<336x256xbf16>
    %cst_21 = arith.constant dense<0.000000e+00> : vector<336x256xf32>
    %48 = tpu.matmul %46, %47, %cst_21 {dimension_numbers = #tpu.dot_dimension_numbers<[1], [0], [0], [1], [0, 0, 1, 1], [], []>} : vector<336x336xbf16>, vector<336x256xbf16>, vector<336x256xf32> -> vector<336x256xf32>
    %cst_22 = arith.constant dense<0.000000e+00> : vector<336xf32>
    %49 = vector.multi_reduction <add>, %48, %cst_22 [1] : vector<336x256xf32> to vector<336xf32>
    %50 = vector.shape_cast %49 : vector<336xf32> to vector<336x1xf32>
    %cst_23 = arith.constant 0.00510204071 : f32
    %51 = vector.broadcast %cst_23 : f32 to vector<336x1xf32>
    %52 = arith.mulf %50, %51 : vector<336x1xf32>
    %53 = arith.mulf %48, %48 : vector<336x256xf32>
    %cst_24 = arith.constant dense<0.000000e+00> : vector<336xf32>
    %54 = vector.multi_reduction <add>, %53, %cst_24 [1] : vector<336x256xf32> to vector<336xf32>
    %55 = vector.shape_cast %54 : vector<336xf32> to vector<336x1xf32>
    %cst_25 = arith.constant 0.00510204071 : f32
    %56 = vector.broadcast %cst_25 : f32 to vector<336x1xf32>
    %57 = arith.mulf %55, %56 : vector<336x1xf32>
    %58 = arith.mulf %52, %52 : vector<336x1xf32>
    %59 = arith.subf %57, %58 : vector<336x1xf32>
    %60 = vector.broadcast %52 : vector<336x1xf32> to vector<336x256xf32>
    %61 = arith.subf %48, %60 : vector<336x256xf32>
    %cst_26 = arith.constant 9.99999974E-6 : f32
    %62 = vector.broadcast %cst_26 : f32 to vector<336x1xf32>
    %63 = arith.addf %59, %62 : vector<336x1xf32>
    %64 = math.rsqrt %63 : vector<336x1xf32>
    %65 = vector.broadcast %64 : vector<336x1xf32> to vector<336x256xf32>
    %66 = arith.mulf %61, %65 : vector<336x256xf32>
    %c0_27 = arith.constant 0 : index
    %c0_28 = arith.constant 0 : index
    %67 = vector.load %arg7[%c0_27, %c0_28] : memref<336x1xf32, #tpu.memory_space<vmem>>, vector<336x1xf32>
    %68 = vector.broadcast %67 : vector<336x1xf32> to vector<336x256xf32>
    %69 = arith.mulf %66, %68 : vector<336x256xf32>
    %c0_29 = arith.constant 0 : index
    %c0_30 = arith.constant 0 : index
    %70 = vector.load %arg8[%c0_29, %c0_30] : memref<336x1xf32, #tpu.memory_space<vmem>>, vector<336x1xf32>
    %71 = vector.broadcast %70 : vector<336x1xf32> to vector<336x256xf32>
    %72 = arith.addf %69, %71 : vector<336x256xf32>
    %c0_31 = arith.constant 0 : index
    %c0_32 = arith.constant 0 : index
    %73 = vector.load %arg9[%c0_31, %c0_32] : memref<336x256xf32, #tpu.memory_space<vmem>>, vector<336x256xf32>
    tpu.vector_store %arg9[%c0_31, %c0_32], %72 {strides = array<i32>} : memref<336x256xf32, #tpu.memory_space<vmem>>, vector<336x256xf32>,
    return
  }
}

</mosaic_0001>

<llo_original>
// kernel: tpu_custom_call.1
$region0: #{tpu_custom_call.1}
  #allocation0 [shape = 'u32[]', space=smem, size = 0x4, offset = 0x4, fixed_abs, tag = 'smem constant byte address 0x4 - core index']
  #allocation1 [shape = 'u32[144,128]{1,0:T(1,128)}', space=vmem, size = 0x12000, scoped, tag = 'internal scratch']
  %s0 = inlined_call_operand.vmem [shape: f32[1,336], index: 0, kind: input, shape index: {}]
  %s1 = inlined_call_operand.hbm [shape: bf16[336,256], index: 1, kind: input, shape index: {}]
  %s2 = inlined_call_operand.vmem [shape: f32[336,256], index: 2, kind: input, shape index: {}]
  %s3 = inlined_call_operand.vmem [shape: bf16[336,336], index: 3, kind: input, shape index: {}]
  %s4 = inlined_call_operand.vmem [shape: f32[336,1], index: 4, kind: input, shape index: {}]
  %s5 = inlined_call_operand.vmem [shape: f32[336,1], index: 5, kind: input, shape index: {}]
  %s6 = inlined_call_operand.hbm [shape: bf16[336,336], index: 6, kind: input, shape index: {}]
  %s7 = inlined_call_operand.vmem [shape: f32[336,1], index: 7, kind: input, shape index: {}]
  %s8 = inlined_call_operand.vmem [shape: f32[336,1], index: 8, kind: input, shape index: {}]
  %s9 = inlined_call_operand.hbm [shape: f32[336,256], index: 9, kind: output, shape index: {}]
  %s10 = sld [smem:[#allocation0]]
  $region54: #{tpu_custom_call.1} parent=0
    _
  %s12 = ssub.s32 1, %s10
  %s13 = scalar_select 0, %s12, %s10
  $region1: #{tpu_custom_call.1} parent=0
    #allocation2 [shape = 'u8[172032]{0}', space=vmem, size = 0x2a000, scoped, tag = 'input window, operand 1, single buffered']
    #allocation3 [shape = 's32[1]{0}', space=sflag, size = 0x4, scoped, tag = 'scoped memory for tpu_custom_call.1']
    #allocation4 [shape = 's32[1]{0}', space=sflag, size = 0x4, scoped, tag = 'scoped memory for tpu_custom_call.1']
    #allocation5 [shape = 'u8[258048]{0}', space=vmem, size = 0x3f000, scoped, tag = 'input window, operand 6, single buffered']
    #allocation6 [shape = 's32[1]{0}', space=sflag, size = 0x4, scoped, tag = 'scoped memory for tpu_custom_call.1']
    #allocation7 [shape = 'u8[344064]{0}', space=vmem, size = 0x54000, scoped, tag = 'output window, operand 0, single buffered']
    %14 = vsyncpa [#allocation3], 0
    %15 = vsyncpa [#allocation6], 0
    %16 = vsyncpa [#allocation4], 0
    // Predicated region
    $region2: #{tpu_custom_call.1} parent=1 // pred_check
      _
    $region3: #{tpu_custom_call.1} parent=1 // pred_check_branch
      %18 = sbr.rel (0) target = $region5
    $region4: #{tpu_custom_call.1} parent=1 // pred_region
      _
    $region5: #{tpu_custom_call.1} parent=1 // pred_fallthru
      _
    // Predicated region
    $region6: #{tpu_custom_call.1} parent=1 // pred_check
      _
    $region7: #{tpu_custom_call.1} parent=1 // pred_check_branch
      %20 = sbr.rel (0) target = $region9
    $region8: #{tpu_custom_call.1} parent=1 // pred_region
      %s22 = ssub.s32 5376, 5376
      %23 = vsyncadd [#allocation3], %s22
      %s24 = sshll.u32 [#allocation2], 4
      %s25 = int_to_ptr.vmem [resolvable:$true] %s24
      %30 = dma.hbm_to_vmem [thread:$0]  %s1, 5376, %s25, [#allocation3], 128, 128, 8
    $region9: #{tpu_custom_call.1} parent=1 // pred_fallthru
      _
    // Predicated region
    $region10: #{tpu_custom_call.1} parent=1 // pred_check
      _
    $region11: #{tpu_custom_call.1} parent=1 // pred_check_branch
      %32 = sbr.rel (0) target = $region13
    $region12: #{tpu_custom_call.1} parent=1 // pred_region
      _
    $region13: #{tpu_custom_call.1} parent=1 // pred_fallthru
      _
    // Predicated region
    $region14: #{tpu_custom_call.1} parent=1 // pred_check
      _
    $region15: #{tpu_custom_call.1} parent=1 // pred_check_branch
      %34 = sbr.rel (0) target = $region17
    $region16: #{tpu_custom_call.1} parent=1 // pred_region
      _
    $region17: #{tpu_custom_call.1} parent=1 // pred_fallthru
      _
    // Predicated region
    $region18: #{tpu_custom_call.1} parent=1 // pred_check
      _
    $region19: #{tpu_custom_call.1} parent=1 // pred_check_branch
      %36 = sbr.rel (0) target = $region21
    $region20: #{tpu_custom_call.1} parent=1 // pred_region
      _
    $region21: #{tpu_custom_call.1} parent=1 // pred_fallthru
      _
    // Predicated region
    $region22: #{tpu_custom_call.1} parent=1 // pred_check
      _
    $region23: #{tpu_custom_call.1} parent=1 // pred_check_branch
      %38 = sbr.rel (0) target = $region25
    $region24: #{tpu_custom_call.1} parent=1 // pred_region
      _
    $region25: #{tpu_custom_call.1} parent=1 // pred_fallthru
      _
    // Predicated region
    $region26: #{tpu_custom_call.1} parent=1 // pred_check
      _
    $region27: #{tpu_custom_call.1} parent=1 // pred_check_branch
      %40 = sbr.rel (0) target = $region29
    $region28: #{tpu_custom_call.1} parent=1 // pred_region
      %s42 = ssub.s32 8064, 8064
      %43 = vsyncadd [#allocation6], %s42
      %s44 = sshll.u32 [#allocation5], 4
      %s45 = int_to_ptr.vmem [resolvable:$true] %s44
      %50 = dma.hbm_to_vmem [thread:$0]  %s6, 8064, %s45, [#allocation6], 192, 192, 12
    $region29: #{tpu_custom_call.1} parent=1 // pred_fallthru
      _
    // Predicated region
    $region30: #{tpu_custom_call.1} parent=1 // pred_check
      _
    $region31: #{tpu_custom_call.1} parent=1 // pred_check_branch
      %52 = sbr.rel (0) target = $region33
    $region32: #{tpu_custom_call.1} parent=1 // pred_region
      _
    $region33: #{tpu_custom_call.1} parent=1 // pred_fallthru
      _
    // Predicated region
    $region34: #{tpu_custom_call.1} parent=1 // pred_check
      _
    $region35: #{tpu_custom_call.1} parent=1 // pred_check_branch
      %54 = sbr.rel (0) target = $region37
    $region36: #{tpu_custom_call.1} parent=1 // pred_region
      _
    $region37: #{tpu_custom_call.1} parent=1 // pred_fallthru
      _
    // Predicated region
    $region38: #{tpu_custom_call.1} parent=1 // pred_check
      _
    $region39: #{tpu_custom_call.1} parent=1 // pred_check_branch
      %56 = sbr.rel (0) target = $region41
    $region40: #{tpu_custom_call.1} parent=1 // pred_region
      %57 = dma.done [#allocation3], 5376
    $region41: #{tpu_custom_call.1} parent=1 // pred_fallthru
      _
    // Predicated region
    $region42: #{tpu_custom_call.1} parent=1 // pred_check
      _
    $region43: #{tpu_custom_call.1} parent=1 // pred_check_branch
      %59 = sbr.rel (0) target = $region45
    $region44: #{tpu_custom_call.1} parent=1 // pred_region
      %60 = dma.done [#allocation6], 8064
    $region45: #{tpu_custom_call.1} parent=1 // pred_fallthru
      _
    %v62 = vld [vmem:[%s0] sm:$0x7]
    %v63 = vxor.u32 %v62, 2147483648
    %v64 = vmul.f32 %v63, 1.442695
    %v65 = vpow.pop %v64
    %v66 = vadd.f32 %v65, 1.0
    %v67 = vrcp.pop %v66
    %v68 = vmul.f32 1.0, %v67
    %v69 = vld [vmem:[%s3] sm:$0xff]
    %v70 = vld [vmem:[%s3 + $0x8] sm:$0xf]
    %v71 = vld [vmem:[%s3 + $0xc] sm:$0xff]
    %v72 = vld [vmem:[%s3 + $0x14] sm:$0xf]
    %v73 = vld [vmem:[%s3 + $0x18] sm:$0xff]
    %v74 = vld [vmem:[%s3 + $0x20] sm:$0xf]
    %v75 = vld [vmem:[%s3 + $0x24] sm:$0xff]
    %v76 = vld [vmem:[%s3 + $0x2c] sm:$0xf]
    %v77 = vld [vmem:[%s3 + $0x30] sm:$0xff]
    %v78 = vld [vmem:[%s3 + $0x38] sm:$0xf]
    %v79 = vld [vmem:[%s3 + $0x3c] sm:$0xff]
    %v80 = vld [vmem:[%s3 + $0x44] sm:$0xf]
    %v81 = vld [vmem:[%s3 + $0x48] sm:$0xff]
    %v82 = vld [vmem:[%s3 + $0x50] sm:$0xf]
    %v83 = vld [vmem:[%s3 + $0x54] sm:$0xff]
    %v84 = vld [vmem:[%s3 + $0x5c] sm:$0xf]
    %v85 = vld [vmem:[%s3 + $0x60] sm:$0xff]
    %v86 = vld [vmem:[%s3 + $0x68] sm:$0xf]
    %v87 = vld [vmem:[%s3 + $0x6c] sm:$0xff]
    %v88 = vld [vmem:[%s3 + $0x74] sm:$0xf]
    %v89 = vld [vmem:[%s3 + $0x78] sm:$0xff]
    %v90 = vld [vmem:[%s3 + $0x80] sm:$0xf]
    %v91 = vld [vmem:[%s3 + $0x84] sm:$0xff]
    %v92 = vld [vmem:[%s3 + $0x8c] sm:$0xf]
    %v93 = vld [vmem:[%s3 + $0x90] sm:$0xff]
    %v94 = vld [vmem:[%s3 + $0x98] sm:$0xf]
    %v95 = vld [vmem:[%s3 + $0x9c] sm:$0xff]
    %v96 = vld [vmem:[%s3 + $0xa4] sm:$0xf]
    %v97 = vld [vmem:[%s3 + $0xa8] sm:$0xff]
    %v98 = vld [vmem:[%s3 + $0xb0] sm:$0xf]
    %v99 = vld [vmem:[%s3 + $0xb4] sm:$0xff]
    %v100 = vld [vmem:[%s3 + $0xbc] sm:$0xf]
    %v101 = vld [vmem:[%s3 + $0xc0] sm:$0xff]
    %v102 = vld [vmem:[%s3 + $0xc8] sm:$0xf]
    %v103 = vld [vmem:[%s3 + $0xcc] sm:$0xff]
    %v104 = vld [vmem:[%s3 + $0xd4] sm:$0xf]
    %v105 = vld [vmem:[%s3 + $0xd8] sm:$0xff]
    %v106 = vld [vmem:[%s3 + $0xe0] sm:$0xf]
    %v107 = vld [vmem:[%s3 + $0xe4] sm:$0xff]
    %v108 = vld [vmem:[%s3 + $0xec] sm:$0xf]
    %v109 = vld [vmem:[%s3 + $0xf0] sm:$0xff]
    %v110 = vld [vmem:[%s3 + $0xf8] sm:$0xf]
    %v111 = vld [vmem:[%s3 + $0xfc] sm:$0xff]
    %v112 = vld [vmem:[%s3 + $0x104] sm:$0xf]
    %v113 = vld [vmem:[%s3 + $0x108] sm:$0xff]
    %v114 = vld [vmem:[%s3 + $0x110] sm:$0xf]
    %v115 = vld [vmem:[%s3 + $0x114] sm:$0xff]
    %v116 = vld [vmem:[%s3 + $0x11c] sm:$0xf]
    %v117 = vld [vmem:[%s3 + $0x120] sm:$0xff]
    %v118 = vld [vmem:[%s3 + $0x128] sm:$0xf]
    %v119 = vld [vmem:[%s3 + $0x12c] sm:$0xff]
    %v120 = vld [vmem:[%s3 + $0x134] sm:$0xf]
    %v121 = vld [vmem:[%s3 + $0x138] sm:$0xff]
    %v122 = vld [vmem:[%s3 + $0x140] sm:$0xf]
    %v123 = vld [vmem:[%s3 + $0x144] sm:$0xff]
    %v124 = vld [vmem:[%s3 + $0x14c] sm:$0xf]
    %v125 = vld [vmem:[%s3 + $0x150] sm:$0xff]
    %v126 = vld [vmem:[%s3 + $0x158] sm:$0xf]
    %v127 = vld [vmem:[%s3 + $0x15c] sm:$0xff]
    %v128 = vld [vmem:[%s3 + $0x164] sm:$0xf]
    %v129 = vld [vmem:[%s3 + $0x168] sm:$0xff]
    %v130 = vld [vmem:[%s3 + $0x170] sm:$0xf]
    %v131 = vld [vmem:[%s3 + $0x174] sm:$0xff]
    %v132 = vld [vmem:[%s3 + $0x17c] sm:$0xf]
    %v133 = vld [vmem:[%s3 + $0x180] sm:$0xff]
    %v134 = vld [vmem:[%s3 + $0x188] sm:$0xf]
    %v135 = vld [vmem:[%s3 + $0x18c] sm:$0xff]
    %v136 = vld [vmem:[%s3 + $0x194] sm:$0xf]
    %v137 = vld [vmem:[%s3 + $0x198] sm:$0xff]
    %v138 = vld [vmem:[%s3 + $0x1a0] sm:$0xf]
    %v139 = vld [vmem:[%s3 + $0x1a4] sm:$0xff]
    %v140 = vld [vmem:[%s3 + $0x1ac] sm:$0xf]
    %v141 = vld [vmem:[%s3 + $0x1b0] sm:$0xff]
    %v142 = vld [vmem:[%s3 + $0x1b8] sm:$0xf]
    %v143 = vld [vmem:[%s3 + $0x1bc] sm:$0xff]
    %v144 = vld [vmem:[%s3 + $0x1c4] sm:$0xf]
    %v145 = vld [vmem:[%s3 + $0x1c8] sm:$0xff]
    %v146 = vld [vmem:[%s3 + $0x1d0] sm:$0xf]
    %v147 = vld [vmem:[%s3 + $0x1d4] sm:$0xff]
    %v148 = vld [vmem:[%s3 + $0x1dc] sm:$0xf]
    %v149 = vld [vmem:[%s3 + $0x1e0] sm:$0xff]
    %v150 = vld [vmem:[%s3 + $0x1e8] sm:$0xf]
    %v151 = vld [vmem:[%s3 + $0x1ec] sm:$0xff]
    %v152 = vld [vmem:[%s3 + $0x1f4] sm:$0xf]
    %v153 = vunpack.c.l.bf16 %v69
    %v154 = vunpack.c.h.bf16 %v69
    %v155 = vunpack.c.l.bf16 %v70
    %v156 = vunpack.c.l.bf16 %v71
    %v157 = vunpack.c.h.bf16 %v71
    %v158 = vunpack.c.l.bf16 %v72
    %v159 = vunpack.c.l.bf16 %v73
    %v160 = vunpack.c.h.bf16 %v73
    %v161 = vunpack.c.l.bf16 %v74
    %v162 = vunpack.c.l.bf16 %v75
    %v163 = vunpack.c.h.bf16 %v75
    %v164 = vunpack.c.l.bf16 %v76
    %v165 = vunpack.c.l.bf16 %v77
    %v166 = vunpack.c.h.bf16 %v77
    %v167 = vunpack.c.l.bf16 %v78
    %v168 = vunpack.c.l.bf16 %v79
    %v169 = vunpack.c.h.bf16 %v79
    %v170 = vunpack.c.l.bf16 %v80
    %v171 = vunpack.c.l.bf16 %v81
    %v172 = vunpack.c.h.bf16 %v81
    %v173 = vunpack.c.l.bf16 %v82
    %v174 = vunpack.c.l.bf16 %v83
    %v175 = vunpack.c.h.bf16 %v83
    %v176 = vunpack.c.l.bf16 %v84
    %v177 = vunpack.c.l.bf16 %v85
    %v178 = vunpack.c.h.bf16 %v85
    %v179 = vunpack.c.l.bf16 %v86
    %v180 = vunpack.c.l.bf16 %v87
    %v181 = vunpack.c.h.bf16 %v87
    %v182 = vunpack.c.l.bf16 %v88
    %v183 = vunpack.c.l.bf16 %v89
    %v184 = vunpack.c.h.bf16 %v89
    %v185 = vunpack.c.l.bf16 %v90
    %v186 = vunpack.c.l.bf16 %v91
    %v187 = vunpack.c.h.bf16 %v91
    %v188 = vunpack.c.l.bf16 %v92
    %v189 = vunpack.c.l.bf16 %v93
    %v190 = vunpack.c.h.bf16 %v93
    %v191 = vunpack.c.l.bf16 %v94
    %v192 = vunpack.c.l.bf16 %v95
    %v193 = vunpack.c.h.bf16 %v95
    %v194 = vunpack.c.l.bf16 %v96
    %v195 = vunpack.c.l.bf16 %v97
    %v196 = vunpack.c.h.bf16 %v97
    %v197 = vunpack.c.l.bf16 %v98
    %v198 = vunpack.c.l.bf16 %v99
    %v199 = vunpack.c.h.bf16 %v99
    %v200 = vunpack.c.l.bf16 %v100
    %v201 = vunpack.c.l.bf16 %v101
    %v202 = vunpack.c.h.bf16 %v101
    %v203 = vunpack.c.l.bf16 %v102
    %v204 = vunpack.c.l.bf16 %v103
    %v205 = vunpack.c.h.bf16 %v103
    %v206 = vunpack.c.l.bf16 %v104
    %v207 = vunpack.c.l.bf16 %v105
    %v208 = vunpack.c.h.bf16 %v105
    %v209 = vunpack.c.l.bf16 %v106
    %v210 = vunpack.c.l.bf16 %v107
    %v211 = vunpack.c.h.bf16 %v107
    %v212 = vunpack.c.l.bf16 %v108
    %v213 = vunpack.c.l.bf16 %v109
    %v214 = vunpack.c.h.bf16 %v109
    %v215 = vunpack.c.l.bf16 %v110
    %v216 = vunpack.c.l.bf16 %v111
    %v217 = vunpack.c.h.bf16 %v111
    %v218 = vunpack.c.l.bf16 %v112
    %v219 = vunpack.c.l.bf16 %v113
    %v220 = vunpack.c.h.bf16 %v113
    %v221 = vunpack.c.l.bf16 %v114
    %v222 = vunpack.c.l.bf16 %v115
    %v223 = vunpack.c.h.bf16 %v115
    %v224 = vunpack.c.l.bf16 %v116
    %v225 = vunpack.c.l.bf16 %v117
    %v226 = vunpack.c.h.bf16 %v117
    %v227 = vunpack.c.l.bf16 %v118
    %v228 = vunpack.c.l.bf16 %v119
    %v229 = vunpack.c.h.bf16 %v119
    %v230 = vunpack.c.l.bf16 %v120
    %v231 = vunpack.c.l.bf16 %v121
    %v232 = vunpack.c.h.bf16 %v121
    %v233 = vunpack.c.l.bf16 %v122
    %v234 = vunpack.c.l.bf16 %v123
    %v235 = vunpack.c.h.bf16 %v123
    %v236 = vunpack.c.l.bf16 %v124
    %v237 = vunpack.c.l.bf16 %v125
    %v238 = vunpack.c.h.bf16 %v125
    %v239 = vunpack.c.l.bf16 %v126
    %v240 = vunpack.c.l.bf16 %v127
    %v241 = vunpack.c.h.bf16 %v127
    %v242 = vunpack.c.l.bf16 %v128
    %v243 = vunpack.c.l.bf16 %v129
    %v244 = vunpack.c.h.bf16 %v129
    %v245 = vunpack.c.l.bf16 %v130
    %v246 = vunpack.c.l.bf16 %v131
    %v247 = vunpack.c.h.bf16 %v131
    %v248 = vunpack.c.l.bf16 %v132
    %v249 = vunpack.c.l.bf16 %v133
    %v250 = vunpack.c.h.bf16 %v133
    %v251 = vunpack.c.l.bf16 %v134
    %v252 = vunpack.c.l.bf16 %v135
    %v253 = vunpack.c.h.bf16 %v135
    %v254 = vunpack.c.l.bf16 %v136
    %v255 = vunpack.c.l.bf16 %v137
    %v256 = vunpack.c.h.bf16 %v137
    %v257 = vunpack.c.l.bf16 %v138
    %v258 = vunpack.c.l.bf16 %v139
    %v259 = vunpack.c.h.bf16 %v139
    %v260 = vunpack.c.l.bf16 %v140
    %v261 = vunpack.c.l.bf16 %v141
    %v262 = vunpack.c.h.bf16 %v141
    %v263 = vunpack.c.l.bf16 %v142
    %v264 = vunpack.c.l.bf16 %v143
    %v265 = vunpack.c.h.bf16 %v143
    %v266 = vunpack.c.l.bf16 %v144
    %v267 = vunpack.c.l.bf16 %v145
    %v268 = vunpack.c.h.bf16 %v145
    %v269 = vunpack.c.l.bf16 %v146
    %v270 = vunpack.c.l.bf16 %v147
    %v271 = vunpack.c.h.bf16 %v147
    %v272 = vunpack.c.l.bf16 %v148
    %v273 = vunpack.c.l.bf16 %v149
    %v274 = vunpack.c.h.bf16 %v149
    %v275 = vunpack.c.l.bf16 %v150
    %v276 = vunpack.c.l.bf16 %v151
    %v277 = vunpack.c.h.bf16 %v151
    %v278 = vunpack.c.l.bf16 %v152
    %v280 = vlaneseq
    %v281 = vshrl.u32 %v280, 7
    %v282 = vsub.s32 0, %v281
    %v283 = vrot.slane %v68, %v282
    %v284 = vlaneseq
    %v285 = vshrl.u32 %v284, 7
    %v286 = vsub.s32 1, %v285
    %v287 = vrot.slane %v68, %v286
    %v288 = vlaneseq
    %v289 = vshrl.u32 %v288, 7
    %v290 = vsub.s32 2, %v289
    %v291 = vrot.slane %v68, %v290
    %v295 = vmul.f32 %v153, %v283
    %v296 = vmul.f32 %v154, %v287
    %v297 = vmul.f32 %v155, %v291
    %v298 = vmul.f32 %v156, %v283
    %v299 = vmul.f32 %v157, %v287
    %v300 = vmul.f32 %v158, %v291
    %v301 = vmul.f32 %v159, %v283
    %v302 = vmul.f32 %v160, %v287
    %v303 = vmul.f32 %v161, %v291
    %v304 = vmul.f32 %v162, %v283
    %v305 = vmul.f32 %v163, %v287
    %v306 = vmul.f32 %v164, %v291
    %v307 = vmul.f32 %v165, %v283
    %v308 = vmul.f32 %v166, %v287
    %v309 = vmul.f32 %v167, %v291
    %v310 = vmul.f32 %v168, %v283
    %v311 = vmul.f32 %v169, %v287
    %v312 = vmul.f32 %v170, %v291
    %v313 = vmul.f32 %v171, %v283
    %v314 = vmul.f32 %v172, %v287
    %v315 = vmul.f32 %v173, %v291
    %v316 = vmul.f32 %v174, %v283
    %v317 = vmul.f32 %v175, %v287
    %v318 = vmul.f32 %v176, %v291
    %v319 = vmul.f32 %v177, %v283
    %v320 = vmul.f32 %v178, %v287
    %v321 = vmul.f32 %v179, %v291
    %v322 = vmul.f32 %v180, %v283
    %v323 = vmul.f32 %v181, %v287
    %v324 = vmul.f32 %v182, %v291
    %v325 = vmul.f32 %v183, %v283
    %v326 = vmul.f32 %v184, %v287
    %v327 = vmul.f32 %v185, %v291
    %v328 = vmul.f32 %v186, %v283
    %v329 = vmul.f32 %v187, %v287
    %v330 = vmul.f32 %v188, %v291
    %v331 = vmul.f32 %v189, %v283
    %v332 = vmul.f32 %v190, %v287
    %v333 = vmul.f32 %v191, %v291
    %v334 = vmul.f32 %v192, %v283
    %v335 = vmul.f32 %v193, %v287
    %v336 = vmul.f32 %v194, %v291
    %v337 = vmul.f32 %v195, %v283
    %v338 = vmul.f32 %v196, %v287
    %v339 = vmul.f32 %v197, %v291
    %v340 = vmul.f32 %v198, %v283
    %v341 = vmul.f32 %v199, %v287
    %v342 = vmul.f32 %v200, %v291
    %v343 = vmul.f32 %v201, %v283
    %v344 = vmul.f32 %v202, %v287
    %v345 = vmul.f32 %v203, %v291
    %v346 = vmul.f32 %v204, %v283
    %v347 = vmul.f32 %v205, %v287
    %v348 = vmul.f32 %v206, %v291
    %v349 = vmul.f32 %v207, %v283
    %v350 = vmul.f32 %v208, %v287
    %v351 = vmul.f32 %v209, %v291
    %v352 = vmul.f32 %v210, %v283
    %v353 = vmul.f32 %v211, %v287
    %v354 = vmul.f32 %v212, %v291
    %v355 = vmul.f32 %v213, %v283
    %v356 = vmul.f32 %v214, %v287
    %v357 = vmul.f32 %v215, %v291
    %v358 = vmul.f32 %v216, %v283
    %v359 = vmul.f32 %v217, %v287
    %v360 = vmul.f32 %v218, %v291
    %v361 = vmul.f32 %v219, %v283
    %v362 = vmul.f32 %v220, %v287
    %v363 = vmul.f32 %v221, %v291
    %v364 = vmul.f32 %v222, %v283
    %v365 = vmul.f32 %v223, %v287
    %v366 = vmul.f32 %v224, %v291
    %v367 = vmul.f32 %v225, %v283
    %v368 = vmul.f32 %v226, %v287
    %v369 = vmul.f32 %v227, %v291
    %v370 = vmul.f32 %v228, %v283
    %v371 = vmul.f32 %v229, %v287
    %v372 = vmul.f32 %v230, %v291
    %v373 = vmul.f32 %v231, %v283
    %v374 = vmul.f32 %v232, %v287
    %v375 = vmul.f32 %v233, %v291
    %v376 = vmul.f32 %v234, %v283
    %v377 = vmul.f32 %v235, %v287
    %v378 = vmul.f32 %v236, %v291
    %v379 = vmul.f32 %v237, %v283
    %v380 = vmul.f32 %v238, %v287
    %v381 = vmul.f32 %v239, %v291
    %v382 = vmul.f32 %v240, %v283
    %v383 = vmul.f32 %v241, %v287
    %v384 = vmul.f32 %v242, %v291
    %v385 = vmul.f32 %v243, %v283
    %v386 = vmul.f32 %v244, %v287
    %v387 = vmul.f32 %v245, %v291
    %v388 = vmul.f32 %v246, %v283
    %v389 = vmul.f32 %v247, %v287
    %v390 = vmul.f32 %v248, %v291
    %v391 = vmul.f32 %v249, %v283
    %v392 = vmul.f32 %v250, %v287
    %v393 = vmul.f32 %v251, %v291
    %v394 = vmul.f32 %v252, %v283
    %v395 = vmul.f32 %v253, %v287
    %v396 = vmul.f32 %v254, %v291
    %v397 = vmul.f32 %v255, %v283
    %v398 = vmul.f32 %v256, %v287
    %v399 = vmul.f32 %v257, %v291
    %v400 = vmul.f32 %v258, %v283
    %v401 = vmul.f32 %v259, %v287
    %v402 = vmul.f32 %v260, %v291
    %v403 = vmul.f32 %v261, %v283
    %v404 = vmul.f32 %v262, %v287
    %v405 = vmul.f32 %v263, %v291
    %v406 = vmul.f32 %v264, %v283
    %v407 = vmul.f32 %v265, %v287
    %v408 = vmul.f32 %v266, %v291
    %v409 = vmul.f32 %v267, %v283
    %v410 = vmul.f32 %v268, %v287
    %v411 = vmul.f32 %v269, %v291
    %v412 = vmul.f32 %v270, %v283
    %v413 = vmul.f32 %v271, %v287
    %v414 = vmul.f32 %v272, %v291
    %v415 = vmul.f32 %v273, %v283
    %v416 = vmul.f32 %v274, %v287
    %v417 = vmul.f32 %v275, %v291
    %v418 = vmul.f32 %v276, %v283
    %v419 = vmul.f32 %v277, %v287
    %v420 = vmul.f32 %v278, %v291
    %v421 = vpack.c.bf16 %v298, %v295
    %v422 = vpack.c.bf16 %v299, %v296
    %v423 = vpack.c.bf16 %v300, %v297
    %v424 = vpack.c.bf16 %v304, %v301
    %v425 = vpack.c.bf16 %v305, %v302
    %v426 = vpack.c.bf16 %v306, %v303
    %v427 = vpack.c.bf16 %v310, %v307
    %v428 = vpack.c.bf16 %v311, %v308
    %v429 = vpack.c.bf16 %v312, %v309
    %v430 = vpack.c.bf16 %v316, %v313
    %v431 = vpack.c.bf16 %v317, %v314
    %v432 = vpack.c.bf16 %v318, %v315
    %v433 = vpack.c.bf16 %v322, %v319
    %v434 = vpack.c.bf16 %v323, %v320
    %v435 = vpack.c.bf16 %v324, %v321
    %v436 = vpack.c.bf16 %v328, %v325
    %v437 = vpack.c.bf16 %v329, %v326
    %v438 = vpack.c.bf16 %v330, %v327
    %v439 = vpack.c.bf16 %v334, %v331
    %v440 = vpack.c.bf16 %v335, %v332
    %v441 = vpack.c.bf16 %v336, %v333
    %v442 = vpack.c.bf16 %v340, %v337
    %v443 = vpack.c.bf16 %v341, %v338
    %v444 = vpack.c.bf16 %v342, %v339
    %v445 = vpack.c.bf16 %v346, %v343
    %v446 = vpack.c.bf16 %v347, %v344
    %v447 = vpack.c.bf16 %v348, %v345
    %v448 = vpack.c.bf16 %v352, %v349
    %v449 = vpack.c.bf16 %v353, %v350
    %v450 = vpack.c.bf16 %v354, %v351
    %v451 = vpack.c.bf16 %v358, %v355
    %v452 = vpack.c.bf16 %v359, %v356
    %v453 = vpack.c.bf16 %v360, %v357
    %v454 = vpack.c.bf16 %v364, %v361
    %v455 = vpack.c.bf16 %v365, %v362
    %v456 = vpack.c.bf16 %v366, %v363
    %v457 = vpack.c.bf16 %v370, %v367
    %v458 = vpack.c.bf16 %v371, %v368
    %v459 = vpack.c.bf16 %v372, %v369
    %v460 = vpack.c.bf16 %v376, %v373
    %v461 = vpack.c.bf16 %v377, %v374
    %v462 = vpack.c.bf16 %v378, %v375
    %v463 = vpack.c.bf16 %v382, %v379
    %v464 = vpack.c.bf16 %v383, %v380
    %v465 = vpack.c.bf16 %v384, %v381
    %v466 = vpack.c.bf16 %v388, %v385
    %v467 = vpack.c.bf16 %v389, %v386
    %v468 = vpack.c.bf16 %v390, %v387
    %v469 = vpack.c.bf16 %v394, %v391
    %v470 = vpack.c.bf16 %v395, %v392
    %v471 = vpack.c.bf16 %v396, %v393
    %v472 = vpack.c.bf16 %v400, %v397
    %v473 = vpack.c.bf16 %v401, %v398
    %v474 = vpack.c.bf16 %v402, %v399
    %v475 = vpack.c.bf16 %v406, %v403
    %v476 = vpack.c.bf16 %v407, %v404
    %v477 = vpack.c.bf16 %v408, %v405
    %v478 = vpack.c.bf16 %v412, %v409
    %v479 = vpack.c.bf16 %v413, %v410
    %v480 = vpack.c.bf16 %v414, %v411
    %v481 = vpack.c.bf16 %v418, %v415
    %v482 = vpack.c.bf16 %v419, %v416
    %v483 = vpack.c.bf16 %v420, %v417
    %v484 = vld [vmem:[#allocation2] sm:$0xff]
    %v485 = vld [vmem:[#allocation2 + $0x8] sm:$0xff]
    %v486 = vld [vmem:[#allocation2 + $0x10] sm:$0xff]
    %v487 = vld [vmem:[#allocation2 + $0x18] sm:$0xff]
    %v488 = vld [vmem:[#allocation2 + $0x20] sm:$0xff]
    %v489 = vld [vmem:[#allocation2 + $0x28] sm:$0xff]
    %v490 = vld [vmem:[#allocation2 + $0x30] sm:$0xff]
    %v491 = vld [vmem:[#allocation2 + $0x38] sm:$0xff]
    %v492 = vld [vmem:[#allocation2 + $0x40] sm:$0xff]
    %v493 = vld [vmem:[#allocation2 + $0x48] sm:$0xff]
    %v494 = vld [vmem:[#allocation2 + $0x50] sm:$0xff]
    %v495 = vld [vmem:[#allocation2 + $0x58] sm:$0xff]
    %v496 = vld [vmem:[#allocation2 + $0x60] sm:$0xff]
    %v497 = vld [vmem:[#allocation2 + $0x68] sm:$0xff]
    %v498 = vld [vmem:[#allocation2 + $0x70] sm:$0xff]
    %v499 = vld [vmem:[#allocation2 + $0x78] sm:$0xff]
    %v500 = vld [vmem:[#allocation2 + $0x80] sm:$0xff]
    %v501 = vld [vmem:[#allocation2 + $0x88] sm:$0xff]
    %v502 = vld [vmem:[#allocation2 + $0x90] sm:$0xff]
    %v503 = vld [vmem:[#allocation2 + $0x98] sm:$0xff]
    %v504 = vld [vmem:[#allocation2 + $0xa0] sm:$0xff]
    %v505 = vld [vmem:[#allocation2 + $0xa8] sm:$0xff]
    %v506 = vld [vmem:[#allocation2 + $0xb0] sm:$0xff]
    %v507 = vld [vmem:[#allocation2 + $0xb8] sm:$0xff]
    %v508 = vld [vmem:[#allocation2 + $0xc0] sm:$0xff]
    %v509 = vld [vmem:[#allocation2 + $0xc8] sm:$0xff]
    %v510 = vld [vmem:[#allocation2 + $0xd0] sm:$0xff]
    %v511 = vld [vmem:[#allocation2 + $0xd8] sm:$0xff]
    %v512 = vld [vmem:[#allocation2 + $0xe0] sm:$0xff]
    %v513 = vld [vmem:[#allocation2 + $0xe8] sm:$0xff]
    %v514 = vld [vmem:[#allocation2 + $0xf0] sm:$0xff]
    %v515 = vld [vmem:[#allocation2 + $0xf8] sm:$0xff]
    %v516 = vld [vmem:[#allocation2 + $0x100] sm:$0xff]
    %v517 = vld [vmem:[#allocation2 + $0x108] sm:$0xff]
    %v518 = vld [vmem:[#allocation2 + $0x110] sm:$0xff]
    %v519 = vld [vmem:[#allocation2 + $0x118] sm:$0xff]
    %v520 = vld [vmem:[#allocation2 + $0x120] sm:$0xff]
    %v521 = vld [vmem:[#allocation2 + $0x128] sm:$0xff]
    %v522 = vld [vmem:[#allocation2 + $0x130] sm:$0xff]
    %v523 = vld [vmem:[#allocation2 + $0x138] sm:$0xff]
    %v524 = vld [vmem:[#allocation2 + $0x140] sm:$0xff]
    %v525 = vld [vmem:[#allocation2 + $0x148] sm:$0xff]
    %v568 = vunpack.c.l.b16 %v484
    %v569 = vunpack.c.h.b16 %v484
    %v570 = vunpack.c.l.b16 %v485
    %v571 = vunpack.c.h.b16 %v485
    %v572 = vunpack.c.l.b16 %v486
    %v573 = vunpack.c.h.b16 %v486
    %v574 = vunpack.c.l.b16 %v487
    %v575 = vunpack.c.h.b16 %v487
    %v576 = vunpack.c.l.b16 %v488
    %v577 = vunpack.c.h.b16 %v488
    %v578 = vunpack.c.l.b16 %v489
    %v579 = vunpack.c.h.b16 %v489
    %v580 = vunpack.c.l.b16 %v490
    %v581 = vunpack.c.h.b16 %v490
    %v582 = vunpack.c.l.b16 %v491
    %v583 = vunpack.c.h.b16 %v491
    %v584 = vunpack.c.l.b16 %v492
    %v585 = vunpack.c.h.b16 %v492
    %v586 = vunpack.c.l.b16 %v493
    %v587 = vunpack.c.h.b16 %v493
    %v588 = vunpack.c.l.b16 %v494
    %v589 = vunpack.c.h.b16 %v494
    %v590 = vunpack.c.l.b16 %v495
    %v591 = vunpack.c.h.b16 %v495
    %v592 = vunpack.c.l.b16 %v496
    %v593 = vunpack.c.h.b16 %v496
    %v594 = vunpack.c.l.b16 %v497
    %v595 = vunpack.c.h.b16 %v497
    %v596 = vunpack.c.l.b16 %v498
    %v597 = vunpack.c.h.b16 %v498
    %v598 = vunpack.c.l.b16 %v499
    %v599 = vunpack.c.h.b16 %v499
    %v600 = vunpack.c.l.b16 %v500
    %v601 = vunpack.c.h.b16 %v500
    %v602 = vunpack.c.l.b16 %v501
    %v603 = vunpack.c.h.b16 %v501
    %v604 = vunpack.c.l.b16 %v502
    %v605 = vunpack.c.h.b16 %v502
    %v606 = vunpack.c.l.b16 %v503
    %v607 = vunpack.c.h.b16 %v503
    %v608 = vunpack.c.l.b16 %v504
    %v609 = vunpack.c.h.b16 %v504
    %v610 = vunpack.c.l.b16 %v505
    %v611 = vunpack.c.h.b16 %v505
    %v612 = vunpack.c.l.b16 %v506
    %v613 = vunpack.c.h.b16 %v506
    %v614 = vunpack.c.l.b16 %v507
    %v615 = vunpack.c.h.b16 %v507
    %v616 = vunpack.c.l.b16 %v508
    %v617 = vunpack.c.h.b16 %v508
    %v618 = vunpack.c.l.b16 %v509
    %v619 = vunpack.c.h.b16 %v509
    %v620 = vunpack.c.l.b16 %v510
    %v621 = vunpack.c.h.b16 %v510
    %v622 = vunpack.c.l.b16 %v511
    %v623 = vunpack.c.h.b16 %v511
    %v624 = vunpack.c.l.b16 %v512
    %v625 = vunpack.c.h.b16 %v512
    %v626 = vunpack.c.l.b16 %v513
    %v627 = vunpack.c.h.b16 %v513
    %v628 = vunpack.c.l.b16 %v514
    %v629 = vunpack.c.h.b16 %v514
    %v630 = vunpack.c.l.b16 %v515
    %v631 = vunpack.c.h.b16 %v515
    %v632 = vunpack.c.l.b16 %v516
    %v633 = vunpack.c.h.b16 %v516
    %v634 = vunpack.c.l.b16 %v517
    %v635 = vunpack.c.h.b16 %v517
    %v636 = vunpack.c.l.b16 %v518
    %v637 = vunpack.c.h.b16 %v518
    %v638 = vunpack.c.l.b16 %v519
    %v639 = vunpack.c.h.b16 %v519
    %v640 = vunpack.c.l.b16 %v520
    %v641 = vunpack.c.h.b16 %v520
    %v642 = vunpack.c.l.b16 %v521
    %v643 = vunpack.c.h.b16 %v521
    %v644 = vunpack.c.l.b16 %v522
    %v645 = vunpack.c.h.b16 %v522
    %v646 = vunpack.c.l.b16 %v523
    %v647 = vunpack.c.h.b16 %v523
    %v648 = vunpack.c.l.b16 %v524
    %v649 = vunpack.c.h.b16 %v524
    %v650 = vunpack.c.l.b16 %v525
    %v651 = vunpack.c.h.b16 %v525
    %v652 = vpack.c.b16 %v570, %v568
    %v653 = vpack.c.b16 %v571, %v569
    %v654 = vpack.c.b16 %v574, %v572
    %v655 = vpack.c.b16 %v575, %v573
    %v656 = vpack.c.b16 %v578, %v576
    %v657 = vpack.c.b16 %v579, %v577
    %v658 = vpack.c.b16 %v582, %v580
    %v659 = vpack.c.b16 %v583, %v581
    %v660 = vpack.c.b16 %v586, %v584
    %v661 = vpack.c.b16 %v587, %v585
    %v662 = vpack.c.b16 %v590, %v588
    %v663 = vpack.c.b16 %v591, %v589
    %v664 = vpack.c.b16 %v594, %v592
    %v665 = vpack.c.b16 %v595, %v593
    %v666 = vpack.c.b16 %v598, %v596
    %v667 = vpack.c.b16 %v599, %v597
    %v668 = vpack.c.b16 %v602, %v600
    %v669 = vpack.c.b16 %v603, %v601
    %v670 = vpack.c.b16 %v606, %v604
    %v671 = vpack.c.b16 %v607, %v605
    %v672 = vpack.c.b16 %v610, %v608
    %v673 = vpack.c.b16 %v611, %v609
    %v674 = vpack.c.b16 %v614, %v612
    %v675 = vpack.c.b16 %v615, %v613
    %v676 = vpack.c.b16 %v618, %v616
    %v677 = vpack.c.b16 %v619, %v617
    %v678 = vpack.c.b16 %v622, %v620
    %v679 = vpack.c.b16 %v623, %v621
    %v680 = vpack.c.b16 %v626, %v624
    %v681 = vpack.c.b16 %v627, %v625
    %v682 = vpack.c.b16 %v630, %v628
    %v683 = vpack.c.b16 %v631, %v629
    %v684 = vpack.c.b16 %v634, %v632
    %v685 = vpack.c.b16 %v635, %v633
    %v686 = vpack.c.b16 %v638, %v636
    %v687 = vpack.c.b16 %v639, %v637
    %v688 = vpack.c.b16 %v642, %v640
    %v689 = vpack.c.b16 %v643, %v641
    %v690 = vpack.c.b16 %v646, %v644
    %v691 = vpack.c.b16 %v647, %v645
    %v692 = vpack.c.b16 %v650, %v648
    %v693 = vpack.c.b16 %v651, %v649
    %vm736 = vcmask 654336
    %v738 = vsel %vm736, %v423, 0
    %v741 = vsel %vm736, %v426, 0
    %v744 = vsel %vm736, %v429, 0
    %v747 = vsel %vm736, %v432, 0
    %v750 = vsel %vm736, %v435, 0
    %v753 = vsel %vm736, %v438, 0
    %v756 = vsel %vm736, %v441, 0
    %v759 = vsel %vm736, %v444, 0
    %v762 = vsel %vm736, %v447, 0
    %v765 = vsel %vm736, %v450, 0
    %v768 = vsel %vm736, %v453, 0
    %v771 = vsel %vm736, %v456, 0
    %v774 = vsel %vm736, %v459, 0
    %v777 = vsel %vm736, %v462, 0
    %v780 = vsel %vm736, %v465, 0
    %v783 = vsel %vm736, %v468, 0
    %v786 = vsel %vm736, %v471, 0
    %v789 = vsel %vm736, %v474, 0
    %v792 = vsel %vm736, %v477, 0
    %v795 = vsel %vm736, %v480, 0
    %v798 = vsel %vm736, %v483, 0
    %800 = vmatprep.subr.bf16.mxu0 %v667
    %801 = vmatpush1.bf16.msra.mxu0 %v666
    %802 = vmatprep.subr.bf16.mxu0 %v665
    %803 = vmatpush1.bf16.msra.mxu0 %v664
    %804 = vmatprep.subr.bf16.mxu0 %v663
    %805 = vmatpush1.bf16.msra.mxu0 %v662
    %806 = vmatprep.subr.bf16.mxu0 %v661
    %807 = vmatpush1.bf16.msra.mxu0 %v660
    %808 = vmatprep.subr.bf16.mxu0 %v659
    %809 = vmatpush1.bf16.msra.mxu0 %v658
    %810 = vmatprep.subr.bf16.mxu0 %v657
    %811 = vmatpush1.bf16.msra.mxu0 %v656
    %812 = vmatprep.subr.bf16.mxu0 %v655
    %813 = vmatpush1.bf16.msra.mxu0 %v654
    %814 = vmatprep.subr.bf16.mxu0 %v653
    %815 = vmatpush1.bf16.msra.mxu0 %v652
    %816 = vmatprep.subr.bf16.mxu0 %v683
    %817 = vmatpush2.bf16.msra.mxu0 %v682
    %818 = vmatprep.subr.bf16.mxu0 %v681
    %819 = vmatpush2.bf16.msra.mxu0 %v680
    %820 = vmatprep.subr.bf16.mxu0 %v679
    %821 = vmatpush2.bf16.msra.mxu0 %v678
    %822 = vmatprep.subr.bf16.mxu0 %v677
    %823 = vmatpush2.bf16.msra.mxu0 %v676
    %824 = vmatprep.subr.bf16.mxu0 %v675
    %825 = vmatpush2.bf16.msra.mxu0 %v674
    %826 = vmatprep.subr.bf16.mxu0 %v673
    %827 = vmatpush2.bf16.msra.mxu0 %v672
    %828 = vmatprep.subr.bf16.mxu0 %v671
    %829 = vmatpush2.bf16.msra.mxu0 %v670
    %830 = vmatprep.subr.bf16.mxu0 %v669
    %831 = vmatpush2.bf16.msra.mxu0 %v668
    %832 = vmatprep.mubr.bf16.mxu0 %v422
    %833 = vmatmul.mubr.bf16.gmra.mxu0 %v421
    %v834 = vpop.f32.mrf.mxu0
    %v835 = vadd.f32 0.0, %v834
    %v836 = vpop.f32.mrf.mxu0
    %v837 = vadd.f32 0.0, %v836
    %v838 = vpop.f32.mrf.mxu0
    %v839 = vadd.f32 0.0, %v838
    %v840 = vpop.f32.mrf.mxu0
    %v841 = vadd.f32 0.0, %v840
    %842 = vmatprep.mubr.bf16.mxu0 %v425
    %843 = vmatmul.mubr.bf16.gmra.mxu0 %v424
    %v844 = vpop.f32.mrf.mxu0
    %v845 = vadd.f32 0.0, %v844
    %v846 = vpop.f32.mrf.mxu0
    %v847 = vadd.f32 0.0, %v846
    %v848 = vpop.f32.mrf.mxu0
    %v849 = vadd.f32 0.0, %v848
    %v850 = vpop.f32.mrf.mxu0
    %v851 = vadd.f32 0.0, %v850
    %852 = vmatprep.mubr.bf16.mxu0 %v428
    %853 = vmatmul.mubr.bf16.gmra.mxu0 %v427
    %v854 = vpop.f32.mrf.mxu0
    %v855 = vadd.f32 0.0, %v854
    %v856 = vpop.f32.mrf.mxu0
    %v857 = vadd.f32 0.0, %v856
    %v858 = vpop.f32.mrf.mxu0
    %v859 = vadd.f32 0.0, %v858
    %v860 = vpop.f32.mrf.mxu0
    %v861 = vadd.f32 0.0, %v860
    %862 = vmatprep.mubr.bf16.mxu0 %v431
    %863 = vmatmul.mubr.bf16.gmra.mxu0 %v430
    %v864 = vpop.f32.mrf.mxu0
    %v865 = vadd.f32 0.0, %v864
    %v866 = vpop.f32.mrf.mxu0
    %v867 = vadd.f32 0.0, %v866
    %v868 = vpop.f32.mrf.mxu0
    %v869 = vadd.f32 0.0, %v868
    %v870 = vpop.f32.mrf.mxu0
    %v871 = vadd.f32 0.0, %v870
    %872 = vmatprep.mubr.bf16.mxu0 %v434
    %873 = vmatmul.mubr.bf16.gmra.mxu0 %v433
    %v874 = vpop.f32.mrf.mxu0
    %v875 = vadd.f32 0.0, %v874
    %v876 = vpop.f32.mrf.mxu0
    %v877 = vadd.f32 0.0, %v876
    %v878 = vpop.f32.mrf.mxu0
    %v879 = vadd.f32 0.0, %v878
    %v880 = vpop.f32.mrf.mxu0
    %v881 = vadd.f32 0.0, %v880
    %882 = vmatprep.mubr.bf16.mxu0 %v437
    %883 = vmatmul.mubr.bf16.gmra.mxu0 %v436
    %v884 = vpop.f32.mrf.mxu0
    %v885 = vadd.f32 0.0, %v884
    %v886 = vpop.f32.mrf.mxu0
    %v887 = vadd.f32 0.0, %v886
    %v888 = vpop.f32.mrf.mxu0
    %v889 = vadd.f32 0.0, %v888
    %v890 = vpop.f32.mrf.mxu0
    %v891 = vadd.f32 0.0, %v890
    %892 = vmatprep.mubr.bf16.mxu0 %v440
    %893 = vmatmul.mubr.bf16.gmra.mxu0 %v439
    %v894 = vpop.f32.mrf.mxu0
    %v895 = vadd.f32 0.0, %v894
    %v896 = vpop.f32.mrf.mxu0
    %v897 = vadd.f32 0.0, %v896
    %v898 = vpop.f32.mrf.mxu0
    %v899 = vadd.f32 0.0, %v898
    %v900 = vpop.f32.mrf.mxu0
    %v901 = vadd.f32 0.0, %v900
    %902 = vmatprep.mubr.bf16.mxu0 %v443
    %903 = vmatmul.mubr.bf16.gmra.mxu0 %v442
    %v904 = vpop.f32.mrf.mxu0
    %v905 = vadd.f32 0.0, %v904
    %v906 = vpop.f32.mrf.mxu0
    %v907 = vadd.f32 0.0, %v906
    %v908 = vpop.f32.mrf.mxu0
    %v909 = vadd.f32 0.0, %v908
    %v910 = vpop.f32.mrf.mxu0
    %v911 = vadd.f32 0.0, %v910
    %912 = vmatprep.mubr.bf16.mxu0 %v446
    %913 = vmatmul.mubr.bf16.gmra.mxu0 %v445
    %v914 = vpop.f32.mrf.mxu0
    %v915 = vadd.f32 0.0, %v914
    %v916 = vpop.f32.mrf.mxu0
    %v917 = vadd.f32 0.0, %v916
    %v918 = vpop.f32.mrf.mxu0
    %v919 = vadd.f32 0.0, %v918
    %v920 = vpop.f32.mrf.mxu0
    %v921 = vadd.f32 0.0, %v920
    %922 = vmatprep.mubr.bf16.mxu0 %v449
    %923 = vmatmul.mubr.bf16.gmra.mxu0 %v448
    %v924 = vpop.f32.mrf.mxu0
    %v925 = vadd.f32 0.0, %v924
    %v926 = vpop.f32.mrf.mxu0
    %v927 = vadd.f32 0.0, %v926
    %v928 = vpop.f32.mrf.mxu0
    %v929 = vadd.f32 0.0, %v928
    %v930 = vpop.f32.mrf.mxu0
    %v931 = vadd.f32 0.0, %v930
    %932 = vmatprep.mubr.bf16.mxu0 %v452
    %933 = vmatmul.mubr.bf16.gmra.mxu0 %v451
    %v934 = vpop.f32.mrf.mxu0
    %v935 = vadd.f32 0.0, %v934
    %v936 = vpop.f32.mrf.mxu0
    %v937 = vadd.f32 0.0, %v936
    %v938 = vpop.f32.mrf.mxu0
    %v939 = vadd.f32 0.0, %v938
    %v940 = vpop.f32.mrf.mxu0
    %v941 = vadd.f32 0.0, %v940
    %942 = vmatprep.mubr.bf16.mxu0 %v455
    %943 = vmatmul.mubr.bf16.gmra.mxu0 %v454
    %v944 = vpop.f32.mrf.mxu0
    %v945 = vadd.f32 0.0, %v944
    %v946 = vpop.f32.mrf.mxu0
    %v947 = vadd.f32 0.0, %v946
    %v948 = vpop.f32.mrf.mxu0
    %v949 = vadd.f32 0.0, %v948
    %v950 = vpop.f32.mrf.mxu0
    %v951 = vadd.f32 0.0, %v950
    %952 = vmatprep.mubr.bf16.mxu0 %v458
    %953 = vmatmul.mubr.bf16.gmra.mxu0 %v457
    %v954 = vpop.f32.mrf.mxu0
    %v955 = vadd.f32 0.0, %v954
    %v956 = vpop.f32.mrf.mxu0
    %v957 = vadd.f32 0.0, %v956
    %v958 = vpop.f32.mrf.mxu0
    %v959 = vadd.f32 0.0, %v958
    %v960 = vpop.f32.mrf.mxu0
    %v961 = vadd.f32 0.0, %v960
    %962 = vmatprep.mubr.bf16.mxu0 %v461
    %963 = vmatmul.mubr.bf16.gmra.mxu0 %v460
    %v964 = vpop.f32.mrf.mxu0
    %v965 = vadd.f32 0.0, %v964
    %v966 = vpop.f32.mrf.mxu0
    %v967 = vadd.f32 0.0, %v966
    %v968 = vpop.f32.mrf.mxu0
    %v969 = vadd.f32 0.0, %v968
    %v970 = vpop.f32.mrf.mxu0
    %v971 = vadd.f32 0.0, %v970
    %972 = vmatprep.mubr.bf16.mxu0 %v464
    %973 = vmatmul.mubr.bf16.gmra.mxu0 %v463
    %v974 = vpop.f32.mrf.mxu0
    %v975 = vadd.f32 0.0, %v974
    %v976 = vpop.f32.mrf.mxu0
    %v977 = vadd.f32 0.0, %v976
    %v978 = vpop.f32.mrf.mxu0
    %v979 = vadd.f32 0.0, %v978
    %v980 = vpop.f32.mrf.mxu0
    %v981 = vadd.f32 0.0, %v980
    %982 = vmatprep.mubr.bf16.mxu0 %v467
    %983 = vmatmul.mubr.bf16.gmra.mxu0 %v466
    %v984 = vpop.f32.mrf.mxu0
    %v985 = vadd.f32 0.0, %v984
    %v986 = vpop.f32.mrf.mxu0
    %v987 = vadd.f32 0.0, %v986
    %v988 = vpop.f32.mrf.mxu0
    %v989 = vadd.f32 0.0, %v988
    %v990 = vpop.f32.mrf.mxu0
    %v991 = vadd.f32 0.0, %v990
    %992 = vmatprep.mubr.bf16.mxu0 %v470
    %993 = vmatmul.mubr.bf16.gmra.mxu0 %v469
    %v994 = vpop.f32.mrf.mxu0
    %v995 = vadd.f32 0.0, %v994
    %v996 = vpop.f32.mrf.mxu0
    %v997 = vadd.f32 0.0, %v996
    %v998 = vpop.f32.mrf.mxu0
    %v999 = vadd.f32 0.0, %v998
    %v1000 = vpop.f32.mrf.mxu0
    %v1001 = vadd.f32 0.0, %v1000
    %1002 = vmatprep.mubr.bf16.mxu0 %v473
    %1003 = vmatmul.mubr.bf16.gmra.mxu0 %v472
    %v1004 = vpop.f32.mrf.mxu0
    %v1005 = vadd.f32 0.0, %v1004
    %v1006 = vpop.f32.mrf.mxu0
    %v1007 = vadd.f32 0.0, %v1006
    %v1008 = vpop.f32.mrf.mxu0
    %v1009 = vadd.f32 0.0, %v1008
    %v1010 = vpop.f32.mrf.mxu0
    %v1011 = vadd.f32 0.0, %v1010
    %1012 = vmatprep.mubr.bf16.mxu0 %v476
    %1013 = vmatmul.mubr.bf16.gmra.mxu0 %v475
    %v1014 = vpop.f32.mrf.mxu0
    %v1015 = vadd.f32 0.0, %v1014
    %v1016 = vpop.f32.mrf.mxu0
    %v1017 = vadd.f32 0.0, %v1016
    %v1018 = vpop.f32.mrf.mxu0
    %v1019 = vadd.f32 0.0, %v1018
    %v1020 = vpop.f32.mrf.mxu0
    %v1021 = vadd.f32 0.0, %v1020
    %1022 = vmatprep.mubr.bf16.mxu0 %v479
    %1023 = vmatmul.mubr.bf16.gmra.mxu0 %v478
    %v1024 = vpop.f32.mrf.mxu0
    %v1025 = vadd.f32 0.0, %v1024
    %v1026 = vpop.f32.mrf.mxu0
    %v1027 = vadd.f32 0.0, %v1026
    %v1028 = vpop.f32.mrf.mxu0
    %v1029 = vadd.f32 0.0, %v1028
    %v1030 = vpop.f32.mrf.mxu0
    %v1031 = vadd.f32 0.0, %v1030
    %1032 = vmatprep.mubr.bf16.mxu0 %v482
    %1033 = vmatmul.mubr.bf16.gmra.mxu0 %v481
    %v1034 = vpop.f32.mrf.mxu0
    %v1035 = vadd.f32 0.0, %v1034
    %v1036 = vpop.f32.mrf.mxu0
    %v1037 = vadd.f32 0.0, %v1036
    %v1038 = vpop.f32.mrf.mxu0
    %v1039 = vadd.f32 0.0, %v1038
    %v1040 = vpop.f32.mrf.mxu0
    %v1041 = vadd.f32 0.0, %v1040
    %1042 = vdwg.mxu0
    %1043 = vmatprep.subr.bf16.mxu0 0
    %1044 = vmatpush1.bf16.msra.mxu0 0
    %1045 = vmatprep.subr.bf16.mxu0 0
    %1046 = vmatpush1.bf16.msra.mxu0 0
    %1047 = vmatprep.subr.bf16.mxu0 0
    %1048 = vmatpush1.bf16.msra.mxu0 0
    %1049 = vmatprep.subr.bf16.mxu0 %v693
    %1050 = vmatpush1.bf16.msra.mxu0 %v692
    %1051 = vmatprep.subr.bf16.mxu0 %v691
    %1052 = vmatpush1.bf16.msra.mxu0 %v690
    %1053 = vmatprep.subr.bf16.mxu0 %v689
    %1054 = vmatpush1.bf16.msra.mxu0 %v688
    %1055 = vmatprep.subr.bf16.mxu0 %v687
    %1056 = vmatpush1.bf16.msra.mxu0 %v686
    %1057 = vmatprep.subr.bf16.mxu0 %v685
    %1058 = vmatpush1.bf16.msra.mxu0 %v684
    %1059 = vmatprep.subr.bf16.mxu0 0
    %1060 = vmatpush2.bf16.msra.mxu0 0
    %1061 = vmatprep.subr.bf16.mxu0 0
    %1062 = vmatpush2.bf16.msra.mxu0 0
    %1063 = vmatprep.subr.bf16.mxu0 0
    %1064 = vmatpush2.bf16.msra.mxu0 0
    %1065 = vmatprep.subr.bf16.mxu0 0
    %1066 = vmatpush2.bf16.msra.mxu0 0
    %1067 = vmatprep.subr.bf16.mxu0 0
    %1068 = vmatpush2.bf16.msra.mxu0 0
    %1069 = vmatprep.subr.bf16.mxu0 0
    %1070 = vmatpush2.bf16.msra.mxu0 0
    %1071 = vmatprep.subr.bf16.mxu0 0
    %1072 = vmatpush2.bf16.msra.mxu0 0
    %1073 = vmatprep.subr.bf16.mxu0 0
    %1074 = vmatpush2.bf16.msra.mxu0 0
    %1075 = vmatprep.mubr.bf16.mxu0 0
    %1076 = vmatmul.mubr.bf16.gmra.mxu0 %v738
    %v1077 = vpop.f32.mrf.mxu0
    %v1078 = vadd.f32 %v835, %v1077
    %v1079 = vpop.f32.mrf.mxu0
    %v1080 = vadd.f32 %v837, %v1079
    %v1081 = vpop.f32.mrf.mxu0
    %v1082 = vadd.f32 %v839, %v1081
    %v1083 = vpop.f32.mrf.mxu0
    %v1084 = vadd.f32 %v841, %v1083
    %1085 = vmatprep.mubr.bf16.mxu0 0
    %1086 = vmatmul.mubr.bf16.gmra.mxu0 %v741
    %v1087 = vpop.f32.mrf.mxu0
    %v1088 = vadd.f32 %v845, %v1087
    %v1089 = vpop.f32.mrf.mxu0
    %v1090 = vadd.f32 %v847, %v1089
    %v1091 = vpop.f32.mrf.mxu0
    %v1092 = vadd.f32 %v849, %v1091
    %v1093 = vpop.f32.mrf.mxu0
    %v1094 = vadd.f32 %v851, %v1093
    %1095 = vmatprep.mubr.bf16.mxu0 0
    %1096 = vmatmul.mubr.bf16.gmra.mxu0 %v744
    %v1097 = vpop.f32.mrf.mxu0
    %v1098 = vadd.f32 %v855, %v1097
    %v1099 = vpop.f32.mrf.mxu0
    %v1100 = vadd.f32 %v857, %v1099
    %v1101 = vpop.f32.mrf.mxu0
    %v1102 = vadd.f32 %v859, %v1101
    %v1103 = vpop.f32.mrf.mxu0
    %v1104 = vadd.f32 %v861, %v1103
    %1105 = vmatprep.mubr.bf16.mxu0 0
    %1106 = vmatmul.mubr.bf16.gmra.mxu0 %v747
    %v1107 = vpop.f32.mrf.mxu0
    %v1108 = vadd.f32 %v865, %v1107
    %v1109 = vpop.f32.mrf.mxu0
    %v1110 = vadd.f32 %v867, %v1109
    %v1111 = vpop.f32.mrf.mxu0
    %v1112 = vadd.f32 %v869, %v1111
    %v1113 = vpop.f32.mrf.mxu0
    %v1114 = vadd.f32 %v871, %v1113
    %1115 = vmatprep.mubr.bf16.mxu0 0
    %1116 = vmatmul.mubr.bf16.gmra.mxu0 %v750
    %v1117 = vpop.f32.mrf.mxu0
    %v1118 = vadd.f32 %v875, %v1117
    %v1119 = vpop.f32.mrf.mxu0
    %v1120 = vadd.f32 %v877, %v1119
    %v1121 = vpop.f32.mrf.mxu0
    %v1122 = vadd.f32 %v879, %v1121
    %v1123 = vpop.f32.mrf.mxu0
    %v1124 = vadd.f32 %v881, %v1123
    %1125 = vmatprep.mubr.bf16.mxu0 0
    %1126 = vmatmul.mubr.bf16.gmra.mxu0 %v753
    %v1127 = vpop.f32.mrf.mxu0
    %v1128 = vadd.f32 %v885, %v1127
    %v1129 = vpop.f32.mrf.mxu0
    %v1130 = vadd.f32 %v887, %v1129
    %v1131 = vpop.f32.mrf.mxu0
    %v1132 = vadd.f32 %v889, %v1131
    %v1133 = vpop.f32.mrf.mxu0
    %v1134 = vadd.f32 %v891, %v1133
    %1135 = vmatprep.mubr.bf16.mxu0 0
    %1136 = vmatmul.mubr.bf16.gmra.mxu0 %v756
    %v1137 = vpop.f32.mrf.mxu0
    %v1138 = vadd.f32 %v895, %v1137
    %v1139 = vpop.f32.mrf.mxu0
    %v1140 = vadd.f32 %v897, %v1139
    %v1141 = vpop.f32.mrf.mxu0
    %v1142 = vadd.f32 %v899, %v1141
    %v1143 = vpop.f32.mrf.mxu0
    %v1144 = vadd.f32 %v901, %v1143
    %1145 = vmatprep.mubr.bf16.mxu0 0
    %1146 = vmatmul.mubr.bf16.gmra.mxu0 %v759
    %v1147 = vpop.f32.mrf.mxu0
    %v1148 = vadd.f32 %v905, %v1147
    %v1149 = vpop.f32.mrf.mxu0
    %v1150 = vadd.f32 %v907, %v1149
    %v1151 = vpop.f32.mrf.mxu0
    %v1152 = vadd.f32 %v909, %v1151
    %v1153 = vpop.f32.mrf.mxu0
    %v1154 = vadd.f32 %v911, %v1153
    %1155 = vmatprep.mubr.bf16.mxu0 0
    %1156 = vmatmul.mubr.bf16.gmra.mxu0 %v762
    %v1157 = vpop.f32.mrf.mxu0
    %v1158 = vadd.f32 %v915, %v1157
    %v1159 = vpop.f32.mrf.mxu0
    %v1160 = vadd.f32 %v917, %v1159
    %v1161 = vpop.f32.mrf.mxu0
    %v1162 = vadd.f32 %v919, %v1161
    %v1163 = vpop.f32.mrf.mxu0
    %v1164 = vadd.f32 %v921, %v1163
    %1165 = vmatprep.mubr.bf16.mxu0 0
    %1166 = vmatmul.mubr.bf16.gmra.mxu0 %v765
    %v1167 = vpop.f32.mrf.mxu0
    %v1168 = vadd.f32 %v925, %v1167
    %v1169 = vpop.f32.mrf.mxu0
    %v1170 = vadd.f32 %v927, %v1169
    %v1171 = vpop.f32.mrf.mxu0
    %v1172 = vadd.f32 %v929, %v1171
    %v1173 = vpop.f32.mrf.mxu0
    %v1174 = vadd.f32 %v931, %v1173
    %1175 = vmatprep.mubr.bf16.mxu0 0
    %1176 = vmatmul.mubr.bf16.gmra.mxu0 %v768
    %v1177 = vpop.f32.mrf.mxu0
    %v1178 = vadd.f32 %v935, %v1177
    %v1179 = vpop.f32.mrf.mxu0
    %v1180 = vadd.f32 %v937, %v1179
    %v1181 = vpop.f32.mrf.mxu0
    %v1182 = vadd.f32 %v939, %v1181
    %v1183 = vpop.f32.mrf.mxu0
    %v1184 = vadd.f32 %v941, %v1183
    %1185 = vmatprep.mubr.bf16.mxu0 0
    %1186 = vmatmul.mubr.bf16.gmra.mxu0 %v771
    %v1187 = vpop.f32.mrf.mxu0
    %v1188 = vadd.f32 %v945, %v1187
    %v1189 = vpop.f32.mrf.mxu0
    %v1190 = vadd.f32 %v947, %v1189
    %v1191 = vpop.f32.mrf.mxu0
    %v1192 = vadd.f32 %v949, %v1191
    %v1193 = vpop.f32.mrf.mxu0
    %v1194 = vadd.f32 %v951, %v1193
    %1195 = vmatprep.mubr.bf16.mxu0 0
    %1196 = vmatmul.mubr.bf16.gmra.mxu0 %v774
    %v1197 = vpop.f32.mrf.mxu0
    %v1198 = vadd.f32 %v955, %v1197
    %v1199 = vpop.f32.mrf.mxu0
    %v1200 = vadd.f32 %v957, %v1199
    %v1201 = vpop.f32.mrf.mxu0
    %v1202 = vadd.f32 %v959, %v1201
    %v1203 = vpop.f32.mrf.mxu0
    %v1204 = vadd.f32 %v961, %v1203
    %1205 = vmatprep.mubr.bf16.mxu0 0
    %1206 = vmatmul.mubr.bf16.gmra.mxu0 %v777
    %v1207 = vpop.f32.mrf.mxu0
    %v1208 = vadd.f32 %v965, %v1207
    %v1209 = vpop.f32.mrf.mxu0
    %v1210 = vadd.f32 %v967, %v1209
    %v1211 = vpop.f32.mrf.mxu0
    %v1212 = vadd.f32 %v969, %v1211
    %v1213 = vpop.f32.mrf.mxu0
    %v1214 = vadd.f32 %v971, %v1213
    %1215 = vmatprep.mubr.bf16.mxu0 0
    %1216 = vmatmul.mubr.bf16.gmra.mxu0 %v780
    %v1217 = vpop.f32.mrf.mxu0
    %v1218 = vadd.f32 %v975, %v1217
    %v1219 = vpop.f32.mrf.mxu0
    %v1220 = vadd.f32 %v977, %v1219
    %v1221 = vpop.f32.mrf.mxu0
    %v1222 = vadd.f32 %v979, %v1221
    %v1223 = vpop.f32.mrf.mxu0
    %v1224 = vadd.f32 %v981, %v1223
    %1225 = vmatprep.mubr.bf16.mxu0 0
    %1226 = vmatmul.mubr.bf16.gmra.mxu0 %v783
    %v1227 = vpop.f32.mrf.mxu0
    %v1228 = vadd.f32 %v985, %v1227
    %v1229 = vpop.f32.mrf.mxu0
    %v1230 = vadd.f32 %v987, %v1229
    %v1231 = vpop.f32.mrf.mxu0
    %v1232 = vadd.f32 %v989, %v1231
    %v1233 = vpop.f32.mrf.mxu0
    %v1234 = vadd.f32 %v991, %v1233
    %1235 = vmatprep.mubr.bf16.mxu0 0
    %1236 = vmatmul.mubr.bf16.gmra.mxu0 %v786
    %v1237 = vpop.f32.mrf.mxu0
    %v1238 = vadd.f32 %v995, %v1237
    %v1239 = vpop.f32.mrf.mxu0
    %v1240 = vadd.f32 %v997, %v1239
    %v1241 = vpop.f32.mrf.mxu0
    %v1242 = vadd.f32 %v999, %v1241
    %v1243 = vpop.f32.mrf.mxu0
    %v1244 = vadd.f32 %v1001, %v1243
    %1245 = vmatprep.mubr.bf16.mxu0 0
    %1246 = vmatmul.mubr.bf16.gmra.mxu0 %v789
    %v1247 = vpop.f32.mrf.mxu0
    %v1248 = vadd.f32 %v1005, %v1247
    %v1249 = vpop.f32.mrf.mxu0
    %v1250 = vadd.f32 %v1007, %v1249
    %v1251 = vpop.f32.mrf.mxu0
    %v1252 = vadd.f32 %v1009, %v1251
    %v1253 = vpop.f32.mrf.mxu0
    %v1254 = vadd.f32 %v1011, %v1253
    %1255 = vmatprep.mubr.bf16.mxu0 0
    %1256 = vmatmul.mubr.bf16.gmra.mxu0 %v792
    %v1257 = vpop.f32.mrf.mxu0
    %v1258 = vadd.f32 %v1015, %v1257
    %v1259 = vpop.f32.mrf.mxu0
    %v1260 = vadd.f32 %v1017, %v1259
    %v1261 = vpop.f32.mrf.mxu0
    %v1262 = vadd.f32 %v1019, %v1261
    %v1263 = vpop.f32.mrf.mxu0
    %v1264 = vadd.f32 %v1021, %v1263
    %1265 = vmatprep.mubr.bf16.mxu0 0
    %1266 = vmatmul.mubr.bf16.gmra.mxu0 %v795
    %v1267 = vpop.f32.mrf.mxu0
    %v1268 = vadd.f32 %v1025, %v1267
    %v1269 = vpop.f32.mrf.mxu0
    %v1270 = vadd.f32 %v1027, %v1269
    %v1271 = vpop.f32.mrf.mxu0
    %v1272 = vadd.f32 %v1029, %v1271
    %v1273 = vpop.f32.mrf.mxu0
    %v1274 = vadd.f32 %v1031, %v1273
    %1275 = vmatprep.mubr.bf16.mxu0 0
    %1276 = vmatmul.mubr.bf16.gmra.mxu0 %v798
    %v1277 = vpop.f32.mrf.mxu0
    %v1278 = vadd.f32 %v1035, %v1277
    %v1279 = vpop.f32.mrf.mxu0
    %v1280 = vadd.f32 %v1037, %v1279
    %v1281 = vpop.f32.mrf.mxu0
    %v1282 = vadd.f32 %v1039, %v1281
    %v1283 = vpop.f32.mrf.mxu0
    %v1284 = vadd.f32 %v1041, %v1283
    %1285 = vdwg.mxu0
    %v1286 = vadd.f32 %v1078, %v1080
    %1287 = vadd.xlane.f32.xlu0 %v1286
    %v1288 = vpop.xlane.xlu0 %1287
    %v1289 = vadd.f32 %v1082, %v1084
    %1290 = vadd.xlane.f32.xlu0 %v1289
    %v1291 = vpop.xlane.xlu0 %1290
    %v1292 = vadd.f32 %v1088, %v1090
    %1293 = vadd.xlane.f32.xlu0 %v1292
    %v1294 = vpop.xlane.xlu0 %1293
    %v1295 = vadd.f32 %v1092, %v1094
    %1296 = vadd.xlane.f32.xlu0 %v1295
    %v1297 = vpop.xlane.xlu0 %1296
    %v1298 = vadd.f32 %v1098, %v1100
    %1299 = vadd.xlane.f32.xlu0 %v1298
    %v1300 = vpop.xlane.xlu0 %1299
    %v1301 = vadd.f32 %v1102, %v1104
    %1302 = vadd.xlane.f32.xlu0 %v1301
    %v1303 = vpop.xlane.xlu0 %1302
    %v1304 = vadd.f32 %v1108, %v1110
    %1305 = vadd.xlane.f32.xlu0 %v1304
    %v1306 = vpop.xlane.xlu0 %1305
    %v1307 = vadd.f32 %v1112, %v1114
    %1308 = vadd.xlane.f32.xlu0 %v1307
    %v1309 = vpop.xlane.xlu0 %1308
    %v1310 = vadd.f32 %v1118, %v1120
    %1311 = vadd.xlane.f32.xlu0 %v1310
    %v1312 = vpop.xlane.xlu0 %1311
    %v1313 = vadd.f32 %v1122, %v1124
    %1314 = vadd.xlane.f32.xlu0 %v1313
    %v1315 = vpop.xlane.xlu0 %1314
    %v1316 = vadd.f32 %v1128, %v1130
    %1317 = vadd.xlane.f32.xlu0 %v1316
    %v1318 = vpop.xlane.xlu0 %1317
    %v1319 = vadd.f32 %v1132, %v1134
    %1320 = vadd.xlane.f32.xlu0 %v1319
    %v1321 = vpop.xlane.xlu0 %1320
    %v1322 = vadd.f32 %v1138, %v1140
    %1323 = vadd.xlane.f32.xlu0 %v1322
    %v1324 = vpop.xlane.xlu0 %1323
    %v1325 = vadd.f32 %v1142, %v1144
    %1326 = vadd.xlane.f32.xlu0 %v1325
    %v1327 = vpop.xlane.xlu0 %1326
    %v1328 = vadd.f32 %v1148, %v1150
    %1329 = vadd.xlane.f32.xlu0 %v1328
    %v1330 = vpop.xlane.xlu0 %1329
    %v1331 = vadd.f32 %v1152, %v1154
    %1332 = vadd.xlane.f32.xlu0 %v1331
    %v1333 = vpop.xlane.xlu0 %1332
    %v1334 = vadd.f32 %v1158, %v1160
    %1335 = vadd.xlane.f32.xlu0 %v1334
    %v1336 = vpop.xlane.xlu0 %1335
    %v1337 = vadd.f32 %v1162, %v1164
    %1338 = vadd.xlane.f32.xlu0 %v1337
    %v1339 = vpop.xlane.xlu0 %1338
    %v1340 = vadd.f32 %v1168, %v1170
    %1341 = vadd.xlane.f32.xlu0 %v1340
    %v1342 = vpop.xlane.xlu0 %1341
    %v1343 = vadd.f32 %v1172, %v1174
    %1344 = vadd.xlane.f32.xlu0 %v1343
    %v1345 = vpop.xlane.xlu0 %1344
    %v1346 = vadd.f32 %v1178, %v1180
    %1347 = vadd.xlane.f32.xlu0 %v1346
    %v1348 = vpop.xlane.xlu0 %1347
    %v1349 = vadd.f32 %v1182, %v1184
    %1350 = vadd.xlane.f32.xlu0 %v1349
    %v1351 = vpop.xlane.xlu0 %1350
    %v1352 = vadd.f32 %v1188, %v1190
    %1353 = vadd.xlane.f32.xlu0 %v1352
    %v1354 = vpop.xlane.xlu0 %1353
    %v1355 = vadd.f32 %v1192, %v1194
    %1356 = vadd.xlane.f32.xlu0 %v1355
    %v1357 = vpop.xlane.xlu0 %1356
    %v1358 = vadd.f32 %v1198, %v1200
    %1359 = vadd.xlane.f32.xlu0 %v1358
    %v1360 = vpop.xlane.xlu0 %1359
    %v1361 = vadd.f32 %v1202, %v1204
    %1362 = vadd.xlane.f32.xlu0 %v1361
    %v1363 = vpop.xlane.xlu0 %1362
    %v1364 = vadd.f32 %v1208, %v1210
    %1365 = vadd.xlane.f32.xlu0 %v1364
    %v1366 = vpop.xlane.xlu0 %1365
    %v1367 = vadd.f32 %v1212, %v1214
    %1368 = vadd.xlane.f32.xlu0 %v1367
    %v1369 = vpop.xlane.xlu0 %1368
    %v1370 = vadd.f32 %v1218, %v1220
    %1371 = vadd.xlane.f32.xlu0 %v1370
    %v1372 = vpop.xlane.xlu0 %1371
    %v1373 = vadd.f32 %v1222, %v1224
    %1374 = vadd.xlane.f32.xlu0 %v1373
    %v1375 = vpop.xlane.xlu0 %1374
    %v1376 = vadd.f32 %v1228, %v1230
    %1377 = vadd.xlane.f32.xlu0 %v1376
    %v1378 = vpop.xlane.xlu0 %1377
    %v1379 = vadd.f32 %v1232, %v1234
    %1380 = vadd.xlane.f32.xlu0 %v1379
    %v1381 = vpop.xlane.xlu0 %1380
    %v1382 = vadd.f32 %v1238, %v1240
    %1383 = vadd.xlane.f32.xlu0 %v1382
    %v1384 = vpop.xlane.xlu0 %1383
    %v1385 = vadd.f32 %v1242, %v1244
    %1386 = vadd.xlane.f32.xlu0 %v1385
    %v1387 = vpop.xlane.xlu0 %1386
    %v1388 = vadd.f32 %v1248, %v1250
    %1389 = vadd.xlane.f32.xlu0 %v1388
    %v1390 = vpop.xlane.xlu0 %1389
    %v1391 = vadd.f32 %v1252, %v1254
    %1392 = vadd.xlane.f32.xlu0 %v1391
    %v1393 = vpop.xlane.xlu0 %1392
    %v1394 = vadd.f32 %v1258, %v1260
    %1395 = vadd.xlane.f32.xlu0 %v1394
    %v1396 = vpop.xlane.xlu0 %1395
    %v1397 = vadd.f32 %v1262, %v1264
    %1398 = vadd.xlane.f32.xlu0 %v1397
    %v1399 = vpop.xlane.xlu0 %1398
    %v1400 = vadd.f32 %v1268, %v1270
    %1401 = vadd.xlane.f32.xlu0 %v1400
    %v1402 = vpop.xlane.xlu0 %1401
    %v1403 = vadd.f32 %v1272, %v1274
    %1404 = vadd.xlane.f32.xlu0 %v1403
    %v1405 = vpop.xlane.xlu0 %1404
    %v1406 = vadd.f32 %v1278, %v1280
    %1407 = vadd.xlane.f32.xlu0 %v1406
    %v1408 = vpop.xlane.xlu0 %1407
    %v1409 = vadd.f32 %v1282, %v1284
    %1410 = vadd.xlane.f32.xlu0 %v1409
    %v1411 = vpop.xlane.xlu0 %1410
    %v1412 = vmul.f32 %v1288, 0.0051020407
    %v1413 = vmul.f32 %v1291, 0.0051020407
    %v1414 = vmul.f32 %v1294, 0.0051020407
    %v1415 = vmul.f32 %v1297, 0.0051020407
    %v1416 = vmul.f32 %v1300, 0.0051020407
    %v1417 = vmul.f32 %v1303, 0.0051020407
    %v1418 = vmul.f32 %v1306, 0.0051020407
    %v1419 = vmul.f32 %v1309, 0.0051020407
    %v1420 = vmul.f32 %v1312, 0.0051020407
    %v1421 = vmul.f32 %v1315, 0.0051020407
    %v1422 = vmul.f32 %v1318, 0.0051020407
    %v1423 = vmul.f32 %v1321, 0.0051020407
    %v1424 = vmul.f32 %v1324, 0.0051020407
    %v1425 = vmul.f32 %v1327, 0.0051020407
    %v1426 = vmul.f32 %v1330, 0.0051020407
    %v1427 = vmul.f32 %v1333, 0.0051020407
    %v1428 = vmul.f32 %v1336, 0.0051020407
    %v1429 = vmul.f32 %v1339, 0.0051020407
    %v1430 = vmul.f32 %v1342, 0.0051020407
    %v1431 = vmul.f32 %v1345, 0.0051020407
    %v1432 = vmul.f32 %v1348, 0.0051020407
    %v1433 = vmul.f32 %v1351, 0.0051020407
    %v1434 = vmul.f32 %v1354, 0.0051020407
    %v1435 = vmul.f32 %v1357, 0.0051020407
    %v1436 = vmul.f32 %v1360, 0.0051020407
    %v1437 = vmul.f32 %v1363, 0.0051020407
    %v1438 = vmul.f32 %v1366, 0.0051020407
    %v1439 = vmul.f32 %v1369, 0.0051020407
    %v1440 = vmul.f32 %v1372, 0.0051020407
    %v1441 = vmul.f32 %v1375, 0.0051020407
    %v1442 = vmul.f32 %v1378, 0.0051020407
    %v1443 = vmul.f32 %v1381, 0.0051020407
    %v1444 = vmul.f32 %v1384, 0.0051020407
    %v1445 = vmul.f32 %v1387, 0.0051020407
    %v1446 = vmul.f32 %v1390, 0.0051020407
    %v1447 = vmul.f32 %v1393, 0.0051020407
    %v1448 = vmul.f32 %v1396, 0.0051020407
    %v1449 = vmul.f32 %v1399, 0.0051020407
    %v1450 = vmul.f32 %v1402, 0.0051020407
    %v1451 = vmul.f32 %v1405, 0.0051020407
    %v1452 = vmul.f32 %v1408, 0.0051020407
    %v1453 = vmul.f32 %v1411, 0.0051020407
    %v1454 = vmul.f32 %v1078, %v1078
    %v1455 = vmul.f32 %v1080, %v1080
    %v1456 = vmul.f32 %v1082, %v1082
    %v1457 = vmul.f32 %v1084, %v1084
    %v1458 = vmul.f32 %v1088, %v1088
    %v1459 = vmul.f32 %v1090, %v1090
    %v1460 = vmul.f32 %v1092, %v1092
    %v1461 = vmul.f32 %v1094, %v1094
    %v1462 = vmul.f32 %v1098, %v1098
    %v1463 = vmul.f32 %v1100, %v1100
    %v1464 = vmul.f32 %v1102, %v1102
    %v1465 = vmul.f32 %v1104, %v1104
    %v1466 = vmul.f32 %v1108, %v1108
    %v1467 = vmul.f32 %v1110, %v1110
    %v1468 = vmul.f32 %v1112, %v1112
    %v1469 = vmul.f32 %v1114, %v1114
    %v1470 = vmul.f32 %v1118, %v1118
    %v1471 = vmul.f32 %v1120, %v1120
    %v1472 = vmul.f32 %v1122, %v1122
    %v1473 = vmul.f32 %v1124, %v1124
    %v1474 = vmul.f32 %v1128, %v1128
    %v1475 = vmul.f32 %v1130, %v1130
    %v1476 = vmul.f32 %v1132, %v1132
    %v1477 = vmul.f32 %v1134, %v1134
    %v1478 = vmul.f32 %v1138, %v1138
    %v1479 = vmul.f32 %v1140, %v1140
    %v1480 = vmul.f32 %v1142, %v1142
    %v1481 = vmul.f32 %v1144, %v1144
    %v1482 = vmul.f32 %v1148, %v1148
    %v1483 = vmul.f32 %v1150, %v1150
    %v1484 = vmul.f32 %v1152, %v1152
    %v1485 = vmul.f32 %v1154, %v1154
    %v1486 = vmul.f32 %v1158, %v1158
    %v1487 = vmul.f32 %v1160, %v1160
    %v1488 = vmul.f32 %v1162, %v1162
    %v1489 = vmul.f32 %v1164, %v1164
    %v1490 = vmul.f32 %v1168, %v1168
    %v1491 = vmul.f32 %v1170, %v1170
    %v1492 = vmul.f32 %v1172, %v1172
    %v1493 = vmul.f32 %v1174, %v1174
    %v1494 = vmul.f32 %v1178, %v1178
    %v1495 = vmul.f32 %v1180, %v1180
    %v1496 = vmul.f32 %v1182, %v1182
    %v1497 = vmul.f32 %v1184, %v1184
    %v1498 = vmul.f32 %v1188, %v1188
    %v1499 = vmul.f32 %v1190, %v1190
    %v1500 = vmul.f32 %v1192, %v1192
    %v1501 = vmul.f32 %v1194, %v1194
    %v1502 = vmul.f32 %v1198, %v1198
    %v1503 = vmul.f32 %v1200, %v1200
    %v1504 = vmul.f32 %v1202, %v1202
    %v1505 = vmul.f32 %v1204, %v1204
    %v1506 = vmul.f32 %v1208, %v1208
    %v1507 = vmul.f32 %v1210, %v1210
    %v1508 = vmul.f32 %v1212, %v1212
    %v1509 = vmul.f32 %v1214, %v1214
    %v1510 = vmul.f32 %v1218, %v1218
    %v1511 = vmul.f32 %v1220, %v1220
    %v1512 = vmul.f32 %v1222, %v1222
    %v1513 = vmul.f32 %v1224, %v1224
    %v1514 = vmul.f32 %v1228, %v1228
    %v1515 = vmul.f32 %v1230, %v1230
    %v1516 = vmul.f32 %v1232, %v1232
    %v1517 = vmul.f32 %v1234, %v1234
    %v1518 = vmul.f32 %v1238, %v1238
    %v1519 = vmul.f32 %v1240, %v1240
    %v1520 = vmul.f32 %v1242, %v1242
    %v1521 = vmul.f32 %v1244, %v1244
    %v1522 = vmul.f32 %v1248, %v1248
    %v1523 = vmul.f32 %v1250, %v1250
    %v1524 = vmul.f32 %v1252, %v1252
    %v1525 = vmul.f32 %v1254, %v1254
    %v1526 = vmul.f32 %v1258, %v1258
    %v1527 = vmul.f32 %v1260, %v1260
    %v1528 = vmul.f32 %v1262, %v1262
    %v1529 = vmul.f32 %v1264, %v1264
    %v1530 = vmul.f32 %v1268, %v1268
    %v1531 = vmul.f32 %v1270, %v1270
    %v1532 = vmul.f32 %v1272, %v1272
    %v1533 = vmul.f32 %v1274, %v1274
    %v1534 = vmul.f32 %v1278, %v1278
    %v1535 = vmul.f32 %v1280, %v1280
    %v1536 = vmul.f32 %v1282, %v1282
    %v1537 = vmul.f32 %v1284, %v1284
    %v1538 = vadd.f32 %v1454, %v1455
    %1539 = vadd.xlane.f32.xlu0 %v1538
    %v1540 = vpop.xlane.xlu0 %1539
    %v1541 = vadd.f32 %v1456, %v1457
    %1542 = vadd.xlane.f32.xlu0 %v1541
    %v1543 = vpop.xlane.xlu0 %1542
    %v1544 = vadd.f32 %v1458, %v1459
    %1545 = vadd.xlane.f32.xlu0 %v1544
    %v1546 = vpop.xlane.xlu0 %1545
    %v1547 = vadd.f32 %v1460, %v1461
    %1548 = vadd.xlane.f32.xlu0 %v1547
    %v1549 = vpop.xlane.xlu0 %1548
    %v1550 = vadd.f32 %v1462, %v1463
    %1551 = vadd.xlane.f32.xlu0 %v1550
    %v1552 = vpop.xlane.xlu0 %1551
    %v1553 = vadd.f32 %v1464, %v1465
    %1554 = vadd.xlane.f32.xlu0 %v1553
    %v1555 = vpop.xlane.xlu0 %1554
    %v1556 = vadd.f32 %v1466, %v1467
    %1557 = vadd.xlane.f32.xlu0 %v1556
    %v1558 = vpop.xlane.xlu0 %1557
    %v1559 = vadd.f32 %v1468, %v1469
    %1560 = vadd.xlane.f32.xlu0 %v1559
    %v1561 = vpop.xlane.xlu0 %1560
    %v1562 = vadd.f32 %v1470, %v1471
    %1563 = vadd.xlane.f32.xlu0 %v1562
    %v1564 = vpop.xlane.xlu0 %1563
    %v1565 = vadd.f32 %v1472, %v1473
    %1566 = vadd.xlane.f32.xlu0 %v1565
    %v1567 = vpop.xlane.xlu0 %1566
    %v1568 = vadd.f32 %v1474, %v1475
    %1569 = vadd.xlane.f32.xlu0 %v1568
    %v1570 = vpop.xlane.xlu0 %1569
    %v1571 = vadd.f32 %v1476, %v1477
    %1572 = vadd.xlane.f32.xlu0 %v1571
    %v1573 = vpop.xlane.xlu0 %1572
    %v1574 = vadd.f32 %v1478, %v1479
    %1575 = vadd.xlane.f32.xlu0 %v1574
    %v1576 = vpop.xlane.xlu0 %1575
    %v1577 = vadd.f32 %v1480, %v1481
    %1578 = vadd.xlane.f32.xlu0 %v1577
    %v1579 = vpop.xlane.xlu0 %1578
    %v1580 = vadd.f32 %v1482, %v1483
    %1581 = vadd.xlane.f32.xlu0 %v1580
    %v1582 = vpop.xlane.xlu0 %1581
    %v1583 = vadd.f32 %v1484, %v1485
    %1584 = vadd.xlane.f32.xlu0 %v1583
    %v1585 = vpop.xlane.xlu0 %1584
    %v1586 = vadd.f32 %v1486, %v1487
    %1587 = vadd.xlane.f32.xlu0 %v1586
    %v1588 = vpop.xlane.xlu0 %1587
    %v1589 = vadd.f32 %v1488, %v1489
    %1590 = vadd.xlane.f32.xlu0 %v1589
    %v1591 = vpop.xlane.xlu0 %1590
    %v1592 = vadd.f32 %v1490, %v1491
    %1593 = vadd.xlane.f32.xlu0 %v1592
    %v1594 = vpop.xlane.xlu0 %1593
    %v1595 = vadd.f32 %v1492, %v1493
    %1596 = vadd.xlane.f32.xlu0 %v1595
    %v1597 = vpop.xlane.xlu0 %1596
    %v1598 = vadd.f32 %v1494, %v1495
    %1599 = vadd.xlane.f32.xlu0 %v1598
    %v1600 = vpop.xlane.xlu0 %1599
    %v1601 = vadd.f32 %v1496, %v1497
    %1602 = vadd.xlane.f32.xlu0 %v1601
    %v1603 = vpop.xlane.xlu0 %1602
    %v1604 = vadd.f32 %v1498, %v1499
    %1605 = vadd.xlane.f32.xlu0 %v1604
    %v1606 = vpop.xlane.xlu0 %1605
    %v1607 = vadd.f32 %v1500, %v1501
    %1608 = vadd.xlane.f32.xlu0 %v1607
    %v1609 = vpop.xlane.xlu0 %1608
    %v1610 = vadd.f32 %v1502, %v1503
    %1611 = vadd.xlane.f32.xlu0 %v1610
    %v1612 = vpop.xlane.xlu0 %1611
    %v1613 = vadd.f32 %v1504, %v1505
    %1614 = vadd.xlane.f32.xlu0 %v1613
    %v1615 = vpop.xlane.xlu0 %1614
    %v1616 = vadd.f32 %v1506, %v1507
    %1617 = vadd.xlane.f32.xlu0 %v1616
    %v1618 = vpop.xlane.xlu0 %1617
    %v1619 = vadd.f32 %v1508, %v1509
    %1620 = vadd.xlane.f32.xlu0 %v1619
    %v1621 = vpop.xlane.xlu0 %1620
    %v1622 = vadd.f32 %v1510, %v1511
    %1623 = vadd.xlane.f32.xlu0 %v1622
    %v1624 = vpop.xlane.xlu0 %1623
    %v1625 = vadd.f32 %v1512, %v1513
    %1626 = vadd.xlane.f32.xlu0 %v1625
    %v1627 = vpop.xlane.xlu0 %1626
    %v1628 = vadd.f32 %v1514, %v1515
    %1629 = vadd.xlane.f32.xlu0 %v1628
    %v1630 = vpop.xlane.xlu0 %1629
    %v1631 = vadd.f32 %v1516, %v1517
    %1632 = vadd.xlane.f32.xlu0 %v1631
    %v1633 = vpop.xlane.xlu0 %1632
    %v1634 = vadd.f32 %v1518, %v1519
    %1635 = vadd.xlane.f32.xlu0 %v1634
    %v1636 = vpop.xlane.xlu0 %1635
    %v1637 = vadd.f32 %v1520, %v1521
    %1638 = vadd.xlane.f32.xlu0 %v1637
    %v1639 = vpop.xlane.xlu0 %1638
    %v1640 = vadd.f32 %v1522, %v1523
    %1641 = vadd.xlane.f32.xlu0 %v1640
    %v1642 = vpop.xlane.xlu0 %1641
    %v1643 = vadd.f32 %v1524, %v1525
    %1644 = vadd.xlane.f32.xlu0 %v1643
    %v1645 = vpop.xlane.xlu0 %1644
    %v1646 = vadd.f32 %v1526, %v1527
    %1647 = vadd.xlane.f32.xlu0 %v1646
    %v1648 = vpop.xlane.xlu0 %1647
    %v1649 = vadd.f32 %v1528, %v1529
    %1650 = vadd.xlane.f32.xlu0 %v1649
    %v1651 = vpop.xlane.xlu0 %1650
    %v1652 = vadd.f32 %v1530, %v1531
    %1653 = vadd.xlane.f32.xlu0 %v1652
    %v1654 = vpop.xlane.xlu0 %1653
    %v1655 = vadd.f32 %v1532, %v1533
    %1656 = vadd.xlane.f32.xlu0 %v1655
    %v1657 = vpop.xlane.xlu0 %1656
    %v1658 = vadd.f32 %v1534, %v1535
    %1659 = vadd.xlane.f32.xlu0 %v1658
    %v1660 = vpop.xlane.xlu0 %1659
    %v1661 = vadd.f32 %v1536, %v1537
    %1662 = vadd.xlane.f32.xlu0 %v1661
    %v1663 = vpop.xlane.xlu0 %1662
    %v1664 = vmul.f32 %v1540, 0.0051020407
    %v1665 = vmul.f32 %v1543, 0.0051020407
    %v1666 = vmul.f32 %v1546, 0.0051020407
    %v1667 = vmul.f32 %v1549, 0.0051020407
    %v1668 = vmul.f32 %v1552, 0.0051020407
    %v1669 = vmul.f32 %v1555, 0.0051020407
    %v1670 = vmul.f32 %v1558, 0.0051020407
    %v1671 = vmul.f32 %v1561, 0.0051020407
    %v1672 = vmul.f32 %v1564, 0.0051020407
    %v1673 = vmul.f32 %v1567, 0.0051020407
    %v1674 = vmul.f32 %v1570, 0.0051020407
    %v1675 = vmul.f32 %v1573, 0.0051020407
    %v1676 = vmul.f32 %v1576, 0.0051020407
    %v1677 = vmul.f32 %v1579, 0.0051020407
    %v1678 = vmul.f32 %v1582, 0.0051020407
    %v1679 = vmul.f32 %v1585, 0.0051020407
    %v1680 = vmul.f32 %v1588, 0.0051020407
    %v1681 = vmul.f32 %v1591, 0.0051020407
    %v1682 = vmul.f32 %v1594, 0.0051020407
    %v1683 = vmul.f32 %v1597, 0.0051020407
    %v1684 = vmul.f32 %v1600, 0.0051020407
    %v1685 = vmul.f32 %v1603, 0.0051020407
    %v1686 = vmul.f32 %v1606, 0.0051020407
    %v1687 = vmul.f32 %v1609, 0.0051020407
    %v1688 = vmul.f32 %v1612, 0.0051020407
    %v1689 = vmul.f32 %v1615, 0.0051020407
    %v1690 = vmul.f32 %v1618, 0.0051020407
    %v1691 = vmul.f32 %v1621, 0.0051020407
    %v1692 = vmul.f32 %v1624, 0.0051020407
    %v1693 = vmul.f32 %v1627, 0.0051020407
    %v1694 = vmul.f32 %v1630, 0.0051020407
    %v1695 = vmul.f32 %v1633, 0.0051020407
    %v1696 = vmul.f32 %v1636, 0.0051020407
    %v1697 = vmul.f32 %v1639, 0.0051020407
    %v1698 = vmul.f32 %v1642, 0.0051020407
    %v1699 = vmul.f32 %v1645, 0.0051020407
    %v1700 = vmul.f32 %v1648, 0.0051020407
    %v1701 = vmul.f32 %v1651, 0.0051020407
    %v1702 = vmul.f32 %v1654, 0.0051020407
    %v1703 = vmul.f32 %v1657, 0.0051020407
    %v1704 = vmul.f32 %v1660, 0.0051020407
    %v1705 = vmul.f32 %v1663, 0.0051020407
    %v1706 = vmul.f32 %v1412, %v1412
    %v1707 = vmul.f32 %v1413, %v1413
    %v1708 = vmul.f32 %v1414, %v1414
    %v1709 = vmul.f32 %v1415, %v1415
    %v1710 = vmul.f32 %v1416, %v1416
    %v1711 = vmul.f32 %v1417, %v1417
    %v1712 = vmul.f32 %v1418, %v1418
    %v1713 = vmul.f32 %v1419, %v1419
    %v1714 = vmul.f32 %v1420, %v1420
    %v1715 = vmul.f32 %v1421, %v1421
    %v1716 = vmul.f32 %v1422, %v1422
    %v1717 = vmul.f32 %v1423, %v1423
    %v1718 = vmul.f32 %v1424, %v1424
    %v1719 = vmul.f32 %v1425, %v1425
    %v1720 = vmul.f32 %v1426, %v1426
    %v1721 = vmul.f32 %v1427, %v1427
    %v1722 = vmul.f32 %v1428, %v1428
    %v1723 = vmul.f32 %v1429, %v1429
    %v1724 = vmul.f32 %v1430, %v1430
    %v1725 = vmul.f32 %v1431, %v1431
    %v1726 = vmul.f32 %v1432, %v1432
    %v1727 = vmul.f32 %v1433, %v1433
    %v1728 = vmul.f32 %v1434, %v1434
    %v1729 = vmul.f32 %v1435, %v1435
    %v1730 = vmul.f32 %v1436, %v1436
    %v1731 = vmul.f32 %v1437, %v1437
    %v1732 = vmul.f32 %v1438, %v1438
    %v1733 = vmul.f32 %v1439, %v1439
    %v1734 = vmul.f32 %v1440, %v1440
    %v1735 = vmul.f32 %v1441, %v1441
    %v1736 = vmul.f32 %v1442, %v1442
    %v1737 = vmul.f32 %v1443, %v1443
    %v1738 = vmul.f32 %v1444, %v1444
    %v1739 = vmul.f32 %v1445, %v1445
    %v1740 = vmul.f32 %v1446, %v1446
    %v1741 = vmul.f32 %v1447, %v1447
    %v1742 = vmul.f32 %v1448, %v1448
    %v1743 = vmul.f32 %v1449, %v1449
    %v1744 = vmul.f32 %v1450, %v1450
    %v1745 = vmul.f32 %v1451, %v1451
    %v1746 = vmul.f32 %v1452, %v1452
    %v1747 = vmul.f32 %v1453, %v1453
    %v1748 = vsub.f32 %v1664, %v1706
    %v1749 = vsub.f32 %v1665, %v1707
    %v1750 = vsub.f32 %v1666, %v1708
    %v1751 = vsub.f32 %v1667, %v1709
    %v1752 = vsub.f32 %v1668, %v1710
    %v1753 = vsub.f32 %v1669, %v1711
    %v1754 = vsub.f32 %v1670, %v1712
    %v1755 = vsub.f32 %v1671, %v1713
    %v1756 = vsub.f32 %v1672, %v1714
    %v1757 = vsub.f32 %v1673, %v1715
    %v1758 = vsub.f32 %v1674, %v1716
    %v1759 = vsub.f32 %v1675, %v1717
    %v1760 = vsub.f32 %v1676, %v1718
    %v1761 = vsub.f32 %v1677, %v1719
    %v1762 = vsub.f32 %v1678, %v1720
    %v1763 = vsub.f32 %v1679, %v1721
    %v1764 = vsub.f32 %v1680, %v1722
    %v1765 = vsub.f32 %v1681, %v1723
    %v1766 = vsub.f32 %v1682, %v1724
    %v1767 = vsub.f32 %v1683, %v1725
    %v1768 = vsub.f32 %v1684, %v1726
    %v1769 = vsub.f32 %v1685, %v1727
    %v1770 = vsub.f32 %v1686, %v1728
    %v1771 = vsub.f32 %v1687, %v1729
    %v1772 = vsub.f32 %v1688, %v1730
    %v1773 = vsub.f32 %v1689, %v1731
    %v1774 = vsub.f32 %v1690, %v1732
    %v1775 = vsub.f32 %v1691, %v1733
    %v1776 = vsub.f32 %v1692, %v1734
    %v1777 = vsub.f32 %v1693, %v1735
    %v1778 = vsub.f32 %v1694, %v1736
    %v1779 = vsub.f32 %v1695, %v1737
    %v1780 = vsub.f32 %v1696, %v1738
    %v1781 = vsub.f32 %v1697, %v1739
    %v1782 = vsub.f32 %v1698, %v1740
    %v1783 = vsub.f32 %v1699, %v1741
    %v1784 = vsub.f32 %v1700, %v1742
    %v1785 = vsub.f32 %v1701, %v1743
    %v1786 = vsub.f32 %v1702, %v1744
    %v1787 = vsub.f32 %v1703, %v1745
    %v1788 = vsub.f32 %v1704, %v1746
    %v1789 = vsub.f32 %v1705, %v1747
    %v1790 = vsub.f32 %v1078, %v1412
    %v1791 = vsub.f32 %v1080, %v1412
    %v1792 = vsub.f32 %v1082, %v1413
    %v1793 = vsub.f32 %v1084, %v1413
    %v1794 = vsub.f32 %v1088, %v1414
    %v1795 = vsub.f32 %v1090, %v1414
    %v1796 = vsub.f32 %v1092, %v1415
    %v1797 = vsub.f32 %v1094, %v1415
    %v1798 = vsub.f32 %v1098, %v1416
    %v1799 = vsub.f32 %v1100, %v1416
    %v1800 = vsub.f32 %v1102, %v1417
    %v1801 = vsub.f32 %v1104, %v1417
    %v1802 = vsub.f32 %v1108, %v1418
    %v1803 = vsub.f32 %v1110, %v1418
    %v1804 = vsub.f32 %v1112, %v1419
    %v1805 = vsub.f32 %v1114, %v1419
    %v1806 = vsub.f32 %v1118, %v1420
    %v1807 = vsub.f32 %v1120, %v1420
    %v1808 = vsub.f32 %v1122, %v1421
    %v1809 = vsub.f32 %v1124, %v1421
    %v1810 = vsub.f32 %v1128, %v1422
    %v1811 = vsub.f32 %v1130, %v1422
    %v1812 = vsub.f32 %v1132, %v1423
    %v1813 = vsub.f32 %v1134, %v1423
    %v1814 = vsub.f32 %v1138, %v1424
    %v1815 = vsub.f32 %v1140, %v1424
    %v1816 = vsub.f32 %v1142, %v1425
    %v1817 = vsub.f32 %v1144, %v1425
    %v1818 = vsub.f32 %v1148, %v1426
    %v1819 = vsub.f32 %v1150, %v1426
    %v1820 = vsub.f32 %v1152, %v1427
    %v1821 = vsub.f32 %v1154, %v1427
    %v1822 = vsub.f32 %v1158, %v1428
    %v1823 = vsub.f32 %v1160, %v1428
    %v1824 = vsub.f32 %v1162, %v1429
    %v1825 = vsub.f32 %v1164, %v1429
    %v1826 = vsub.f32 %v1168, %v1430
    %v1827 = vsub.f32 %v1170, %v1430
    %v1828 = vsub.f32 %v1172, %v1431
    %v1829 = vsub.f32 %v1174, %v1431
    %v1830 = vsub.f32 %v1178, %v1432
    %v1831 = vsub.f32 %v1180, %v1432
    %v1832 = vsub.f32 %v1182, %v1433
    %v1833 = vsub.f32 %v1184, %v1433
    %v1834 = vsub.f32 %v1188, %v1434
    %v1835 = vsub.f32 %v1190, %v1434
    %v1836 = vsub.f32 %v1192, %v1435
    %v1837 = vsub.f32 %v1194, %v1435
    %v1838 = vsub.f32 %v1198, %v1436
    %v1839 = vsub.f32 %v1200, %v1436
    %v1840 = vsub.f32 %v1202, %v1437
    %v1841 = vsub.f32 %v1204, %v1437
    %v1842 = vsub.f32 %v1208, %v1438
    %v1843 = vsub.f32 %v1210, %v1438
    %v1844 = vsub.f32 %v1212, %v1439
    %v1845 = vsub.f32 %v1214, %v1439
    %v1846 = vsub.f32 %v1218, %v1440
    %v1847 = vsub.f32 %v1220, %v1440
    %v1848 = vsub.f32 %v1222, %v1441
    %v1849 = vsub.f32 %v1224, %v1441
    %v1850 = vsub.f32 %v1228, %v1442
    %v1851 = vsub.f32 %v1230, %v1442
    %v1852 = vsub.f32 %v1232, %v1443
    %v1853 = vsub.f32 %v1234, %v1443
    %v1854 = vsub.f32 %v1238, %v1444
    %v1855 = vsub.f32 %v1240, %v1444
    %v1856 = vsub.f32 %v1242, %v1445
    %v1857 = vsub.f32 %v1244, %v1445
    %v1858 = vsub.f32 %v1248, %v1446
    %v1859 = vsub.f32 %v1250, %v1446
    %v1860 = vsub.f32 %v1252, %v1447
    %v1861 = vsub.f32 %v1254, %v1447
    %v1862 = vsub.f32 %v1258, %v1448
    %v1863 = vsub.f32 %v1260, %v1448
    %v1864 = vsub.f32 %v1262, %v1449
    %v1865 = vsub.f32 %v1264, %v1449
    %v1866 = vsub.f32 %v1268, %v1450
    %v1867 = vsub.f32 %v1270, %v1450
    %v1868 = vsub.f32 %v1272, %v1451
    %v1869 = vsub.f32 %v1274, %v1451
    %v1870 = vsub.f32 %v1278, %v1452
    %v1871 = vsub.f32 %v1280, %v1452
    %v1872 = vsub.f32 %v1282, %v1453
    %v1873 = vsub.f32 %v1284, %v1453
    %v1874 = vadd.f32 %v1748, 1e-05
    %v1875 = vadd.f32 %v1749, 1e-05
    %v1876 = vadd.f32 %v1750, 1e-05
    %v1877 = vadd.f32 %v1751, 1e-05
    %v1878 = vadd.f32 %v1752, 1e-05
    %v1879 = vadd.f32 %v1753, 1e-05
    %v1880 = vadd.f32 %v1754, 1e-05
    %v1881 = vadd.f32 %v1755, 1e-05
    %v1882 = vadd.f32 %v1756, 1e-05
    %v1883 = vadd.f32 %v1757, 1e-05
    %v1884 = vadd.f32 %v1758, 1e-05
    %v1885 = vadd.f32 %v1759, 1e-05
    %v1886 = vadd.f32 %v1760, 1e-05
    %v1887 = vadd.f32 %v1761, 1e-05
    %v1888 = vadd.f32 %v1762, 1e-05
    %v1889 = vadd.f32 %v1763, 1e-05
    %v1890 = vadd.f32 %v1764, 1e-05
    %v1891 = vadd.f32 %v1765, 1e-05
    %v1892 = vadd.f32 %v1766, 1e-05
    %v1893 = vadd.f32 %v1767, 1e-05
    %v1894 = vadd.f32 %v1768, 1e-05
    %v1895 = vadd.f32 %v1769, 1e-05
    %v1896 = vadd.f32 %v1770, 1e-05
    %v1897 = vadd.f32 %v1771, 1e-05
    %v1898 = vadd.f32 %v1772, 1e-05
    %v1899 = vadd.f32 %v1773, 1e-05
    %v1900 = vadd.f32 %v1774, 1e-05
    %v1901 = vadd.f32 %v1775, 1e-05
    %v1902 = vadd.f32 %v1776, 1e-05
    %v1903 = vadd.f32 %v1777, 1e-05
    %v1904 = vadd.f32 %v1778, 1e-05
    %v1905 = vadd.f32 %v1779, 1e-05
    %v1906 = vadd.f32 %v1780, 1e-05
    %v1907 = vadd.f32 %v1781, 1e-05
    %v1908 = vadd.f32 %v1782, 1e-05
    %v1909 = vadd.f32 %v1783, 1e-05
    %v1910 = vadd.f32 %v1784, 1e-05
    %v1911 = vadd.f32 %v1785, 1e-05
    %v1912 = vadd.f32 %v1786, 1e-05
    %v1913 = vadd.f32 %v1787, 1e-05
    %v1914 = vadd.f32 %v1788, 1e-05
    %v1915 = vadd.f32 %v1789, 1e-05
    %v1916 = vrsqrt.pop %v1874
    %v1917 = vrsqrt.pop %v1875
    %v1918 = vrsqrt.pop %v1876
    %v1919 = vrsqrt.pop %v1877
    %v1920 = vrsqrt.pop %v1878
    %v1921 = vrsqrt.pop %v1879
    %v1922 = vrsqrt.pop %v1880
    %v1923 = vrsqrt.pop %v1881
    %v1924 = vrsqrt.pop %v1882
    %v1925 = vrsqrt.pop %v1883
    %v1926 = vrsqrt.pop %v1884
    %v1927 = vrsqrt.pop %v1885
    %v1928 = vrsqrt.pop %v1886
    %v1929 = vrsqrt.pop %v1887
    %v1930 = vrsqrt.pop %v1888
    %v1931 = vrsqrt.pop %v1889
    %v1932 = vrsqrt.pop %v1890
    %v1933 = vrsqrt.pop %v1891
    %v1934 = vrsqrt.pop %v1892
    %v1935 = vrsqrt.pop %v1893
    %v1936 = vrsqrt.pop %v1894
    %v1937 = vrsqrt.pop %v1895
    %v1938 = vrsqrt.pop %v1896
    %v1939 = vrsqrt.pop %v1897
    %v1940 = vrsqrt.pop %v1898
    %v1941 = vrsqrt.pop %v1899
    %v1942 = vrsqrt.pop %v1900
    %v1943 = vrsqrt.pop %v1901
    %v1944 = vrsqrt.pop %v1902
    %v1945 = vrsqrt.pop %v1903
    %v1946 = vrsqrt.pop %v1904
    %v1947 = vrsqrt.pop %v1905
    %v1948 = vrsqrt.pop %v1906
    %v1949 = vrsqrt.pop %v1907
    %v1950 = vrsqrt.pop %v1908
    %v1951 = vrsqrt.pop %v1909
    %v1952 = vrsqrt.pop %v1910
    %v1953 = vrsqrt.pop %v1911
    %v1954 = vrsqrt.pop %v1912
    %v1955 = vrsqrt.pop %v1913
    %v1956 = vrsqrt.pop %v1914
    %v1957 = vrsqrt.pop %v1915
    %v1958 = vmul.f32 %v1790, %v1916
    %v1959 = vmul.f32 %v1791, %v1916
    %v1960 = vmul.f32 %v1792, %v1917
    %v1961 = vmul.f32 %v1793, %v1917
    %v1962 = vmul.f32 %v1794, %v1918
    %v1963 = vmul.f32 %v1795, %v1918
    %v1964 = vmul.f32 %v1796, %v1919
    %v1965 = vmul.f32 %v1797, %v1919
    %v1966 = vmul.f32 %v1798, %v1920
    %v1967 = vmul.f32 %v1799, %v1920
    %v1968 = vmul.f32 %v1800, %v1921
    %v1969 = vmul.f32 %v1801, %v1921
    %v1970 = vmul.f32 %v1802, %v1922
    %v1971 = vmul.f32 %v1803, %v1922
    %v1972 = vmul.f32 %v1804, %v1923
    %v1973 = vmul.f32 %v1805, %v1923
    %v1974 = vmul.f32 %v1806, %v1924
    %v1975 = vmul.f32 %v1807, %v1924
    %v1976 = vmul.f32 %v1808, %v1925
    %v1977 = vmul.f32 %v1809, %v1925
    %v1978 = vmul.f32 %v1810, %v1926
    %v1979 = vmul.f32 %v1811, %v1926
    %v1980 = vmul.f32 %v1812, %v1927
    %v1981 = vmul.f32 %v1813, %v1927
    %v1982 = vmul.f32 %v1814, %v1928
    %v1983 = vmul.f32 %v1815, %v1928
    %v1984 = vmul.f32 %v1816, %v1929
    %v1985 = vmul.f32 %v1817, %v1929
    %v1986 = vmul.f32 %v1818, %v1930
    %v1987 = vmul.f32 %v1819, %v1930
    %v1988 = vmul.f32 %v1820, %v1931
    %v1989 = vmul.f32 %v1821, %v1931
    %v1990 = vmul.f32 %v1822, %v1932
    %v1991 = vmul.f32 %v1823, %v1932
    %v1992 = vmul.f32 %v1824, %v1933
    %v1993 = vmul.f32 %v1825, %v1933
    %v1994 = vmul.f32 %v1826, %v1934
    %v1995 = vmul.f32 %v1827, %v1934
    %v1996 = vmul.f32 %v1828, %v1935
    %v1997 = vmul.f32 %v1829, %v1935
    %v1998 = vmul.f32 %v1830, %v1936
    %v1999 = vmul.f32 %v1831, %v1936
    %v2000 = vmul.f32 %v1832, %v1937
    %v2001 = vmul.f32 %v1833, %v1937
    %v2002 = vmul.f32 %v1834, %v1938
    %v2003 = vmul.f32 %v1835, %v1938
    %v2004 = vmul.f32 %v1836, %v1939
    %v2005 = vmul.f32 %v1837, %v1939
    %v2006 = vmul.f32 %v1838, %v1940
    %v2007 = vmul.f32 %v1839, %v1940
    %v2008 = vmul.f32 %v1840, %v1941
    %v2009 = vmul.f32 %v1841, %v1941
    %v2010 = vmul.f32 %v1842, %v1942
    %v2011 = vmul.f32 %v1843, %v1942
    %v2012 = vmul.f32 %v1844, %v1943
    %v2013 = vmul.f32 %v1845, %v1943
    %v2014 = vmul.f32 %v1846, %v1944
    %v2015 = vmul.f32 %v1847, %v1944
    %v2016 = vmul.f32 %v1848, %v1945
    %v2017 = vmul.f32 %v1849, %v1945
    %v2018 = vmul.f32 %v1850, %v1946
    %v2019 = vmul.f32 %v1851, %v1946
    %v2020 = vmul.f32 %v1852, %v1947
    %v2021 = vmul.f32 %v1853, %v1947
    %v2022 = vmul.f32 %v1854, %v1948
    %v2023 = vmul.f32 %v1855, %v1948
    %v2024 = vmul.f32 %v1856, %v1949
    %v2025 = vmul.f32 %v1857, %v1949
    %v2026 = vmul.f32 %v1858, %v1950
    %v2027 = vmul.f32 %v1859, %v1950
    %v2028 = vmul.f32 %v1860, %v1951
    %v2029 = vmul.f32 %v1861, %v1951
    %v2030 = vmul.f32 %v1862, %v1952
    %v2031 = vmul.f32 %v1863, %v1952
    %v2032 = vmul.f32 %v1864, %v1953
    %v2033 = vmul.f32 %v1865, %v1953
    %v2034 = vmul.f32 %v1866, %v1954
    %v2035 = vmul.f32 %v1867, %v1954
    %v2036 = vmul.f32 %v1868, %v1955
    %v2037 = vmul.f32 %v1869, %v1955
    %v2038 = vmul.f32 %v1870, %v1956
    %v2039 = vmul.f32 %v1871, %v1956
    %v2040 = vmul.f32 %v1872, %v1957
    %v2041 = vmul.f32 %v1873, %v1957
    %v2042 = vld [vmem:[%s4] sm:$0xff]
    %v2043 = vld [vmem:[%s4 + $0x8] sm:$0xff]
    %v2044 = vld [vmem:[%s4 + $0x10] sm:$0xff]
    %v2045 = vld [vmem:[%s4 + $0x18] sm:$0xff]
    %v2046 = vld [vmem:[%s4 + $0x20] sm:$0xff]
    %v2047 = vld [vmem:[%s4 + $0x28] sm:$0xff]
    %v2048 = vld [vmem:[%s4 + $0x30] sm:$0xff]
    %v2049 = vld [vmem:[%s4 + $0x38] sm:$0xff]
    %v2050 = vld [vmem:[%s4 + $0x40] sm:$0xff]
    %v2051 = vld [vmem:[%s4 + $0x48] sm:$0xff]
    %v2052 = vld [vmem:[%s4 + $0x50] sm:$0xff]
    %v2053 = vld [vmem:[%s4 + $0x58] sm:$0xff]
    %v2054 = vld [vmem:[%s4 + $0x60] sm:$0xff]
    %v2055 = vld [vmem:[%s4 + $0x68] sm:$0xff]
    %v2056 = vld [vmem:[%s4 + $0x70] sm:$0xff]
    %v2057 = vld [vmem:[%s4 + $0x78] sm:$0xff]
    %v2058 = vld [vmem:[%s4 + $0x80] sm:$0xff]
    %v2059 = vld [vmem:[%s4 + $0x88] sm:$0xff]
    %v2060 = vld [vmem:[%s4 + $0x90] sm:$0xff]
    %v2061 = vld [vmem:[%s4 + $0x98] sm:$0xff]
    %v2062 = vld [vmem:[%s4 + $0xa0] sm:$0xff]
    %v2063 = vld [vmem:[%s4 + $0xa8] sm:$0xff]
    %v2064 = vld [vmem:[%s4 + $0xb0] sm:$0xff]
    %v2065 = vld [vmem:[%s4 + $0xb8] sm:$0xff]
    %v2066 = vld [vmem:[%s4 + $0xc0] sm:$0xff]
    %v2067 = vld [vmem:[%s4 + $0xc8] sm:$0xff]
    %v2068 = vld [vmem:[%s4 + $0xd0] sm:$0xff]
    %v2069 = vld [vmem:[%s4 + $0xd8] sm:$0xff]
    %v2070 = vld [vmem:[%s4 + $0xe0] sm:$0xff]
    %v2071 = vld [vmem:[%s4 + $0xe8] sm:$0xff]
    %v2072 = vld [vmem:[%s4 + $0xf0] sm:$0xff]
    %v2073 = vld [vmem:[%s4 + $0xf8] sm:$0xff]
    %v2074 = vld [vmem:[%s4 + $0x100] sm:$0xff]
    %v2075 = vld [vmem:[%s4 + $0x108] sm:$0xff]
    %v2076 = vld [vmem:[%s4 + $0x110] sm:$0xff]
    %v2077 = vld [vmem:[%s4 + $0x118] sm:$0xff]
    %v2078 = vld [vmem:[%s4 + $0x120] sm:$0xff]
    %v2079 = vld [vmem:[%s4 + $0x128] sm:$0xff]
    %v2080 = vld [vmem:[%s4 + $0x130] sm:$0xff]
    %v2081 = vld [vmem:[%s4 + $0x138] sm:$0xff]
    %v2082 = vld [vmem:[%s4 + $0x140] sm:$0xff]
    %v2083 = vld [vmem:[%s4 + $0x148] sm:$0xff]
    %2085 = vset.pattern.permute.xlu0 0
    %2086 = vperm.xlu0 %2085, %v2042
    %v2087 = vpop.permute.xlu0 %2086
    %2090 = vset.pattern.permute.xlu0 0
    %2091 = vperm.xlu0 %2090, %v2043
    %v2092 = vpop.permute.xlu0 %2091
    %2095 = vset.pattern.permute.xlu0 0
    %2096 = vperm.xlu0 %2095, %v2044
    %v2097 = vpop.permute.xlu0 %2096
    %2100 = vset.pattern.permute.xlu0 0
    %2101 = vperm.xlu0 %2100, %v2045
    %v2102 = vpop.permute.xlu0 %2101
    %2105 = vset.pattern.permute.xlu0 0
    %2106 = vperm.xlu0 %2105, %v2046
    %v2107 = vpop.permute.xlu0 %2106
    %2110 = vset.pattern.permute.xlu0 0
    %2111 = vperm.xlu0 %2110, %v2047
    %v2112 = vpop.permute.xlu0 %2111
    %2115 = vset.pattern.permute.xlu0 0
    %2116 = vperm.xlu0 %2115, %v2048
    %v2117 = vpop.permute.xlu0 %2116
    %2120 = vset.pattern.permute.xlu0 0
    %2121 = vperm.xlu0 %2120, %v2049
    %v2122 = vpop.permute.xlu0 %2121
    %2125 = vset.pattern.permute.xlu0 0
    %2126 = vperm.xlu0 %2125, %v2050
    %v2127 = vpop.permute.xlu0 %2126
    %2130 = vset.pattern.permute.xlu0 0
    %2131 = vperm.xlu0 %2130, %v2051
    %v2132 = vpop.permute.xlu0 %2131
    %2135 = vset.pattern.permute.xlu0 0
    %2136 = vperm.xlu0 %2135, %v2052
    %v2137 = vpop.permute.xlu0 %2136
    %2140 = vset.pattern.permute.xlu0 0
    %2141 = vperm.xlu0 %2140, %v2053
    %v2142 = vpop.permute.xlu0 %2141
    %2145 = vset.pattern.permute.xlu0 0
    %2146 = vperm.xlu0 %2145, %v2054
    %v2147 = vpop.permute.xlu0 %2146
    %2150 = vset.pattern.permute.xlu0 0
    %2151 = vperm.xlu0 %2150, %v2055
    %v2152 = vpop.permute.xlu0 %2151
    %2155 = vset.pattern.permute.xlu0 0
    %2156 = vperm.xlu0 %2155, %v2056
    %v2157 = vpop.permute.xlu0 %2156
    %2160 = vset.pattern.permute.xlu0 0
    %2161 = vperm.xlu0 %2160, %v2057
    %v2162 = vpop.permute.xlu0 %2161
    %2165 = vset.pattern.permute.xlu0 0
    %2166 = vperm.xlu0 %2165, %v2058
    %v2167 = vpop.permute.xlu0 %2166
    %2170 = vset.pattern.permute.xlu0 0
    %2171 = vperm.xlu0 %2170, %v2059
    %v2172 = vpop.permute.xlu0 %2171
    %2175 = vset.pattern.permute.xlu0 0
    %2176 = vperm.xlu0 %2175, %v2060
    %v2177 = vpop.permute.xlu0 %2176
    %2180 = vset.pattern.permute.xlu0 0
    %2181 = vperm.xlu0 %2180, %v2061
    %v2182 = vpop.permute.xlu0 %2181
    %2185 = vset.pattern.permute.xlu0 0
    %2186 = vperm.xlu0 %2185, %v2062
    %v2187 = vpop.permute.xlu0 %2186
    %2190 = vset.pattern.permute.xlu0 0
    %2191 = vperm.xlu0 %2190, %v2063
    %v2192 = vpop.permute.xlu0 %2191
    %2195 = vset.pattern.permute.xlu0 0
    %2196 = vperm.xlu0 %2195, %v2064
    %v2197 = vpop.permute.xlu0 %2196
    %2200 = vset.pattern.permute.xlu0 0
    %2201 = vperm.xlu0 %2200, %v2065
    %v2202 = vpop.permute.xlu0 %2201
    %2205 = vset.pattern.permute.xlu0 0
    %2206 = vperm.xlu0 %2205, %v2066
    %v2207 = vpop.permute.xlu0 %2206
    %2210 = vset.pattern.permute.xlu0 0
    %2211 = vperm.xlu0 %2210, %v2067
    %v2212 = vpop.permute.xlu0 %2211
    %2215 = vset.pattern.permute.xlu0 0
    %2216 = vperm.xlu0 %2215, %v2068
    %v2217 = vpop.permute.xlu0 %2216
    %2220 = vset.pattern.permute.xlu0 0
    %2221 = vperm.xlu0 %2220, %v2069
    %v2222 = vpop.permute.xlu0 %2221
    %2225 = vset.pattern.permute.xlu0 0
    %2226 = vperm.xlu0 %2225, %v2070
    %v2227 = vpop.permute.xlu0 %2226
    %2230 = vset.pattern.permute.xlu0 0
    %2231 = vperm.xlu0 %2230, %v2071
    %v2232 = vpop.permute.xlu0 %2231
    %2235 = vset.pattern.permute.xlu0 0
    %2236 = vperm.xlu0 %2235, %v2072
    %v2237 = vpop.permute.xlu0 %2236
    %2240 = vset.pattern.permute.xlu0 0
    %2241 = vperm.xlu0 %2240, %v2073
    %v2242 = vpop.permute.xlu0 %2241
    %2245 = vset.pattern.permute.xlu0 0
    %2246 = vperm.xlu0 %2245, %v2074
    %v2247 = vpop.permute.xlu0 %2246
    %2250 = vset.pattern.permute.xlu0 0
    %2251 = vperm.xlu0 %2250, %v2075
    %v2252 = vpop.permute.xlu0 %2251
    %2255 = vset.pattern.permute.xlu0 0
    %2256 = vperm.xlu0 %2255, %v2076
    %v2257 = vpop.permute.xlu0 %2256
    %2260 = vset.pattern.permute.xlu0 0
    %2261 = vperm.xlu0 %2260, %v2077
    %v2262 = vpop.permute.xlu0 %2261
    %2265 = vset.pattern.permute.xlu0 0
    %2266 = vperm.xlu0 %2265, %v2078
    %v2267 = vpop.permute.xlu0 %2266
    %2270 = vset.pattern.permute.xlu0 0
    %2271 = vperm.xlu0 %2270, %v2079
    %v2272 = vpop.permute.xlu0 %2271
    %2275 = vset.pattern.permute.xlu0 0
    %2276 = vperm.xlu0 %2275, %v2080
    %v2277 = vpop.permute.xlu0 %2276
    %2280 = vset.pattern.permute.xlu0 0
    %2281 = vperm.xlu0 %2280, %v2081
    %v2282 = vpop.permute.xlu0 %2281
    %2285 = vset.pattern.permute.xlu0 0
    %2286 = vperm.xlu0 %2285, %v2082
    %v2287 = vpop.permute.xlu0 %2286
    %2290 = vset.pattern.permute.xlu0 0
    %2291 = vperm.xlu0 %2290, %v2083
    %v2292 = vpop.permute.xlu0 %2291
    %v2294 = vmul.f32 %v1958, %v2087
    %v2295 = vmul.f32 %v1959, %v2087
    %v2296 = vmul.f32 %v1960, %v2092
    %v2297 = vmul.f32 %v1961, %v2092
    %v2298 = vmul.f32 %v1962, %v2097
    %v2299 = vmul.f32 %v1963, %v2097
    %v2300 = vmul.f32 %v1964, %v2102
    %v2301 = vmul.f32 %v1965, %v2102
    %v2302 = vmul.f32 %v1966, %v2107
    %v2303 = vmul.f32 %v1967, %v2107
    %v2304 = vmul.f32 %v1968, %v2112
    %v2305 = vmul.f32 %v1969, %v2112
    %v2306 = vmul.f32 %v1970, %v2117
    %v2307 = vmul.f32 %v1971, %v2117
    %v2308 = vmul.f32 %v1972, %v2122
    %v2309 = vmul.f32 %v1973, %v2122
    %v2310 = vmul.f32 %v1974, %v2127
    %v2311 = vmul.f32 %v1975, %v2127
    %v2312 = vmul.f32 %v1976, %v2132
    %v2313 = vmul.f32 %v1977, %v2132
    %v2314 = vmul.f32 %v1978, %v2137
    %v2315 = vmul.f32 %v1979, %v2137
    %v2316 = vmul.f32 %v1980, %v2142
    %v2317 = vmul.f32 %v1981, %v2142
    %v2318 = vmul.f32 %v1982, %v2147
    %v2319 = vmul.f32 %v1983, %v2147
    %v2320 = vmul.f32 %v1984, %v2152
    %v2321 = vmul.f32 %v1985, %v2152
    %v2322 = vmul.f32 %v1986, %v2157
    %v2323 = vmul.f32 %v1987, %v2157
    %v2324 = vmul.f32 %v1988, %v2162
    %v2325 = vmul.f32 %v1989, %v2162
    %v2326 = vmul.f32 %v1990, %v2167
    %v2327 = vmul.f32 %v1991, %v2167
    %v2328 = vmul.f32 %v1992, %v2172
    %v2329 = vmul.f32 %v1993, %v2172
    %v2330 = vmul.f32 %v1994, %v2177
    %v2331 = vmul.f32 %v1995, %v2177
    %v2332 = vmul.f32 %v1996, %v2182
    %v2333 = vmul.f32 %v1997, %v2182
    %v2334 = vmul.f32 %v1998, %v2187
    %v2335 = vmul.f32 %v1999, %v2187
    %v2336 = vmul.f32 %v2000, %v2192
    %v2337 = vmul.f32 %v2001, %v2192
    %v2338 = vmul.f32 %v2002, %v2197
    %v2339 = vmul.f32 %v2003, %v2197
    %v2340 = vmul.f32 %v2004, %v2202
    %v2341 = vmul.f32 %v2005, %v2202
    %v2342 = vmul.f32 %v2006, %v2207
    %v2343 = vmul.f32 %v2007, %v2207
    %v2344 = vmul.f32 %v2008, %v2212
    %v2345 = vmul.f32 %v2009, %v2212
    %v2346 = vmul.f32 %v2010, %v2217
    %v2347 = vmul.f32 %v2011, %v2217
    %v2348 = vmul.f32 %v2012, %v2222
    %v2349 = vmul.f32 %v2013, %v2222
    %v2350 = vmul.f32 %v2014, %v2227
    %v2351 = vmul.f32 %v2015, %v2227
    %v2352 = vmul.f32 %v2016, %v2232
    %v2353 = vmul.f32 %v2017, %v2232
    %v2354 = vmul.f32 %v2018, %v2237
    %v2355 = vmul.f32 %v2019, %v2237
    %v2356 = vmul.f32 %v2020, %v2242
    %v2357 = vmul.f32 %v2021, %v2242
    %v2358 = vmul.f32 %v2022, %v2247
    %v2359 = vmul.f32 %v2023, %v2247
    %v2360 = vmul.f32 %v2024, %v2252
    %v2361 = vmul.f32 %v2025, %v2252
    %v2362 = vmul.f32 %v2026, %v2257
    %v2363 = vmul.f32 %v2027, %v2257
    %v2364 = vmul.f32 %v2028, %v2262
    %v2365 = vmul.f32 %v2029, %v2262
    %v2366 = vmul.f32 %v2030, %v2267
    %v2367 = vmul.f32 %v2031, %v2267
    %v2368 = vmul.f32 %v2032, %v2272
    %v2369 = vmul.f32 %v2033, %v2272
    %v2370 = vmul.f32 %v2034, %v2277
    %v2371 = vmul.f32 %v2035, %v2277
    %v2372 = vmul.f32 %v2036, %v2282
    %v2373 = vmul.f32 %v2037, %v2282
    %v2374 = vmul.f32 %v2038, %v2287
    %v2375 = vmul.f32 %v2039, %v2287
    %v2376 = vmul.f32 %v2040, %v2292
    %v2377 = vmul.f32 %v2041, %v2292
    %v2378 = vld [vmem:[%s5] sm:$0xff]
    %v2379 = vld [vmem:[%s5 + $0x8] sm:$0xff]
    %v2380 = vld [vmem:[%s5 + $0x10] sm:$0xff]
    %v2381 = vld [vmem:[%s5 + $0x18] sm:$0xff]
    %v2382 = vld [vmem:[%s5 + $0x20] sm:$0xff]
    %v2383 = vld [vmem:[%s5 + $0x28] sm:$0xff]
    %v2384 = vld [vmem:[%s5 + $0x30] sm:$0xff]
    %v2385 = vld [vmem:[%s5 + $0x38] sm:$0xff]
    %v2386 = vld [vmem:[%s5 + $0x40] sm:$0xff]
    %v2387 = vld [vmem:[%s5 + $0x48] sm:$0xff]
    %v2388 = vld [vmem:[%s5 + $0x50] sm:$0xff]
    %v2389 = vld [vmem:[%s5 + $0x58] sm:$0xff]
    %v2390 = vld [vmem:[%s5 + $0x60] sm:$0xff]
    %v2391 = vld [vmem:[%s5 + $0x68] sm:$0xff]
    %v2392 = vld [vmem:[%s5 + $0x70] sm:$0xff]
    %v2393 = vld [vmem:[%s5 + $0x78] sm:$0xff]
    %v2394 = vld [vmem:[%s5 + $0x80] sm:$0xff]
    %v2395 = vld [vmem:[%s5 + $0x88] sm:$0xff]
    %v2396 = vld [vmem:[%s5 + $0x90] sm:$0xff]
    %v2397 = vld [vmem:[%s5 + $0x98] sm:$0xff]
    %v2398 = vld [vmem:[%s5 + $0xa0] sm:$0xff]
    %v2399 = vld [vmem:[%s5 + $0xa8] sm:$0xff]
    %v2400 = vld [vmem:[%s5 + $0xb0] sm:$0xff]
    %v2401 = vld [vmem:[%s5 + $0xb8] sm:$0xff]
    %v2402 = vld [vmem:[%s5 + $0xc0] sm:$0xff]
    %v2403 = vld [vmem:[%s5 + $0xc8] sm:$0xff]
    %v2404 = vld [vmem:[%s5 + $0xd0] sm:$0xff]
    %v2405 = vld [vmem:[%s5 + $0xd8] sm:$0xff]
    %v2406 = vld [vmem:[%s5 + $0xe0] sm:$0xff]
    %v2407 = vld [vmem:[%s5 + $0xe8] sm:$0xff]
    %v2408 = vld [vmem:[%s5 + $0xf0] sm:$0xff]
    %v2409 = vld [vmem:[%s5 + $0xf8] sm:$0xff]
    %v2410 = vld [vmem:[%s5 + $0x100] sm:$0xff]
    %v2411 = vld [vmem:[%s5 + $0x108] sm:$0xff]
    %v2412 = vld [vmem:[%s5 + $0x110] sm:$0xff]
    %v2413 = vld [vmem:[%s5 + $0x118] sm:$0xff]
    %v2414 = vld [vmem:[%s5 + $0x120] sm:$0xff]
    %v2415 = vld [vmem:[%s5 + $0x128] sm:$0xff]
    %v2416 = vld [vmem:[%s5 + $0x130] sm:$0xff]
    %v2417 = vld [vmem:[%s5 + $0x138] sm:$0xff]
    %v2418 = vld [vmem:[%s5 + $0x140] sm:$0xff]
    %v2419 = vld [vmem:[%s5 + $0x148] sm:$0xff]
    %2421 = vset.pattern.permute.xlu0 0
    %2422 = vperm.xlu0 %2421, %v2378
    %v2423 = vpop.permute.xlu0 %2422
    %2426 = vset.pattern.permute.xlu0 0
    %2427 = vperm.xlu0 %2426, %v2379
    %v2428 = vpop.permute.xlu0 %2427
    %2431 = vset.pattern.permute.xlu0 0
    %2432 = vperm.xlu0 %2431, %v2380
    %v2433 = vpop.permute.xlu0 %2432
    %2436 = vset.pattern.permute.xlu0 0
    %2437 = vperm.xlu0 %2436, %v2381
    %v2438 = vpop.permute.xlu0 %2437
    %2441 = vset.pattern.permute.xlu0 0
    %2442 = vperm.xlu0 %2441, %v2382
    %v2443 = vpop.permute.xlu0 %2442
    %2446 = vset.pattern.permute.xlu0 0
    %2447 = vperm.xlu0 %2446, %v2383
    %v2448 = vpop.permute.xlu0 %2447
    %2451 = vset.pattern.permute.xlu0 0
    %2452 = vperm.xlu0 %2451, %v2384
    %v2453 = vpop.permute.xlu0 %2452
    %2456 = vset.pattern.permute.xlu0 0
    %2457 = vperm.xlu0 %2456, %v2385
    %v2458 = vpop.permute.xlu0 %2457
    %2461 = vset.pattern.permute.xlu0 0
    %2462 = vperm.xlu0 %2461, %v2386
    %v2463 = vpop.permute.xlu0 %2462
    %2466 = vset.pattern.permute.xlu0 0
    %2467 = vperm.xlu0 %2466, %v2387
    %v2468 = vpop.permute.xlu0 %2467
    %2471 = vset.pattern.permute.xlu0 0
    %2472 = vperm.xlu0 %2471, %v2388
    %v2473 = vpop.permute.xlu0 %2472
    %2476 = vset.pattern.permute.xlu0 0
    %2477 = vperm.xlu0 %2476, %v2389
    %v2478 = vpop.permute.xlu0 %2477
    %2481 = vset.pattern.permute.xlu0 0
    %2482 = vperm.xlu0 %2481, %v2390
    %v2483 = vpop.permute.xlu0 %2482
    %2486 = vset.pattern.permute.xlu0 0
    %2487 = vperm.xlu0 %2486, %v2391
    %v2488 = vpop.permute.xlu0 %2487
    %2491 = vset.pattern.permute.xlu0 0
    %2492 = vperm.xlu0 %2491, %v2392
    %v2493 = vpop.permute.xlu0 %2492
    %2496 = vset.pattern.permute.xlu0 0
    %2497 = vperm.xlu0 %2496, %v2393
    %v2498 = vpop.permute.xlu0 %2497
    %2501 = vset.pattern.permute.xlu0 0
    %2502 = vperm.xlu0 %2501, %v2394
    %v2503 = vpop.permute.xlu0 %2502
    %2506 = vset.pattern.permute.xlu0 0
    %2507 = vperm.xlu0 %2506, %v2395
    %v2508 = vpop.permute.xlu0 %2507
    %2511 = vset.pattern.permute.xlu0 0
    %2512 = vperm.xlu0 %2511, %v2396
    %v2513 = vpop.permute.xlu0 %2512
    %2516 = vset.pattern.permute.xlu0 0
    %2517 = vperm.xlu0 %2516, %v2397
    %v2518 = vpop.permute.xlu0 %2517
    %2521 = vset.pattern.permute.xlu0 0
    %2522 = vperm.xlu0 %2521, %v2398
    %v2523 = vpop.permute.xlu0 %2522
    %2526 = vset.pattern.permute.xlu0 0
    %2527 = vperm.xlu0 %2526, %v2399
    %v2528 = vpop.permute.xlu0 %2527
    %2531 = vset.pattern.permute.xlu0 0
    %2532 = vperm.xlu0 %2531, %v2400
    %v2533 = vpop.permute.xlu0 %2532
    %2536 = vset.pattern.permute.xlu0 0
    %2537 = vperm.xlu0 %2536, %v2401
    %v2538 = vpop.permute.xlu0 %2537
    %2541 = vset.pattern.permute.xlu0 0
    %2542 = vperm.xlu0 %2541, %v2402
    %v2543 = vpop.permute.xlu0 %2542
    %2546 = vset.pattern.permute.xlu0 0
    %2547 = vperm.xlu0 %2546, %v2403
    %v2548 = vpop.permute.xlu0 %2547
    %2551 = vset.pattern.permute.xlu0 0
    %2552 = vperm.xlu0 %2551, %v2404
    %v2553 = vpop.permute.xlu0 %2552
    %2556 = vset.pattern.permute.xlu0 0
    %2557 = vperm.xlu0 %2556, %v2405
    %v2558 = vpop.permute.xlu0 %2557
    %2561 = vset.pattern.permute.xlu0 0
    %2562 = vperm.xlu0 %2561, %v2406
    %v2563 = vpop.permute.xlu0 %2562
    %2566 = vset.pattern.permute.xlu0 0
    %2567 = vperm.xlu0 %2566, %v2407
    %v2568 = vpop.permute.xlu0 %2567
    %2571 = vset.pattern.permute.xlu0 0
    %2572 = vperm.xlu0 %2571, %v2408
    %v2573 = vpop.permute.xlu0 %2572
    %2576 = vset.pattern.permute.xlu0 0
    %2577 = vperm.xlu0 %2576, %v2409
    %v2578 = vpop.permute.xlu0 %2577
    %2581 = vset.pattern.permute.xlu0 0
    %2582 = vperm.xlu0 %2581, %v2410
    %v2583 = vpop.permute.xlu0 %2582
    %2586 = vset.pattern.permute.xlu0 0
    %2587 = vperm.xlu0 %2586, %v2411
    %v2588 = vpop.permute.xlu0 %2587
    %2591 = vset.pattern.permute.xlu0 0
    %2592 = vperm.xlu0 %2591, %v2412
    %v2593 = vpop.permute.xlu0 %2592
    %2596 = vset.pattern.permute.xlu0 0
    %2597 = vperm.xlu0 %2596, %v2413
    %v2598 = vpop.permute.xlu0 %2597
    %2601 = vset.pattern.permute.xlu0 0
    %2602 = vperm.xlu0 %2601, %v2414
    %v2603 = vpop.permute.xlu0 %2602
    %2606 = vset.pattern.permute.xlu0 0
    %2607 = vperm.xlu0 %2606, %v2415
    %v2608 = vpop.permute.xlu0 %2607
    %2611 = vset.pattern.permute.xlu0 0
    %2612 = vperm.xlu0 %2611, %v2416
    %v2613 = vpop.permute.xlu0 %2612
    %2616 = vset.pattern.permute.xlu0 0
    %2617 = vperm.xlu0 %2616, %v2417
    %v2618 = vpop.permute.xlu0 %2617
    %2621 = vset.pattern.permute.xlu0 0
    %2622 = vperm.xlu0 %2621, %v2418
    %v2623 = vpop.permute.xlu0 %2622
    %2626 = vset.pattern.permute.xlu0 0
    %2627 = vperm.xlu0 %2626, %v2419
    %v2628 = vpop.permute.xlu0 %2627
    %v2630 = vadd.f32 %v2294, %v2423
    %v2631 = vadd.f32 %v2295, %v2423
    %v2632 = vadd.f32 %v2296, %v2428
    %v2633 = vadd.f32 %v2297, %v2428
    %v2634 = vadd.f32 %v2298, %v2433
    %v2635 = vadd.f32 %v2299, %v2433
    %v2636 = vadd.f32 %v2300, %v2438
    %v2637 = vadd.f32 %v2301, %v2438
    %v2638 = vadd.f32 %v2302, %v2443
    %v2639 = vadd.f32 %v2303, %v2443
    %v2640 = vadd.f32 %v2304, %v2448
    %v2641 = vadd.f32 %v2305, %v2448
    %v2642 = vadd.f32 %v2306, %v2453
    %v2643 = vadd.f32 %v2307, %v2453
    %v2644 = vadd.f32 %v2308, %v2458
    %v2645 = vadd.f32 %v2309, %v2458
    %v2646 = vadd.f32 %v2310, %v2463
    %v2647 = vadd.f32 %v2311, %v2463
    %v2648 = vadd.f32 %v2312, %v2468
    %v2649 = vadd.f32 %v2313, %v2468
    %v2650 = vadd.f32 %v2314, %v2473
    %v2651 = vadd.f32 %v2315, %v2473
    %v2652 = vadd.f32 %v2316, %v2478
    %v2653 = vadd.f32 %v2317, %v2478
    %v2654 = vadd.f32 %v2318, %v2483
    %v2655 = vadd.f32 %v2319, %v2483
    %v2656 = vadd.f32 %v2320, %v2488
    %v2657 = vadd.f32 %v2321, %v2488
    %v2658 = vadd.f32 %v2322, %v2493
    %v2659 = vadd.f32 %v2323, %v2493
    %v2660 = vadd.f32 %v2324, %v2498
    %v2661 = vadd.f32 %v2325, %v2498
    %v2662 = vadd.f32 %v2326, %v2503
    %v2663 = vadd.f32 %v2327, %v2503
    %v2664 = vadd.f32 %v2328, %v2508
    %v2665 = vadd.f32 %v2329, %v2508
    %v2666 = vadd.f32 %v2330, %v2513
    %v2667 = vadd.f32 %v2331, %v2513
    %v2668 = vadd.f32 %v2332, %v2518
    %v2669 = vadd.f32 %v2333, %v2518
    %v2670 = vadd.f32 %v2334, %v2523
    %v2671 = vadd.f32 %v2335, %v2523
    %v2672 = vadd.f32 %v2336, %v2528
    %v2673 = vadd.f32 %v2337, %v2528
    %v2674 = vadd.f32 %v2338, %v2533
    %v2675 = vadd.f32 %v2339, %v2533
    %v2676 = vadd.f32 %v2340, %v2538
    %v2677 = vadd.f32 %v2341, %v2538
    %v2678 = vadd.f32 %v2342, %v2543
    %v2679 = vadd.f32 %v2343, %v2543
    %v2680 = vadd.f32 %v2344, %v2548
    %v2681 = vadd.f32 %v2345, %v2548
    %v2682 = vadd.f32 %v2346, %v2553
    %v2683 = vadd.f32 %v2347, %v2553
    %v2684 = vadd.f32 %v2348, %v2558
    %v2685 = vadd.f32 %v2349, %v2558
    %v2686 = vadd.f32 %v2350, %v2563
    %v2687 = vadd.f32 %v2351, %v2563
    %v2688 = vadd.f32 %v2352, %v2568
    %v2689 = vadd.f32 %v2353, %v2568
    %v2690 = vadd.f32 %v2354, %v2573
    %v2691 = vadd.f32 %v2355, %v2573
    %v2692 = vadd.f32 %v2356, %v2578
    %v2693 = vadd.f32 %v2357, %v2578
    %v2694 = vadd.f32 %v2358, %v2583
    %v2695 = vadd.f32 %v2359, %v2583
    %v2696 = vadd.f32 %v2360, %v2588
    %v2697 = vadd.f32 %v2361, %v2588
    %v2698 = vadd.f32 %v2362, %v2593
    %v2699 = vadd.f32 %v2363, %v2593
    %v2700 = vadd.f32 %v2364, %v2598
    %v2701 = vadd.f32 %v2365, %v2598
    %v2702 = vadd.f32 %v2366, %v2603
    %v2703 = vadd.f32 %v2367, %v2603
    %v2704 = vadd.f32 %v2368, %v2608
    %v2705 = vadd.f32 %v2369, %v2608
    %v2706 = vadd.f32 %v2370, %v2613
    %v2707 = vadd.f32 %v2371, %v2613
    %v2708 = vadd.f32 %v2372, %v2618
    %v2709 = vadd.f32 %v2373, %v2618
    %v2710 = vadd.f32 %v2374, %v2623
    %v2711 = vadd.f32 %v2375, %v2623
    %v2712 = vadd.f32 %v2376, %v2628
    %v2713 = vadd.f32 %v2377, %v2628
    %v2714 = vlaneseq
    %v2715 = vand.u32 %v2714, 127
    %v2716 = vadd.s32 %v2715, 128
    %vm2717 = vcmp.lt.s32.totalorder %v2715, 196
    %vm2718 = vcmp.lt.s32.totalorder %v2716, 196
    %v2719 = vld [vmem:[%s2] sm:$0xff]
    %v2720 = vld [vmem:[%s2 + $0x8] sm:$0xff]
    %v2721 = vld [vmem:[%s2 + $0x10] sm:$0xff]
    %v2722 = vld [vmem:[%s2 + $0x18] sm:$0xff]
    %v2723 = vld [vmem:[%s2 + $0x20] sm:$0xff]
    %v2724 = vld [vmem:[%s2 + $0x28] sm:$0xff]
    %v2725 = vld [vmem:[%s2 + $0x30] sm:$0xff]
    %v2726 = vld [vmem:[%s2 + $0x38] sm:$0xff]
    %v2727 = vld [vmem:[%s2 + $0x40] sm:$0xff]
    %v2728 = vld [vmem:[%s2 + $0x48] sm:$0xff]
    %v2729 = vld [vmem:[%s2 + $0x50] sm:$0xff]
    %v2730 = vld [vmem:[%s2 + $0x58] sm:$0xff]
    %v2731 = vld [vmem:[%s2 + $0x60] sm:$0xff]
    %v2732 = vld [vmem:[%s2 + $0x68] sm:$0xff]
    %v2733 = vld [vmem:[%s2 + $0x70] sm:$0xff]
    %v2734 = vld [vmem:[%s2 + $0x78] sm:$0xff]
    %v2735 = vld [vmem:[%s2 + $0x80] sm:$0xff]
    %v2736 = vld [vmem:[%s2 + $0x88] sm:$0xff]
    %v2737 = vld [vmem:[%s2 + $0x90] sm:$0xff]
    %v2738 = vld [vmem:[%s2 + $0x98] sm:$0xff]
    %v2739 = vld [vmem:[%s2 + $0xa0] sm:$0xff]
    %v2740 = vld [vmem:[%s2 + $0xa8] sm:$0xff]
    %v2741 = vld [vmem:[%s2 + $0xb0] sm:$0xff]
    %v2742 = vld [vmem:[%s2 + $0xb8] sm:$0xff]
    %v2743 = vld [vmem:[%s2 + $0xc0] sm:$0xff]
    %v2744 = vld [vmem:[%s2 + $0xc8] sm:$0xff]
    %v2745 = vld [vmem:[%s2 + $0xd0] sm:$0xff]
    %v2746 = vld [vmem:[%s2 + $0xd8] sm:$0xff]
    %v2747 = vld [vmem:[%s2 + $0xe0] sm:$0xff]
    %v2748 = vld [vmem:[%s2 + $0xe8] sm:$0xff]
    %v2749 = vld [vmem:[%s2 + $0xf0] sm:$0xff]
    %v2750 = vld [vmem:[%s2 + $0xf8] sm:$0xff]
    %v2751 = vld [vmem:[%s2 + $0x100] sm:$0xff]
    %v2752 = vld [vmem:[%s2 + $0x108] sm:$0xff]
    %v2753 = vld [vmem:[%s2 + $0x110] sm:$0xff]
    %v2754 = vld [vmem:[%s2 + $0x118] sm:$0xff]
    %v2755 = vld [vmem:[%s2 + $0x120] sm:$0xff]
    %v2756 = vld [vmem:[%s2 + $0x128] sm:$0xff]
    %v2757 = vld [vmem:[%s2 + $0x130] sm:$0xff]
    %v2758 = vld [vmem:[%s2 + $0x138] sm:$0xff]
    %v2759 = vld [vmem:[%s2 + $0x140] sm:$0xff]
    %v2760 = vld [vmem:[%s2 + $0x148] sm:$0xff]
    %v2761 = vld [vmem:[%s2 + $0x150] sm:$0xff]
    %v2762 = vld [vmem:[%s2 + $0x158] sm:$0xff]
    %v2763 = vld [vmem:[%s2 + $0x160] sm:$0xff]
    %v2764 = vld [vmem:[%s2 + $0x168] sm:$0xff]
    %v2765 = vld [vmem:[%s2 + $0x170] sm:$0xff]
    %v2766 = vld [vmem:[%s2 + $0x178] sm:$0xff]
    %v2767 = vld [vmem:[%s2 + $0x180] sm:$0xff]
    %v2768 = vld [vmem:[%s2 + $0x188] sm:$0xff]
    %v2769 = vld [vmem:[%s2 + $0x190] sm:$0xff]
    %v2770 = vld [vmem:[%s2 + $0x198] sm:$0xff]
    %v2771 = vld [vmem:[%s2 + $0x1a0] sm:$0xff]
    %v2772 = vld [vmem:[%s2 + $0x1a8] sm:$0xff]
    %v2773 = vld [vmem:[%s2 + $0x1b0] sm:$0xff]
    %v2774 = vld [vmem:[%s2 + $0x1b8] sm:$0xff]
    %v2775 = vld [vmem:[%s2 + $0x1c0] sm:$0xff]
    %v2776 = vld [vmem:[%s2 + $0x1c8] sm:$0xff]
    %v2777 = vld [vmem:[%s2 + $0x1d0] sm:$0xff]
    %v2778 = vld [vmem:[%s2 + $0x1d8] sm:$0xff]
    %v2779 = vld [vmem:[%s2 + $0x1e0] sm:$0xff]
    %v2780 = vld [vmem:[%s2 + $0x1e8] sm:$0xff]
    %v2781 = vld [vmem:[%s2 + $0x1f0] sm:$0xff]
    %v2782 = vld [vmem:[%s2 + $0x1f8] sm:$0xff]
    %v2783 = vld [vmem:[%s2 + $0x200] sm:$0xff]
    %v2784 = vld [vmem:[%s2 + $0x208] sm:$0xff]
    %v2785 = vld [vmem:[%s2 + $0x210] sm:$0xff]
    %v2786 = vld [vmem:[%s2 + $0x218] sm:$0xff]
    %v2787 = vld [vmem:[%s2 + $0x220] sm:$0xff]
    %v2788 = vld [vmem:[%s2 + $0x228] sm:$0xff]
    %v2789 = vld [vmem:[%s2 + $0x230] sm:$0xff]
    %v2790 = vld [vmem:[%s2 + $0x238] sm:$0xff]
    %v2791 = vld [vmem:[%s2 + $0x240] sm:$0xff]
    %v2792 = vld [vmem:[%s2 + $0x248] sm:$0xff]
    %v2793 = vld [vmem:[%s2 + $0x250] sm:$0xff]
    %v2794 = vld [vmem:[%s2 + $0x258] sm:$0xff]
    %v2795 = vld [vmem:[%s2 + $0x260] sm:$0xff]
    %v2796 = vld [vmem:[%s2 + $0x268] sm:$0xff]
    %v2797 = vld [vmem:[%s2 + $0x270] sm:$0xff]
    %v2798 = vld [vmem:[%s2 + $0x278] sm:$0xff]
    %v2799 = vld [vmem:[%s2 + $0x280] sm:$0xff]
    %v2800 = vld [vmem:[%s2 + $0x288] sm:$0xff]
    %v2801 = vld [vmem:[%s2 + $0x290] sm:$0xff]
    %v2802 = vld [vmem:[%s2 + $0x298] sm:$0xff]
    %v2803 = vadd.f32 %v2719, %v2630
    %v2804 = vadd.f32 %v2720, %v2631
    %v2805 = vadd.f32 %v2721, %v2632
    %v2806 = vadd.f32 %v2722, %v2633
    %v2807 = vadd.f32 %v2723, %v2634
    %v2808 = vadd.f32 %v2724, %v2635
    %v2809 = vadd.f32 %v2725, %v2636
    %v2810 = vadd.f32 %v2726, %v2637
    %v2811 = vadd.f32 %v2727, %v2638
    %v2812 = vadd.f32 %v2728, %v2639
    %v2813 = vadd.f32 %v2729, %v2640
    %v2814 = vadd.f32 %v2730, %v2641
    %v2815 = vadd.f32 %v2731, %v2642
    %v2816 = vadd.f32 %v2732, %v2643
    %v2817 = vadd.f32 %v2733, %v2644
    %v2818 = vadd.f32 %v2734, %v2645
    %v2819 = vadd.f32 %v2735, %v2646
    %v2820 = vadd.f32 %v2736, %v2647
    %v2821 = vadd.f32 %v2737, %v2648
    %v2822 = vadd.f32 %v2738, %v2649
    %v2823 = vadd.f32 %v2739, %v2650
    %v2824 = vadd.f32 %v2740, %v2651
    %v2825 = vadd.f32 %v2741, %v2652
    %v2826 = vadd.f32 %v2742, %v2653
    %v2827 = vadd.f32 %v2743, %v2654
    %v2828 = vadd.f32 %v2744, %v2655
    %v2829 = vadd.f32 %v2745, %v2656
    %v2830 = vadd.f32 %v2746, %v2657
    %v2831 = vadd.f32 %v2747, %v2658
    %v2832 = vadd.f32 %v2748, %v2659
    %v2833 = vadd.f32 %v2749, %v2660
    %v2834 = vadd.f32 %v2750, %v2661
    %v2835 = vadd.f32 %v2751, %v2662
    %v2836 = vadd.f32 %v2752, %v2663
    %v2837 = vadd.f32 %v2753, %v2664
    %v2838 = vadd.f32 %v2754, %v2665
    %v2839 = vadd.f32 %v2755, %v2666
    %v2840 = vadd.f32 %v2756, %v2667
    %v2841 = vadd.f32 %v2757, %v2668
    %v2842 = vadd.f32 %v2758, %v2669
    %v2843 = vadd.f32 %v2759, %v2670
    %v2844 = vadd.f32 %v2760, %v2671
    %v2845 = vadd.f32 %v2761, %v2672
    %v2846 = vadd.f32 %v2762, %v2673
    %v2847 = vadd.f32 %v2763, %v2674
    %v2848 = vadd.f32 %v2764, %v2675
    %v2849 = vadd.f32 %v2765, %v2676
    %v2850 = vadd.f32 %v2766, %v2677
    %v2851 = vadd.f32 %v2767, %v2678
    %v2852 = vadd.f32 %v2768, %v2679
    %v2853 = vadd.f32 %v2769, %v2680
    %v2854 = vadd.f32 %v2770, %v2681
    %v2855 = vadd.f32 %v2771, %v2682
    %v2856 = vadd.f32 %v2772, %v2683
    %v2857 = vadd.f32 %v2773, %v2684
    %v2858 = vadd.f32 %v2774, %v2685
    %v2859 = vadd.f32 %v2775, %v2686
    %v2860 = vadd.f32 %v2776, %v2687
    %v2861 = vadd.f32 %v2777, %v2688
    %v2862 = vadd.f32 %v2778, %v2689
    %v2863 = vadd.f32 %v2779, %v2690
    %v2864 = vadd.f32 %v2780, %v2691
    %v2865 = vadd.f32 %v2781, %v2692
    %v2866 = vadd.f32 %v2782, %v2693
    %v2867 = vadd.f32 %v2783, %v2694
    %v2868 = vadd.f32 %v2784, %v2695
    %v2869 = vadd.f32 %v2785, %v2696
    %v2870 = vadd.f32 %v2786, %v2697
    %v2871 = vadd.f32 %v2787, %v2698
    %v2872 = vadd.f32 %v2788, %v2699
    %v2873 = vadd.f32 %v2789, %v2700
    %v2874 = vadd.f32 %v2790, %v2701
    %v2875 = vadd.f32 %v2791, %v2702
    %v2876 = vadd.f32 %v2792, %v2703
    %v2877 = vadd.f32 %v2793, %v2704
    %v2878 = vadd.f32 %v2794, %v2705
    %v2879 = vadd.f32 %v2795, %v2706
    %v2880 = vadd.f32 %v2796, %v2707
    %v2881 = vadd.f32 %v2797, %v2708
    %v2882 = vadd.f32 %v2798, %v2709
    %v2883 = vadd.f32 %v2799, %v2710
    %v2884 = vadd.f32 %v2800, %v2711
    %v2885 = vadd.f32 %v2801, %v2712
    %v2886 = vadd.f32 %v2802, %v2713
    %v2887 = vmax.f32 %v2803, 0.0
    %v2888 = vmax.f32 %v2804, 0.0
    %v2889 = vmax.f32 %v2805, 0.0
    %v2890 = vmax.f32 %v2806, 0.0
    %v2891 = vmax.f32 %v2807, 0.0
    %v2892 = vmax.f32 %v2808, 0.0
    %v2893 = vmax.f32 %v2809, 0.0
    %v2894 = vmax.f32 %v2810, 0.0
    %v2895 = vmax.f32 %v2811, 0.0
    %v2896 = vmax.f32 %v2812, 0.0
    %v2897 = vmax.f32 %v2813, 0.0
    %v2898 = vmax.f32 %v2814, 0.0
    %v2899 = vmax.f32 %v2815, 0.0
    %v2900 = vmax.f32 %v2816, 0.0
    %v2901 = vmax.f32 %v2817, 0.0
    %v2902 = vmax.f32 %v2818, 0.0
    %v2903 = vmax.f32 %v2819, 0.0
    %v2904 = vmax.f32 %v2820, 0.0
    %v2905 = vmax.f32 %v2821, 0.0
    %v2906 = vmax.f32 %v2822, 0.0
    %v2907 = vmax.f32 %v2823, 0.0
    %v2908 = vmax.f32 %v2824, 0.0
    %v2909 = vmax.f32 %v2825, 0.0
    %v2910 = vmax.f32 %v2826, 0.0
    %v2911 = vmax.f32 %v2827, 0.0
    %v2912 = vmax.f32 %v2828, 0.0
    %v2913 = vmax.f32 %v2829, 0.0
    %v2914 = vmax.f32 %v2830, 0.0
    %v2915 = vmax.f32 %v2831, 0.0
    %v2916 = vmax.f32 %v2832, 0.0
    %v2917 = vmax.f32 %v2833, 0.0
    %v2918 = vmax.f32 %v2834, 0.0
    %v2919 = vmax.f32 %v2835, 0.0
    %v2920 = vmax.f32 %v2836, 0.0
    %v2921 = vmax.f32 %v2837, 0.0
    %v2922 = vmax.f32 %v2838, 0.0
    %v2923 = vmax.f32 %v2839, 0.0
    %v2924 = vmax.f32 %v2840, 0.0
    %v2925 = vmax.f32 %v2841, 0.0
    %v2926 = vmax.f32 %v2842, 0.0
    %v2927 = vmax.f32 %v2843, 0.0
    %v2928 = vmax.f32 %v2844, 0.0
    %v2929 = vmax.f32 %v2845, 0.0
    %v2930 = vmax.f32 %v2846, 0.0
    %v2931 = vmax.f32 %v2847, 0.0
    %v2932 = vmax.f32 %v2848, 0.0
    %v2933 = vmax.f32 %v2849, 0.0
    %v2934 = vmax.f32 %v2850, 0.0
    %v2935 = vmax.f32 %v2851, 0.0
    %v2936 = vmax.f32 %v2852, 0.0
    %v2937 = vmax.f32 %v2853, 0.0
    %v2938 = vmax.f32 %v2854, 0.0
    %v2939 = vmax.f32 %v2855, 0.0
    %v2940 = vmax.f32 %v2856, 0.0
    %v2941 = vmax.f32 %v2857, 0.0
    %v2942 = vmax.f32 %v2858, 0.0
    %v2943 = vmax.f32 %v2859, 0.0
    %v2944 = vmax.f32 %v2860, 0.0
    %v2945 = vmax.f32 %v2861, 0.0
    %v2946 = vmax.f32 %v2862, 0.0
    %v2947 = vmax.f32 %v2863, 0.0
    %v2948 = vmax.f32 %v2864, 0.0
    %v2949 = vmax.f32 %v2865, 0.0
    %v2950 = vmax.f32 %v2866, 0.0
    %v2951 = vmax.f32 %v2867, 0.0
    %v2952 = vmax.f32 %v2868, 0.0
    %v2953 = vmax.f32 %v2869, 0.0
    %v2954 = vmax.f32 %v2870, 0.0
    %v2955 = vmax.f32 %v2871, 0.0
    %v2956 = vmax.f32 %v2872, 0.0
    %v2957 = vmax.f32 %v2873, 0.0
    %v2958 = vmax.f32 %v2874, 0.0
    %v2959 = vmax.f32 %v2875, 0.0
    %v2960 = vmax.f32 %v2876, 0.0
    %v2961 = vmax.f32 %v2877, 0.0
    %v2962 = vmax.f32 %v2878, 0.0
    %v2963 = vmax.f32 %v2879, 0.0
    %v2964 = vmax.f32 %v2880, 0.0
    %v2965 = vmax.f32 %v2881, 0.0
    %v2966 = vmax.f32 %v2882, 0.0
    %v2967 = vmax.f32 %v2883, 0.0
    %v2968 = vmax.f32 %v2884, 0.0
    %v2969 = vmax.f32 %v2885, 0.0
    %v2970 = vmax.f32 %v2886, 0.0
    %v2971 = vsel %vm2717, %v2887, 0.0
    %v2972 = vsel %vm2718, %v2888, 0.0
    %v2973 = vsel %vm2717, %v2889, 0.0
    %v2974 = vsel %vm2718, %v2890, 0.0
    %v2975 = vsel %vm2717, %v2891, 0.0
    %v2976 = vsel %vm2718, %v2892, 0.0
    %v2977 = vsel %vm2717, %v2893, 0.0
    %v2978 = vsel %vm2718, %v2894, 0.0
    %v2979 = vsel %vm2717, %v2895, 0.0
    %v2980 = vsel %vm2718, %v2896, 0.0
    %v2981 = vsel %vm2717, %v2897, 0.0
    %v2982 = vsel %vm2718, %v2898, 0.0
    %v2983 = vsel %vm2717, %v2899, 0.0
    %v2984 = vsel %vm2718, %v2900, 0.0
    %v2985 = vsel %vm2717, %v2901, 0.0
    %v2986 = vsel %vm2718, %v2902, 0.0
    %v2987 = vsel %vm2717, %v2903, 0.0
    %v2988 = vsel %vm2718, %v2904, 0.0
    %v2989 = vsel %vm2717, %v2905, 0.0
    %v2990 = vsel %vm2718, %v2906, 0.0
    %v2991 = vsel %vm2717, %v2907, 0.0
    %v2992 = vsel %vm2718, %v2908, 0.0
    %v2993 = vsel %vm2717, %v2909, 0.0
    %v2994 = vsel %vm2718, %v2910, 0.0
    %v2995 = vsel %vm2717, %v2911, 0.0
    %v2996 = vsel %vm2718, %v2912, 0.0
    %v2997 = vsel %vm2717, %v2913, 0.0
    %v2998 = vsel %vm2718, %v2914, 0.0
    %v2999 = vsel %vm2717, %v2915, 0.0
    %v3000 = vsel %vm2718, %v2916, 0.0
    %v3001 = vsel %vm2717, %v2917, 0.0
    %v3002 = vsel %vm2718, %v2918, 0.0
    %v3003 = vsel %vm2717, %v2919, 0.0
    %v3004 = vsel %vm2718, %v2920, 0.0
    %v3005 = vsel %vm2717, %v2921, 0.0
    %v3006 = vsel %vm2718, %v2922, 0.0
    %v3007 = vsel %vm2717, %v2923, 0.0
    %v3008 = vsel %vm2718, %v2924, 0.0
    %v3009 = vsel %vm2717, %v2925, 0.0
    %v3010 = vsel %vm2718, %v2926, 0.0
    %v3011 = vsel %vm2717, %v2927, 0.0
    %v3012 = vsel %vm2718, %v2928, 0.0
    %v3013 = vsel %vm2717, %v2929, 0.0
    %v3014 = vsel %vm2718, %v2930, 0.0
    %v3015 = vsel %vm2717, %v2931, 0.0
    %v3016 = vsel %vm2718, %v2932, 0.0
    %v3017 = vsel %vm2717, %v2933, 0.0
    %v3018 = vsel %vm2718, %v2934, 0.0
    %v3019 = vsel %vm2717, %v2935, 0.0
    %v3020 = vsel %vm2718, %v2936, 0.0
    %v3021 = vsel %vm2717, %v2937, 0.0
    %v3022 = vsel %vm2718, %v2938, 0.0
    %v3023 = vsel %vm2717, %v2939, 0.0
    %v3024 = vsel %vm2718, %v2940, 0.0
    %v3025 = vsel %vm2717, %v2941, 0.0
    %v3026 = vsel %vm2718, %v2942, 0.0
    %v3027 = vsel %vm2717, %v2943, 0.0
    %v3028 = vsel %vm2718, %v2944, 0.0
    %v3029 = vsel %vm2717, %v2945, 0.0
    %v3030 = vsel %vm2718, %v2946, 0.0
    %v3031 = vsel %vm2717, %v2947, 0.0
    %v3032 = vsel %vm2718, %v2948, 0.0
    %v3033 = vsel %vm2717, %v2949, 0.0
    %v3034 = vsel %vm2718, %v2950, 0.0
    %v3035 = vsel %vm2717, %v2951, 0.0
    %v3036 = vsel %vm2718, %v2952, 0.0
    %v3037 = vsel %vm2717, %v2953, 0.0
    %v3038 = vsel %vm2718, %v2954, 0.0
    %v3039 = vsel %vm2717, %v2955, 0.0
    %v3040 = vsel %vm2718, %v2956, 0.0
    %v3041 = vsel %vm2717, %v2957, 0.0
    %v3042 = vsel %vm2718, %v2958, 0.0
    %v3043 = vsel %vm2717, %v2959, 0.0
    %v3044 = vsel %vm2718, %v2960, 0.0
    %v3045 = vsel %vm2717, %v2961, 0.0
    %v3046 = vsel %vm2718, %v2962, 0.0
    %v3047 = vsel %vm2717, %v2963, 0.0
    %v3048 = vsel %vm2718, %v2964, 0.0
    %v3049 = vsel %vm2717, %v2965, 0.0
    %v3050 = vsel %vm2718, %v2966, 0.0
    %v3051 = vsel %vm2717, %v2967, 0.0
    %v3052 = vsel %vm2718, %v2968, 0.0
    %v3053 = vsel %vm2717, %v2969, 0.0
    %v3054 = vsel %vm2718, %v2970, 0.0
    %v3055 = vld [vmem:[#allocation5] sm:$0xff]
    %v3056 = vld [vmem:[#allocation5 + $0x8] sm:$0xf]
    %v3057 = vld [vmem:[#allocation5 + $0xc] sm:$0xff]
    %v3058 = vld [vmem:[#allocation5 + $0x14] sm:$0xf]
    %v3059 = vld [vmem:[#allocation5 + $0x18] sm:$0xff]
    %v3060 = vld [vmem:[#allocation5 + $0x20] sm:$0xf]
    %v3061 = vld [vmem:[#allocation5 + $0x24] sm:$0xff]
    %v3062 = vld [vmem:[#allocation5 + $0x2c] sm:$0xf]
    %v3063 = vld [vmem:[#allocation5 + $0x30] sm:$0xff]
    %v3064 = vld [vmem:[#allocation5 + $0x38] sm:$0xf]
    %v3065 = vld [vmem:[#allocation5 + $0x3c] sm:$0xff]
    %v3066 = vld [vmem:[#allocation5 + $0x44] sm:$0xf]
    %v3067 = vld [vmem:[#allocation5 + $0x48] sm:$0xff]
    %v3068 = vld [vmem:[#allocation5 + $0x50] sm:$0xf]
    %v3069 = vld [vmem:[#allocation5 + $0x54] sm:$0xff]
    %v3070 = vld [vmem:[#allocation5 + $0x5c] sm:$0xf]
    %v3071 = vld [vmem:[#allocation5 + $0x60] sm:$0xff]
    %v3072 = vld [vmem:[#allocation5 + $0x68] sm:$0xf]
    %v3073 = vld [vmem:[#allocation5 + $0x6c] sm:$0xff]
    %v3074 = vld [vmem:[#allocation5 + $0x74] sm:$0xf]
    %v3075 = vld [vmem:[#allocation5 + $0x78] sm:$0xff]
    %v3076 = vld [vmem:[#allocation5 + $0x80] sm:$0xf]
    %v3077 = vld [vmem:[#allocation5 + $0x84] sm:$0xff]
    %v3078 = vld [vmem:[#allocation5 + $0x8c] sm:$0xf]
    %v3079 = vld [vmem:[#allocation5 + $0x90] sm:$0xff]
    %v3080 = vld [vmem:[#allocation5 + $0x98] sm:$0xf]
    %v3081 = vld [vmem:[#allocation5 + $0x9c] sm:$0xff]
    %v3082 = vld [vmem:[#allocation5 + $0xa4] sm:$0xf]
    %v3083 = vld [vmem:[#allocation5 + $0xa8] sm:$0xff]
    %v3084 = vld [vmem:[#allocation5 + $0xb0] sm:$0xf]
    %v3085 = vld [vmem:[#allocation5 + $0xb4] sm:$0xff]
    %v3086 = vld [vmem:[#allocation5 + $0xbc] sm:$0xf]
    %v3087 = vld [vmem:[#allocation5 + $0xc0] sm:$0xff]
    %v3088 = vld [vmem:[#allocation5 + $0xc8] sm:$0xf]
    %v3089 = vld [vmem:[#allocation5 + $0xcc] sm:$0xff]
    %v3090 = vld [vmem:[#allocation5 + $0xd4] sm:$0xf]
    %v3091 = vld [vmem:[#allocation5 + $0xd8] sm:$0xff]
    %v3092 = vld [vmem:[#allocation5 + $0xe0] sm:$0xf]
    %v3093 = vld [vmem:[#allocation5 + $0xe4] sm:$0xff]
    %v3094 = vld [vmem:[#allocation5 + $0xec] sm:$0xf]
    %v3095 = vld [vmem:[#allocation5 + $0xf0] sm:$0xff]
    %v3096 = vld [vmem:[#allocation5 + $0xf8] sm:$0xf]
    %v3097 = vld [vmem:[#allocation5 + $0xfc] sm:$0xff]
    %v3098 = vld [vmem:[#allocation5 + $0x104] sm:$0xf]
    %v3099 = vld [vmem:[#allocation5 + $0x108] sm:$0xff]
    %v3100 = vld [vmem:[#allocation5 + $0x110] sm:$0xf]
    %v3101 = vld [vmem:[#allocation5 + $0x114] sm:$0xff]
    %v3102 = vld [vmem:[#allocation5 + $0x11c] sm:$0xf]
    %v3103 = vld [vmem:[#allocation5 + $0x120] sm:$0xff]
    %v3104 = vld [vmem:[#allocation5 + $0x128] sm:$0xf]
    %v3105 = vld [vmem:[#allocation5 + $0x12c] sm:$0xff]
    %v3106 = vld [vmem:[#allocation5 + $0x134] sm:$0xf]
    %v3107 = vld [vmem:[#allocation5 + $0x138] sm:$0xff]
    %v3108 = vld [vmem:[#allocation5 + $0x140] sm:$0xf]
    %v3109 = vld [vmem:[#allocation5 + $0x144] sm:$0xff]
    %v3110 = vld [vmem:[#allocation5 + $0x14c] sm:$0xf]
    %v3111 = vld [vmem:[#allocation5 + $0x150] sm:$0xff]
    %v3112 = vld [vmem:[#allocation5 + $0x158] sm:$0xf]
    %v3113 = vld [vmem:[#allocation5 + $0x15c] sm:$0xff]
    %v3114 = vld [vmem:[#allocation5 + $0x164] sm:$0xf]
    %v3115 = vld [vmem:[#allocation5 + $0x168] sm:$0xff]
    %v3116 = vld [vmem:[#allocation5 + $0x170] sm:$0xf]
    %v3117 = vld [vmem:[#allocation5 + $0x174] sm:$0xff]
    %v3118 = vld [vmem:[#allocation5 + $0x17c] sm:$0xf]
    %v3119 = vld [vmem:[#allocation5 + $0x180] sm:$0xff]
    %v3120 = vld [vmem:[#allocation5 + $0x188] sm:$0xf]
    %v3121 = vld [vmem:[#allocation5 + $0x18c] sm:$0xff]
    %v3122 = vld [vmem:[#allocation5 + $0x194] sm:$0xf]
    %v3123 = vld [vmem:[#allocation5 + $0x198] sm:$0xff]
    %v3124 = vld [vmem:[#allocation5 + $0x1a0] sm:$0xf]
    %v3125 = vld [vmem:[#allocation5 + $0x1a4] sm:$0xff]
    %v3126 = vld [vmem:[#allocation5 + $0x1ac] sm:$0xf]
    %v3127 = vld [vmem:[#allocation5 + $0x1b0] sm:$0xff]
    %v3128 = vld [vmem:[#allocation5 + $0x1b8] sm:$0xf]
    %v3129 = vld [vmem:[#allocation5 + $0x1bc] sm:$0xff]
    %v3130 = vld [vmem:[#allocation5 + $0x1c4] sm:$0xf]
    %v3131 = vld [vmem:[#allocation5 + $0x1c8] sm:$0xff]
    %v3132 = vld [vmem:[#allocation5 + $0x1d0] sm:$0xf]
    %v3133 = vld [vmem:[#allocation5 + $0x1d4] sm:$0xff]
    %v3134 = vld [vmem:[#allocation5 + $0x1dc] sm:$0xf]
    %v3135 = vld [vmem:[#allocation5 + $0x1e0] sm:$0xff]
    %v3136 = vld [vmem:[#allocation5 + $0x1e8] sm:$0xf]
    %v3137 = vld [vmem:[#allocation5 + $0x1ec] sm:$0xff]
    %v3138 = vld [vmem:[#allocation5 + $0x1f4] sm:$0xf]
    %v3139 = vpack.c.bf16 %v2973, %v2971
    %v3140 = vpack.c.bf16 %v2974, %v2972
    %v3141 = vpack.c.bf16 %v2977, %v2975
    %v3142 = vpack.c.bf16 %v2978, %v2976
    %v3143 = vpack.c.bf16 %v2981, %v2979
    %v3144 = vpack.c.bf16 %v2982, %v2980
    %v3145 = vpack.c.bf16 %v2985, %v2983
    %v3146 = vpack.c.bf16 %v2986, %v2984
    %v3147 = vpack.c.bf16 %v2989, %v2987
    %v3148 = vpack.c.bf16 %v2990, %v2988
    %v3149 = vpack.c.bf16 %v2993, %v2991
    %v3150 = vpack.c.bf16 %v2994, %v2992
    %v3151 = vpack.c.bf16 %v2997, %v2995
    %v3152 = vpack.c.bf16 %v2998, %v2996
    %v3153 = vpack.c.bf16 %v3001, %v2999
    %v3154 = vpack.c.bf16 %v3002, %v3000
    %v3155 = vpack.c.bf16 %v3005, %v3003
    %v3156 = vpack.c.bf16 %v3006, %v3004
    %v3157 = vpack.c.bf16 %v3009, %v3007
    %v3158 = vpack.c.bf16 %v3010, %v3008
    %v3159 = vpack.c.bf16 %v3013, %v3011
    %v3160 = vpack.c.bf16 %v3014, %v3012
    %v3161 = vpack.c.bf16 %v3017, %v3015
    %v3162 = vpack.c.bf16 %v3018, %v3016
    %v3163 = vpack.c.bf16 %v3021, %v3019
    %v3164 = vpack.c.bf16 %v3022, %v3020
    %v3165 = vpack.c.bf16 %v3025, %v3023
    %v3166 = vpack.c.bf16 %v3026, %v3024
    %v3167 = vpack.c.bf16 %v3029, %v3027
    %v3168 = vpack.c.bf16 %v3030, %v3028
    %v3169 = vpack.c.bf16 %v3033, %v3031
    %v3170 = vpack.c.bf16 %v3034, %v3032
    %v3171 = vpack.c.bf16 %v3037, %v3035
    %v3172 = vpack.c.bf16 %v3038, %v3036
    %v3173 = vpack.c.bf16 %v3041, %v3039
    %v3174 = vpack.c.bf16 %v3042, %v3040
    %v3175 = vpack.c.bf16 %v3045, %v3043
    %v3176 = vpack.c.bf16 %v3046, %v3044
    %v3177 = vpack.c.bf16 %v3049, %v3047
    %v3178 = vpack.c.bf16 %v3050, %v3048
    %v3179 = vpack.c.bf16 %v3053, %v3051
    %v3180 = vpack.c.bf16 %v3054, %v3052
    %v3265 = vunpack.c.l.b16 %v3055
    %v3266 = vunpack.c.h.b16 %v3055
    %v3267 = vunpack.c.l.b16 %v3056
    %v3268 = vunpack.c.l.b16 %v3057
    %v3269 = vunpack.c.h.b16 %v3057
    %v3270 = vunpack.c.l.b16 %v3058
    %v3271 = vunpack.c.l.b16 %v3059
    %v3272 = vunpack.c.h.b16 %v3059
    %v3273 = vunpack.c.l.b16 %v3060
    %v3274 = vunpack.c.l.b16 %v3061
    %v3275 = vunpack.c.h.b16 %v3061
    %v3276 = vunpack.c.l.b16 %v3062
    %v3277 = vunpack.c.l.b16 %v3063
    %v3278 = vunpack.c.h.b16 %v3063
    %v3279 = vunpack.c.l.b16 %v3064
    %v3280 = vunpack.c.l.b16 %v3065
    %v3281 = vunpack.c.h.b16 %v3065
    %v3282 = vunpack.c.l.b16 %v3066
    %v3283 = vunpack.c.l.b16 %v3067
    %v3284 = vunpack.c.h.b16 %v3067
    %v3285 = vunpack.c.l.b16 %v3068
    %v3286 = vunpack.c.l.b16 %v3069
    %v3287 = vunpack.c.h.b16 %v3069
    %v3288 = vunpack.c.l.b16 %v3070
    %v3289 = vunpack.c.l.b16 %v3071
    %v3290 = vunpack.c.h.b16 %v3071
    %v3291 = vunpack.c.l.b16 %v3072
    %v3292 = vunpack.c.l.b16 %v3073
    %v3293 = vunpack.c.h.b16 %v3073
    %v3294 = vunpack.c.l.b16 %v3074
    %v3295 = vunpack.c.l.b16 %v3075
    %v3296 = vunpack.c.h.b16 %v3075
    %v3297 = vunpack.c.l.b16 %v3076
    %v3298 = vunpack.c.l.b16 %v3077
    %v3299 = vunpack.c.h.b16 %v3077
    %v3300 = vunpack.c.l.b16 %v3078
    %v3301 = vunpack.c.l.b16 %v3079
    %v3302 = vunpack.c.h.b16 %v3079
    %v3303 = vunpack.c.l.b16 %v3080
    %v3304 = vunpack.c.l.b16 %v3081
    %v3305 = vunpack.c.h.b16 %v3081
    %v3306 = vunpack.c.l.b16 %v3082
    %v3307 = vunpack.c.l.b16 %v3083
    %v3308 = vunpack.c.h.b16 %v3083
    %v3309 = vunpack.c.l.b16 %v3084
    %v3310 = vunpack.c.l.b16 %v3085
    %v3311 = vunpack.c.h.b16 %v3085
    %v3312 = vunpack.c.l.b16 %v3086
    %v3313 = vunpack.c.l.b16 %v3087
    %v3314 = vunpack.c.h.b16 %v3087
    %v3315 = vunpack.c.l.b16 %v3088
    %v3316 = vunpack.c.l.b16 %v3089
    %v3317 = vunpack.c.h.b16 %v3089
    %v3318 = vunpack.c.l.b16 %v3090
    %v3319 = vunpack.c.l.b16 %v3091
    %v3320 = vunpack.c.h.b16 %v3091
    %v3321 = vunpack.c.l.b16 %v3092
    %v3322 = vunpack.c.l.b16 %v3093
    %v3323 = vunpack.c.h.b16 %v3093
    %v3324 = vunpack.c.l.b16 %v3094
    %v3325 = vunpack.c.l.b16 %v3095
    %v3326 = vunpack.c.h.b16 %v3095
    %v3327 = vunpack.c.l.b16 %v3096
    %v3328 = vunpack.c.l.b16 %v3097
    %v3329 = vunpack.c.h.b16 %v3097
    %v3330 = vunpack.c.l.b16 %v3098
    %v3331 = vunpack.c.l.b16 %v3099
    %v3332 = vunpack.c.h.b16 %v3099
    %v3333 = vunpack.c.l.b16 %v3100
    %v3334 = vunpack.c.l.b16 %v3101
    %v3335 = vunpack.c.h.b16 %v3101
    %v3336 = vunpack.c.l.b16 %v3102
    %v3337 = vunpack.c.l.b16 %v3103
    %v3338 = vunpack.c.h.b16 %v3103
    %v3339 = vunpack.c.l.b16 %v3104
    %v3340 = vunpack.c.l.b16 %v3105
    %v3341 = vunpack.c.h.b16 %v3105
    %v3342 = vunpack.c.l.b16 %v3106
    %v3343 = vunpack.c.l.b16 %v3107
    %v3344 = vunpack.c.h.b16 %v3107
    %v3345 = vunpack.c.l.b16 %v3108
    %v3346 = vunpack.c.l.b16 %v3109
    %v3347 = vunpack.c.h.b16 %v3109
    %v3348 = vunpack.c.l.b16 %v3110
    %v3349 = vunpack.c.l.b16 %v3111
    %v3350 = vunpack.c.h.b16 %v3111
    %v3351 = vunpack.c.l.b16 %v3112
    %v3352 = vunpack.c.l.b16 %v3113
    %v3353 = vunpack.c.h.b16 %v3113
    %v3354 = vunpack.c.l.b16 %v3114
    %v3355 = vunpack.c.l.b16 %v3115
    %v3356 = vunpack.c.h.b16 %v3115
    %v3357 = vunpack.c.l.b16 %v3116
    %v3358 = vunpack.c.l.b16 %v3117
    %v3359 = vunpack.c.h.b16 %v3117
    %v3360 = vunpack.c.l.b16 %v3118
    %v3361 = vunpack.c.l.b16 %v3119
    %v3362 = vunpack.c.h.b16 %v3119
    %v3363 = vunpack.c.l.b16 %v3120
    %v3364 = vunpack.c.l.b16 %v3121
    %v3365 = vunpack.c.h.b16 %v3121
    %v3366 = vunpack.c.l.b16 %v3122
    %v3367 = vunpack.c.l.b16 %v3123
    %v3368 = vunpack.c.h.b16 %v3123
    %v3369 = vunpack.c.l.b16 %v3124
    %v3370 = vunpack.c.l.b16 %v3125
    %v3371 = vunpack.c.h.b16 %v3125
    %v3372 = vunpack.c.l.b16 %v3126
    %v3373 = vunpack.c.l.b16 %v3127
    %v3374 = vunpack.c.h.b16 %v3127
    %v3375 = vunpack.c.l.b16 %v3128
    %v3376 = vunpack.c.l.b16 %v3129
    %v3377 = vunpack.c.h.b16 %v3129
    %v3378 = vunpack.c.l.b16 %v3130
    %v3379 = vunpack.c.l.b16 %v3131
    %v3380 = vunpack.c.h.b16 %v3131
    %v3381 = vunpack.c.l.b16 %v3132
    %v3382 = vunpack.c.l.b16 %v3133
    %v3383 = vunpack.c.h.b16 %v3133
    %v3384 = vunpack.c.l.b16 %v3134
    %v3385 = vunpack.c.l.b16 %v3135
    %v3386 = vunpack.c.h.b16 %v3135
    %v3387 = vunpack.c.l.b16 %v3136
    %v3388 = vunpack.c.l.b16 %v3137
    %v3389 = vunpack.c.h.b16 %v3137
    %v3390 = vunpack.c.l.b16 %v3138
    %v3391 = vpack.c.b16 %v3268, %v3265
    %v3392 = vpack.c.b16 %v3269, %v3266
    %v3393 = vpack.c.b16 %v3270, %v3267
    %v3394 = vpack.c.b16 %v3274, %v3271
    %v3395 = vpack.c.b16 %v3275, %v3272
    %v3396 = vpack.c.b16 %v3276, %v3273
    %v3397 = vpack.c.b16 %v3280, %v3277
    %v3398 = vpack.c.b16 %v3281, %v3278
    %v3399 = vpack.c.b16 %v3282, %v3279
    %v3400 = vpack.c.b16 %v3286, %v3283
    %v3401 = vpack.c.b16 %v3287, %v3284
    %v3402 = vpack.c.b16 %v3288, %v3285
    %v3403 = vpack.c.b16 %v3292, %v3289
    %v3404 = vpack.c.b16 %v3293, %v3290
    %v3405 = vpack.c.b16 %v3294, %v3291
    %v3406 = vpack.c.b16 %v3298, %v3295
    %v3407 = vpack.c.b16 %v3299, %v3296
    %v3408 = vpack.c.b16 %v3300, %v3297
    %v3409 = vpack.c.b16 %v3304, %v3301
    %v3410 = vpack.c.b16 %v3305, %v3302
    %v3411 = vpack.c.b16 %v3306, %v3303
    %v3412 = vpack.c.b16 %v3310, %v3307
    %v3413 = vpack.c.b16 %v3311, %v3308
    %v3414 = vpack.c.b16 %v3312, %v3309
    %v3415 = vpack.c.b16 %v3316, %v3313
    %v3416 = vpack.c.b16 %v3317, %v3314
    %v3417 = vpack.c.b16 %v3318, %v3315
    %v3418 = vpack.c.b16 %v3322, %v3319
    %v3419 = vpack.c.b16 %v3323, %v3320
    %v3420 = vpack.c.b16 %v3324, %v3321
    %v3421 = vpack.c.b16 %v3328, %v3325
    %v3422 = vpack.c.b16 %v3329, %v3326
    %v3423 = vpack.c.b16 %v3330, %v3327
    %v3424 = vpack.c.b16 %v3334, %v3331
    %v3425 = vpack.c.b16 %v3335, %v3332
    %v3426 = vpack.c.b16 %v3336, %v3333
    %v3427 = vpack.c.b16 %v3340, %v3337
    %v3428 = vpack.c.b16 %v3341, %v3338
    %v3429 = vpack.c.b16 %v3342, %v3339
    %v3430 = vpack.c.b16 %v3346, %v3343
    %v3431 = vpack.c.b16 %v3347, %v3344
    %v3432 = vpack.c.b16 %v3348, %v3345
    %v3433 = vpack.c.b16 %v3352, %v3349
    %v3434 = vpack.c.b16 %v3353, %v3350
    %v3435 = vpack.c.b16 %v3354, %v3351
    %v3436 = vpack.c.b16 %v3358, %v3355
    %v3437 = vpack.c.b16 %v3359, %v3356
    %v3438 = vpack.c.b16 %v3360, %v3357
    %v3439 = vpack.c.b16 %v3364, %v3361
    %v3440 = vpack.c.b16 %v3365, %v3362
    %v3441 = vpack.c.b16 %v3366, %v3363
    %v3442 = vpack.c.b16 %v3370, %v3367
    %v3443 = vpack.c.b16 %v3371, %v3368
    %v3444 = vpack.c.b16 %v3372, %v3369
    %v3445 = vpack.c.b16 %v3376, %v3373
    %v3446 = vpack.c.b16 %v3377, %v3374
    %v3447 = vpack.c.b16 %v3378, %v3375
    %v3448 = vpack.c.b16 %v3382, %v3379
    %v3449 = vpack.c.b16 %v3383, %v3380
    %v3450 = vpack.c.b16 %v3384, %v3381
    %v3451 = vpack.c.b16 %v3388, %v3385
    %v3452 = vpack.c.b16 %v3389, %v3386
    %v3453 = vpack.c.b16 %v3390, %v3387
    %v3497 = vsel %vm736, %v3393, 0
    %v3500 = vsel %vm736, %v3396, 0
    %v3503 = vsel %vm736, %v3399, 0
    %v3506 = vsel %vm736, %v3402, 0
    %v3509 = vsel %vm736, %v3405, 0
    %v3512 = vsel %vm736, %v3408, 0
    %v3515 = vsel %vm736, %v3411, 0
    %v3518 = vsel %vm736, %v3414, 0
    %v3521 = vsel %vm736, %v3417, 0
    %v3524 = vsel %vm736, %v3420, 0
    %v3527 = vsel %vm736, %v3423, 0
    %v3530 = vsel %vm736, %v3426, 0
    %v3533 = vsel %vm736, %v3429, 0
    %v3536 = vsel %vm736, %v3432, 0
    %v3539 = vsel %vm736, %v3435, 0
    %v3542 = vsel %vm736, %v3438, 0
    %v3545 = vsel %vm736, %v3441, 0
    %v3548 = vsel %vm736, %v3444, 0
    %v3551 = vsel %vm736, %v3447, 0
    %v3554 = vsel %vm736, %v3450, 0
    %v3557 = vsel %vm736, %v3453, 0
    %3559 = vmatprep.subr.bf16.mxu0 %v3154
    %3560 = vmatpush1.bf16.msra.mxu0 %v3153
    %3561 = vmatprep.subr.bf16.mxu0 %v3152
    %3562 = vmatpush1.bf16.msra.mxu0 %v3151
    %3563 = vmatprep.subr.bf16.mxu0 %v3150
    %3564 = vmatpush1.bf16.msra.mxu0 %v3149
    %3565 = vmatprep.subr.bf16.mxu0 %v3148
    %3566 = vmatpush1.bf16.msra.mxu0 %v3147
    %3567 = vmatprep.subr.bf16.mxu0 %v3146
    %3568 = vmatpush1.bf16.msra.mxu0 %v3145
    %3569 = vmatprep.subr.bf16.mxu0 %v3144
    %3570 = vmatpush1.bf16.msra.mxu0 %v3143
    %3571 = vmatprep.subr.bf16.mxu0 %v3142
    %3572 = vmatpush1.bf16.msra.mxu0 %v3141
    %3573 = vmatprep.subr.bf16.mxu0 %v3140
    %3574 = vmatpush1.bf16.msra.mxu0 %v3139
    %3575 = vmatprep.subr.bf16.mxu0 %v3170
    %3576 = vmatpush2.bf16.msra.mxu0 %v3169
    %3577 = vmatprep.subr.bf16.mxu0 %v3168
    %3578 = vmatpush2.bf16.msra.mxu0 %v3167
    %3579 = vmatprep.subr.bf16.mxu0 %v3166
    %3580 = vmatpush2.bf16.msra.mxu0 %v3165
    %3581 = vmatprep.subr.bf16.mxu0 %v3164
    %3582 = vmatpush2.bf16.msra.mxu0 %v3163
    %3583 = vmatprep.subr.bf16.mxu0 %v3162
    %3584 = vmatpush2.bf16.msra.mxu0 %v3161
    %3585 = vmatprep.subr.bf16.mxu0 %v3160
    %3586 = vmatpush2.bf16.msra.mxu0 %v3159
    %3587 = vmatprep.subr.bf16.mxu0 %v3158
    %3588 = vmatpush2.bf16.msra.mxu0 %v3157
    %3589 = vmatprep.subr.bf16.mxu0 %v3156
    %3590 = vmatpush2.bf16.msra.mxu0 %v3155
    %3591 = vmatprep.mubr.bf16.mxu0 %v3392
    %3592 = vmatmul.mubr.bf16.gmra.mxu0 %v3391
    %v3593 = vpop.f32.mrf.mxu0
    %v3594 = vadd.f32 0.0, %v3593
    %v3595 = vpop.f32.mrf.mxu0
    %v3596 = vadd.f32 0.0, %v3595
    %v3597 = vpop.f32.mrf.mxu0
    %v3598 = vadd.f32 0.0, %v3597
    %v3599 = vpop.f32.mrf.mxu0
    %v3600 = vadd.f32 0.0, %v3599
    %3601 = vmatprep.mubr.bf16.mxu0 %v3395
    %3602 = vmatmul.mubr.bf16.gmra.mxu0 %v3394
    %v3603 = vpop.f32.mrf.mxu0
    %v3604 = vadd.f32 0.0, %v3603
    %v3605 = vpop.f32.mrf.mxu0
    %v3606 = vadd.f32 0.0, %v3605
    %v3607 = vpop.f32.mrf.mxu0
    %v3608 = vadd.f32 0.0, %v3607
    %v3609 = vpop.f32.mrf.mxu0
    %v3610 = vadd.f32 0.0, %v3609
    %3611 = vmatprep.mubr.bf16.mxu0 %v3398
    %3612 = vmatmul.mubr.bf16.gmra.mxu0 %v3397
    %v3613 = vpop.f32.mrf.mxu0
    %v3614 = vadd.f32 0.0, %v3613
    %v3615 = vpop.f32.mrf.mxu0
    %v3616 = vadd.f32 0.0, %v3615
    %v3617 = vpop.f32.mrf.mxu0
    %v3618 = vadd.f32 0.0, %v3617
    %v3619 = vpop.f32.mrf.mxu0
    %v3620 = vadd.f32 0.0, %v3619
    %3621 = vmatprep.mubr.bf16.mxu0 %v3401
    %3622 = vmatmul.mubr.bf16.gmra.mxu0 %v3400
    %v3623 = vpop.f32.mrf.mxu0
    %v3624 = vadd.f32 0.0, %v3623
    %v3625 = vpop.f32.mrf.mxu0
    %v3626 = vadd.f32 0.0, %v3625
    %v3627 = vpop.f32.mrf.mxu0
    %v3628 = vadd.f32 0.0, %v3627
    %v3629 = vpop.f32.mrf.mxu0
    %v3630 = vadd.f32 0.0, %v3629
    %3631 = vmatprep.mubr.bf16.mxu0 %v3404
    %3632 = vmatmul.mubr.bf16.gmra.mxu0 %v3403
    %v3633 = vpop.f32.mrf.mxu0
    %v3634 = vadd.f32 0.0, %v3633
    %v3635 = vpop.f32.mrf.mxu0
    %v3636 = vadd.f32 0.0, %v3635
    %v3637 = vpop.f32.mrf.mxu0
    %v3638 = vadd.f32 0.0, %v3637
    %v3639 = vpop.f32.mrf.mxu0
    %v3640 = vadd.f32 0.0, %v3639
    %3641 = vmatprep.mubr.bf16.mxu0 %v3407
    %3642 = vmatmul.mubr.bf16.gmra.mxu0 %v3406
    %v3643 = vpop.f32.mrf.mxu0
    %v3644 = vadd.f32 0.0, %v3643
    %v3645 = vpop.f32.mrf.mxu0
    %v3646 = vadd.f32 0.0, %v3645
    %v3647 = vpop.f32.mrf.mxu0
    %v3648 = vadd.f32 0.0, %v3647
    %v3649 = vpop.f32.mrf.mxu0
    %v3650 = vadd.f32 0.0, %v3649
    %3651 = vmatprep.mubr.bf16.mxu0 %v3410
    %3652 = vmatmul.mubr.bf16.gmra.mxu0 %v3409
    %v3653 = vpop.f32.mrf.mxu0
    %v3654 = vadd.f32 0.0, %v3653
    %v3655 = vpop.f32.mrf.mxu0
    %v3656 = vadd.f32 0.0, %v3655
    %v3657 = vpop.f32.mrf.mxu0
    %v3658 = vadd.f32 0.0, %v3657
    %v3659 = vpop.f32.mrf.mxu0
    %v3660 = vadd.f32 0.0, %v3659
    %3661 = vmatprep.mubr.bf16.mxu0 %v3413
    %3662 = vmatmul.mubr.bf16.gmra.mxu0 %v3412
    %v3663 = vpop.f32.mrf.mxu0
    %v3664 = vadd.f32 0.0, %v3663
    %v3665 = vpop.f32.mrf.mxu0
    %v3666 = vadd.f32 0.0, %v3665
    %v3667 = vpop.f32.mrf.mxu0
    %v3668 = vadd.f32 0.0, %v3667
    %v3669 = vpop.f32.mrf.mxu0
    %v3670 = vadd.f32 0.0, %v3669
    %3671 = vmatprep.mubr.bf16.mxu0 %v3416
    %3672 = vmatmul.mubr.bf16.gmra.mxu0 %v3415
    %v3673 = vpop.f32.mrf.mxu0
    %v3674 = vadd.f32 0.0, %v3673
    %v3675 = vpop.f32.mrf.mxu0
    %v3676 = vadd.f32 0.0, %v3675
    %v3677 = vpop.f32.mrf.mxu0
    %v3678 = vadd.f32 0.0, %v3677
    %v3679 = vpop.f32.mrf.mxu0
    %v3680 = vadd.f32 0.0, %v3679
    %3681 = vmatprep.mubr.bf16.mxu0 %v3419
    %3682 = vmatmul.mubr.bf16.gmra.mxu0 %v3418
    %v3683 = vpop.f32.mrf.mxu0
    %v3684 = vadd.f32 0.0, %v3683
    %v3685 = vpop.f32.mrf.mxu0
    %v3686 = vadd.f32 0.0, %v3685
    %v3687 = vpop.f32.mrf.mxu0
    %v3688 = vadd.f32 0.0, %v3687
    %v3689 = vpop.f32.mrf.mxu0
    %v3690 = vadd.f32 0.0, %v3689
    %3691 = vmatprep.mubr.bf16.mxu0 %v3422
    %3692 = vmatmul.mubr.bf16.gmra.mxu0 %v3421
    %v3693 = vpop.f32.mrf.mxu0
    %v3694 = vadd.f32 0.0, %v3693
    %v3695 = vpop.f32.mrf.mxu0
    %v3696 = vadd.f32 0.0, %v3695
    %v3697 = vpop.f32.mrf.mxu0
    %v3698 = vadd.f32 0.0, %v3697
    %v3699 = vpop.f32.mrf.mxu0
    %v3700 = vadd.f32 0.0, %v3699
    %3701 = vmatprep.mubr.bf16.mxu0 %v3425
    %3702 = vmatmul.mubr.bf16.gmra.mxu0 %v3424
    %v3703 = vpop.f32.mrf.mxu0
    %v3704 = vadd.f32 0.0, %v3703
    %v3705 = vpop.f32.mrf.mxu0
    %v3706 = vadd.f32 0.0, %v3705
    %v3707 = vpop.f32.mrf.mxu0
    %v3708 = vadd.f32 0.0, %v3707
    %v3709 = vpop.f32.mrf.mxu0
    %v3710 = vadd.f32 0.0, %v3709
    %3711 = vmatprep.mubr.bf16.mxu0 %v3428
    %3712 = vmatmul.mubr.bf16.gmra.mxu0 %v3427
    %v3713 = vpop.f32.mrf.mxu0
    %v3714 = vadd.f32 0.0, %v3713
    %v3715 = vpop.f32.mrf.mxu0
    %v3716 = vadd.f32 0.0, %v3715
    %v3717 = vpop.f32.mrf.mxu0
    %v3718 = vadd.f32 0.0, %v3717
    %v3719 = vpop.f32.mrf.mxu0
    %v3720 = vadd.f32 0.0, %v3719
    %3721 = vmatprep.mubr.bf16.mxu0 %v3431
    %3722 = vmatmul.mubr.bf16.gmra.mxu0 %v3430
    %v3723 = vpop.f32.mrf.mxu0
    %v3724 = vadd.f32 0.0, %v3723
    %v3725 = vpop.f32.mrf.mxu0
    %v3726 = vadd.f32 0.0, %v3725
    %v3727 = vpop.f32.mrf.mxu0
    %v3728 = vadd.f32 0.0, %v3727
    %v3729 = vpop.f32.mrf.mxu0
    %v3730 = vadd.f32 0.0, %v3729
    %3731 = vmatprep.mubr.bf16.mxu0 %v3434
    %3732 = vmatmul.mubr.bf16.gmra.mxu0 %v3433
    %v3733 = vpop.f32.mrf.mxu0
    %v3734 = vadd.f32 0.0, %v3733
    %v3735 = vpop.f32.mrf.mxu0
    %v3736 = vadd.f32 0.0, %v3735
    %v3737 = vpop.f32.mrf.mxu0
    %v3738 = vadd.f32 0.0, %v3737
    %v3739 = vpop.f32.mrf.mxu0
    %v3740 = vadd.f32 0.0, %v3739
    %3741 = vmatprep.mubr.bf16.mxu0 %v3437
    %3742 = vmatmul.mubr.bf16.gmra.mxu0 %v3436
    %v3743 = vpop.f32.mrf.mxu0
    %v3744 = vadd.f32 0.0, %v3743
    %v3745 = vpop.f32.mrf.mxu0
    %v3746 = vadd.f32 0.0, %v3745
    %v3747 = vpop.f32.mrf.mxu0
    %v3748 = vadd.f32 0.0, %v3747
    %v3749 = vpop.f32.mrf.mxu0
    %v3750 = vadd.f32 0.0, %v3749
    %3751 = vmatprep.mubr.bf16.mxu0 %v3440
    %3752 = vmatmul.mubr.bf16.gmra.mxu0 %v3439
    %v3753 = vpop.f32.mrf.mxu0
    %v3754 = vadd.f32 0.0, %v3753
    %v3755 = vpop.f32.mrf.mxu0
    %v3756 = vadd.f32 0.0, %v3755
    %v3757 = vpop.f32.mrf.mxu0
    %v3758 = vadd.f32 0.0, %v3757
    %v3759 = vpop.f32.mrf.mxu0
    %v3760 = vadd.f32 0.0, %v3759
    %3761 = vmatprep.mubr.bf16.mxu0 %v3443
    %3762 = vmatmul.mubr.bf16.gmra.mxu0 %v3442
    %v3763 = vpop.f32.mrf.mxu0
    %v3764 = vadd.f32 0.0, %v3763
    %v3765 = vpop.f32.mrf.mxu0
    %v3766 = vadd.f32 0.0, %v3765
    %v3767 = vpop.f32.mrf.mxu0
    %v3768 = vadd.f32 0.0, %v3767
    %v3769 = vpop.f32.mrf.mxu0
    %v3770 = vadd.f32 0.0, %v3769
    %3771 = vmatprep.mubr.bf16.mxu0 %v3446
    %3772 = vmatmul.mubr.bf16.gmra.mxu0 %v3445
    %v3773 = vpop.f32.mrf.mxu0
    %v3774 = vadd.f32 0.0, %v3773
    %v3775 = vpop.f32.mrf.mxu0
    %v3776 = vadd.f32 0.0, %v3775
    %v3777 = vpop.f32.mrf.mxu0
    %v3778 = vadd.f32 0.0, %v3777
    %v3779 = vpop.f32.mrf.mxu0
    %v3780 = vadd.f32 0.0, %v3779
    %3781 = vmatprep.mubr.bf16.mxu0 %v3449
    %3782 = vmatmul.mubr.bf16.gmra.mxu0 %v3448
    %v3783 = vpop.f32.mrf.mxu0
    %v3784 = vadd.f32 0.0, %v3783
    %v3785 = vpop.f32.mrf.mxu0
    %v3786 = vadd.f32 0.0, %v3785
    %v3787 = vpop.f32.mrf.mxu0
    %v3788 = vadd.f32 0.0, %v3787
    %v3789 = vpop.f32.mrf.mxu0
    %v3790 = vadd.f32 0.0, %v3789
    %3791 = vmatprep.mubr.bf16.mxu0 %v3452
    %3792 = vmatmul.mubr.bf16.gmra.mxu0 %v3451
    %v3793 = vpop.f32.mrf.mxu0
    %v3794 = vadd.f32 0.0, %v3793
    %v3795 = vpop.f32.mrf.mxu0
    %v3796 = vadd.f32 0.0, %v3795
    %v3797 = vpop.f32.mrf.mxu0
    %v3798 = vadd.f32 0.0, %v3797
    %v3799 = vpop.f32.mrf.mxu0
    %v3800 = vadd.f32 0.0, %v3799
    %3801 = vdwg.mxu0
    %3802 = vmatprep.subr.bf16.mxu0 0
    %3803 = vmatpush1.bf16.msra.mxu0 0
    %3804 = vmatprep.subr.bf16.mxu0 0
    %3805 = vmatpush1.bf16.msra.mxu0 0
    %3806 = vmatprep.subr.bf16.mxu0 0
    %3807 = vmatpush1.bf16.msra.mxu0 0
    %3808 = vmatprep.subr.bf16.mxu0 %v3180
    %3809 = vmatpush1.bf16.msra.mxu0 %v3179
    %3810 = vmatprep.subr.bf16.mxu0 %v3178
    %3811 = vmatpush1.bf16.msra.mxu0 %v3177
    %3812 = vmatprep.subr.bf16.mxu0 %v3176
    %3813 = vmatpush1.bf16.msra.mxu0 %v3175
    %3814 = vmatprep.subr.bf16.mxu0 %v3174
    %3815 = vmatpush1.bf16.msra.mxu0 %v3173
    %3816 = vmatprep.subr.bf16.mxu0 %v3172
    %3817 = vmatpush1.bf16.msra.mxu0 %v3171
    %3818 = vmatprep.subr.bf16.mxu0 0
    %3819 = vmatpush2.bf16.msra.mxu0 0
    %3820 = vmatprep.subr.bf16.mxu0 0
    %3821 = vmatpush2.bf16.msra.mxu0 0
    %3822 = vmatprep.subr.bf16.mxu0 0
    %3823 = vmatpush2.bf16.msra.mxu0 0
    %3824 = vmatprep.subr.bf16.mxu0 0
    %3825 = vmatpush2.bf16.msra.mxu0 0
    %3826 = vmatprep.subr.bf16.mxu0 0
    %3827 = vmatpush2.bf16.msra.mxu0 0
    %3828 = vmatprep.subr.bf16.mxu0 0
    %3829 = vmatpush2.bf16.msra.mxu0 0
    %3830 = vmatprep.subr.bf16.mxu0 0
    %3831 = vmatpush2.bf16.msra.mxu0 0
    %3832 = vmatprep.subr.bf16.mxu0 0
    %3833 = vmatpush2.bf16.msra.mxu0 0
    %3834 = vmatprep.mubr.bf16.mxu0 0
    %3835 = vmatmul.mubr.bf16.gmra.mxu0 %v3497
    %v3836 = vpop.f32.mrf.mxu0
    %v3837 = vadd.f32 %v3594, %v3836
    %v3838 = vpop.f32.mrf.mxu0
    %v3839 = vadd.f32 %v3596, %v3838
    %v3840 = vpop.f32.mrf.mxu0
    %v3841 = vadd.f32 %v3598, %v3840
    %v3842 = vpop.f32.mrf.mxu0
    %v3843 = vadd.f32 %v3600, %v3842
    %3844 = vmatprep.mubr.bf16.mxu0 0
    %3845 = vmatmul.mubr.bf16.gmra.mxu0 %v3500
    %v3846 = vpop.f32.mrf.mxu0
    %v3847 = vadd.f32 %v3604, %v3846
    %v3848 = vpop.f32.mrf.mxu0
    %v3849 = vadd.f32 %v3606, %v3848
    %v3850 = vpop.f32.mrf.mxu0
    %v3851 = vadd.f32 %v3608, %v3850
    %v3852 = vpop.f32.mrf.mxu0
    %v3853 = vadd.f32 %v3610, %v3852
    %3854 = vmatprep.mubr.bf16.mxu0 0
    %3855 = vmatmul.mubr.bf16.gmra.mxu0 %v3503
    %v3856 = vpop.f32.mrf.mxu0
    %v3857 = vadd.f32 %v3614, %v3856
    %v3858 = vpop.f32.mrf.mxu0
    %v3859 = vadd.f32 %v3616, %v3858
    %v3860 = vpop.f32.mrf.mxu0
    %v3861 = vadd.f32 %v3618, %v3860
    %v3862 = vpop.f32.mrf.mxu0
    %v3863 = vadd.f32 %v3620, %v3862
    %3864 = vmatprep.mubr.bf16.mxu0 0
    %3865 = vmatmul.mubr.bf16.gmra.mxu0 %v3506
    %v3866 = vpop.f32.mrf.mxu0
    %v3867 = vadd.f32 %v3624, %v3866
    %v3868 = vpop.f32.mrf.mxu0
    %v3869 = vadd.f32 %v3626, %v3868
    %v3870 = vpop.f32.mrf.mxu0
    %v3871 = vadd.f32 %v3628, %v3870
    %v3872 = vpop.f32.mrf.mxu0
    %v3873 = vadd.f32 %v3630, %v3872
    %3874 = vmatprep.mubr.bf16.mxu0 0
    %3875 = vmatmul.mubr.bf16.gmra.mxu0 %v3509
    %v3876 = vpop.f32.mrf.mxu0
    %v3877 = vadd.f32 %v3634, %v3876
    %v3878 = vpop.f32.mrf.mxu0
    %v3879 = vadd.f32 %v3636, %v3878
    %v3880 = vpop.f32.mrf.mxu0
    %v3881 = vadd.f32 %v3638, %v3880
    %v3882 = vpop.f32.mrf.mxu0
    %v3883 = vadd.f32 %v3640, %v3882
    %3884 = vmatprep.mubr.bf16.mxu0 0
    %3885 = vmatmul.mubr.bf16.gmra.mxu0 %v3512
    %v3886 = vpop.f32.mrf.mxu0
    %v3887 = vadd.f32 %v3644, %v3886
    %v3888 = vpop.f32.mrf.mxu0
    %v3889 = vadd.f32 %v3646, %v3888
    %v3890 = vpop.f32.mrf.mxu0
    %v3891 = vadd.f32 %v3648, %v3890
    %v3892 = vpop.f32.mrf.mxu0
    %v3893 = vadd.f32 %v3650, %v3892
    %3894 = vmatprep.mubr.bf16.mxu0 0
    %3895 = vmatmul.mubr.bf16.gmra.mxu0 %v3515
    %v3896 = vpop.f32.mrf.mxu0
    %v3897 = vadd.f32 %v3654, %v3896
    %v3898 = vpop.f32.mrf.mxu0
    %v3899 = vadd.f32 %v3656, %v3898
    %v3900 = vpop.f32.mrf.mxu0
    %v3901 = vadd.f32 %v3658, %v3900
    %v3902 = vpop.f32.mrf.mxu0
    %v3903 = vadd.f32 %v3660, %v3902
    %3904 = vmatprep.mubr.bf16.mxu0 0
    %3905 = vmatmul.mubr.bf16.gmra.mxu0 %v3518
    %v3906 = vpop.f32.mrf.mxu0
    %v3907 = vadd.f32 %v3664, %v3906
    %v3908 = vpop.f32.mrf.mxu0
    %v3909 = vadd.f32 %v3666, %v3908
    %v3910 = vpop.f32.mrf.mxu0
    %v3911 = vadd.f32 %v3668, %v3910
    %v3912 = vpop.f32.mrf.mxu0
    %v3913 = vadd.f32 %v3670, %v3912
    %3914 = vmatprep.mubr.bf16.mxu0 0
    %3915 = vmatmul.mubr.bf16.gmra.mxu0 %v3521
    %v3916 = vpop.f32.mrf.mxu0
    %v3917 = vadd.f32 %v3674, %v3916
    %v3918 = vpop.f32.mrf.mxu0
    %v3919 = vadd.f32 %v3676, %v3918
    %v3920 = vpop.f32.mrf.mxu0
    %v3921 = vadd.f32 %v3678, %v3920
    %v3922 = vpop.f32.mrf.mxu0
    %v3923 = vadd.f32 %v3680, %v3922
    %3924 = vmatprep.mubr.bf16.mxu0 0
    %3925 = vmatmul.mubr.bf16.gmra.mxu0 %v3524
    %v3926 = vpop.f32.mrf.mxu0
    %v3927 = vadd.f32 %v3684, %v3926
    %v3928 = vpop.f32.mrf.mxu0
    %v3929 = vadd.f32 %v3686, %v3928
    %v3930 = vpop.f32.mrf.mxu0
    %v3931 = vadd.f32 %v3688, %v3930
    %v3932 = vpop.f32.mrf.mxu0
    %v3933 = vadd.f32 %v3690, %v3932
    %3934 = vmatprep.mubr.bf16.mxu0 0
    %3935 = vmatmul.mubr.bf16.gmra.mxu0 %v3527
    %v3936 = vpop.f32.mrf.mxu0
    %v3937 = vadd.f32 %v3694, %v3936
    %v3938 = vpop.f32.mrf.mxu0
    %v3939 = vadd.f32 %v3696, %v3938
    %v3940 = vpop.f32.mrf.mxu0
    %v3941 = vadd.f32 %v3698, %v3940
    %v3942 = vpop.f32.mrf.mxu0
    %v3943 = vadd.f32 %v3700, %v3942
    %3944 = vmatprep.mubr.bf16.mxu0 0
    %3945 = vmatmul.mubr.bf16.gmra.mxu0 %v3530
    %v3946 = vpop.f32.mrf.mxu0
    %v3947 = vadd.f32 %v3704, %v3946
    %v3948 = vpop.f32.mrf.mxu0
    %v3949 = vadd.f32 %v3706, %v3948
    %v3950 = vpop.f32.mrf.mxu0
    %v3951 = vadd.f32 %v3708, %v3950
    %v3952 = vpop.f32.mrf.mxu0
    %v3953 = vadd.f32 %v3710, %v3952
    %3954 = vmatprep.mubr.bf16.mxu0 0
    %3955 = vmatmul.mubr.bf16.gmra.mxu0 %v3533
    %v3956 = vpop.f32.mrf.mxu0
    %v3957 = vadd.f32 %v3714, %v3956
    %v3958 = vpop.f32.mrf.mxu0
    %v3959 = vadd.f32 %v3716, %v3958
    %v3960 = vpop.f32.mrf.mxu0
    %v3961 = vadd.f32 %v3718, %v3960
    %v3962 = vpop.f32.mrf.mxu0
    %v3963 = vadd.f32 %v3720, %v3962
    %3964 = vmatprep.mubr.bf16.mxu0 0
    %3965 = vmatmul.mubr.bf16.gmra.mxu0 %v3536
    %v3966 = vpop.f32.mrf.mxu0
    %v3967 = vadd.f32 %v3724, %v3966
    %v3968 = vpop.f32.mrf.mxu0
    %v3969 = vadd.f32 %v3726, %v3968
    %v3970 = vpop.f32.mrf.mxu0
    %v3971 = vadd.f32 %v3728, %v3970
    %v3972 = vpop.f32.mrf.mxu0
    %v3973 = vadd.f32 %v3730, %v3972
    %3974 = vmatprep.mubr.bf16.mxu0 0
    %3975 = vmatmul.mubr.bf16.gmra.mxu0 %v3539
    %v3976 = vpop.f32.mrf.mxu0
    %v3977 = vadd.f32 %v3734, %v3976
    %v3978 = vpop.f32.mrf.mxu0
    %v3979 = vadd.f32 %v3736, %v3978
    %v3980 = vpop.f32.mrf.mxu0
    %v3981 = vadd.f32 %v3738, %v3980
    %v3982 = vpop.f32.mrf.mxu0
    %v3983 = vadd.f32 %v3740, %v3982
    %3984 = vmatprep.mubr.bf16.mxu0 0
    %3985 = vmatmul.mubr.bf16.gmra.mxu0 %v3542
    %v3986 = vpop.f32.mrf.mxu0
    %v3987 = vadd.f32 %v3744, %v3986
    %v3988 = vpop.f32.mrf.mxu0
    %v3989 = vadd.f32 %v3746, %v3988
    %v3990 = vpop.f32.mrf.mxu0
    %v3991 = vadd.f32 %v3748, %v3990
    %v3992 = vpop.f32.mrf.mxu0
    %v3993 = vadd.f32 %v3750, %v3992
    %3994 = vmatprep.mubr.bf16.mxu0 0
    %3995 = vmatmul.mubr.bf16.gmra.mxu0 %v3545
    %v3996 = vpop.f32.mrf.mxu0
    %v3997 = vadd.f32 %v3754, %v3996
    %v3998 = vpop.f32.mrf.mxu0
    %v3999 = vadd.f32 %v3756, %v3998
    %v4000 = vpop.f32.mrf.mxu0
    %v4001 = vadd.f32 %v3758, %v4000
    %v4002 = vpop.f32.mrf.mxu0
    %v4003 = vadd.f32 %v3760, %v4002
    %4004 = vmatprep.mubr.bf16.mxu0 0
    %4005 = vmatmul.mubr.bf16.gmra.mxu0 %v3548
    %v4006 = vpop.f32.mrf.mxu0
    %v4007 = vadd.f32 %v3764, %v4006
    %v4008 = vpop.f32.mrf.mxu0
    %v4009 = vadd.f32 %v3766, %v4008
    %v4010 = vpop.f32.mrf.mxu0
    %v4011 = vadd.f32 %v3768, %v4010
    %v4012 = vpop.f32.mrf.mxu0
    %v4013 = vadd.f32 %v3770, %v4012
    %4014 = vmatprep.mubr.bf16.mxu0 0
    %4015 = vmatmul.mubr.bf16.gmra.mxu0 %v3551
    %v4016 = vpop.f32.mrf.mxu0
    %v4017 = vadd.f32 %v3774, %v4016
    %v4018 = vpop.f32.mrf.mxu0
    %v4019 = vadd.f32 %v3776, %v4018
    %v4020 = vpop.f32.mrf.mxu0
    %v4021 = vadd.f32 %v3778, %v4020
    %v4022 = vpop.f32.mrf.mxu0
    %v4023 = vadd.f32 %v3780, %v4022
    %4024 = vmatprep.mubr.bf16.mxu0 0
    %4025 = vmatmul.mubr.bf16.gmra.mxu0 %v3554
    %v4026 = vpop.f32.mrf.mxu0
    %v4027 = vadd.f32 %v3784, %v4026
    %v4028 = vpop.f32.mrf.mxu0
    %v4029 = vadd.f32 %v3786, %v4028
    %v4030 = vpop.f32.mrf.mxu0
    %v4031 = vadd.f32 %v3788, %v4030
    %v4032 = vpop.f32.mrf.mxu0
    %v4033 = vadd.f32 %v3790, %v4032
    %4034 = vmatprep.mubr.bf16.mxu0 0
    %4035 = vmatmul.mubr.bf16.gmra.mxu0 %v3557
    %v4036 = vpop.f32.mrf.mxu0
    %v4037 = vadd.f32 %v3794, %v4036
    %v4038 = vpop.f32.mrf.mxu0
    %v4039 = vadd.f32 %v3796, %v4038
    %v4040 = vpop.f32.mrf.mxu0
    %v4041 = vadd.f32 %v3798, %v4040
    %v4042 = vpop.f32.mrf.mxu0
    %v4043 = vadd.f32 %v3800, %v4042
    %4044 = vdwg.mxu0
    %v4045 = vadd.f32 %v3837, %v3839
    %4046 = vadd.xlane.f32.xlu0 %v4045
    %v4047 = vpop.xlane.xlu0 %4046
    %v4048 = vadd.f32 %v3841, %v3843
    %4049 = vadd.xlane.f32.xlu0 %v4048
    %v4050 = vpop.xlane.xlu0 %4049
    %v4051 = vadd.f32 %v3847, %v3849
    %4052 = vadd.xlane.f32.xlu0 %v4051
    %v4053 = vpop.xlane.xlu0 %4052
    %v4054 = vadd.f32 %v3851, %v3853
    %4055 = vadd.xlane.f32.xlu0 %v4054
    %v4056 = vpop.xlane.xlu0 %4055
    %v4057 = vadd.f32 %v3857, %v3859
    %4058 = vadd.xlane.f32.xlu0 %v4057
    %v4059 = vpop.xlane.xlu0 %4058
    %v4060 = vadd.f32 %v3861, %v3863
    %4061 = vadd.xlane.f32.xlu0 %v4060
    %v4062 = vpop.xlane.xlu0 %4061
    %v4063 = vadd.f32 %v3867, %v3869
    %4064 = vadd.xlane.f32.xlu0 %v4063
    %v4065 = vpop.xlane.xlu0 %4064
    %v4066 = vadd.f32 %v3871, %v3873
    %4067 = vadd.xlane.f32.xlu0 %v4066
    %v4068 = vpop.xlane.xlu0 %4067
    %v4069 = vadd.f32 %v3877, %v3879
    %4070 = vadd.xlane.f32.xlu0 %v4069
    %v4071 = vpop.xlane.xlu0 %4070
    %v4072 = vadd.f32 %v3881, %v3883
    %4073 = vadd.xlane.f32.xlu0 %v4072
    %v4074 = vpop.xlane.xlu0 %4073
    %v4075 = vadd.f32 %v3887, %v3889
    %4076 = vadd.xlane.f32.xlu0 %v4075
    %v4077 = vpop.xlane.xlu0 %4076
    %v4078 = vadd.f32 %v3891, %v3893
    %4079 = vadd.xlane.f32.xlu0 %v4078
    %v4080 = vpop.xlane.xlu0 %4079
    %v4081 = vadd.f32 %v3897, %v3899
    %4082 = vadd.xlane.f32.xlu0 %v4081
    %v4083 = vpop.xlane.xlu0 %4082
    %v4084 = vadd.f32 %v3901, %v3903
    %4085 = vadd.xlane.f32.xlu0 %v4084
    %v4086 = vpop.xlane.xlu0 %4085
    %v4087 = vadd.f32 %v3907, %v3909
    %4088 = vadd.xlane.f32.xlu0 %v4087
    %v4089 = vpop.xlane.xlu0 %4088
    %v4090 = vadd.f32 %v3911, %v3913
    %4091 = vadd.xlane.f32.xlu0 %v4090
    %v4092 = vpop.xlane.xlu0 %4091
    %v4093 = vadd.f32 %v3917, %v3919
    %4094 = vadd.xlane.f32.xlu0 %v4093
    %v4095 = vpop.xlane.xlu0 %4094
    %v4096 = vadd.f32 %v3921, %v3923
    %4097 = vadd.xlane.f32.xlu0 %v4096
    %v4098 = vpop.xlane.xlu0 %4097
    %v4099 = vadd.f32 %v3927, %v3929
    %4100 = vadd.xlane.f32.xlu0 %v4099
    %v4101 = vpop.xlane.xlu0 %4100
    %v4102 = vadd.f32 %v3931, %v3933
    %4103 = vadd.xlane.f32.xlu0 %v4102
    %v4104 = vpop.xlane.xlu0 %4103
    %v4105 = vadd.f32 %v3937, %v3939
    %4106 = vadd.xlane.f32.xlu0 %v4105
    %v4107 = vpop.xlane.xlu0 %4106
    %v4108 = vadd.f32 %v3941, %v3943
    %4109 = vadd.xlane.f32.xlu0 %v4108
    %v4110 = vpop.xlane.xlu0 %4109
    %v4111 = vadd.f32 %v3947, %v3949
    %4112 = vadd.xlane.f32.xlu0 %v4111
    %v4113 = vpop.xlane.xlu0 %4112
    %v4114 = vadd.f32 %v3951, %v3953
    %4115 = vadd.xlane.f32.xlu0 %v4114
    %v4116 = vpop.xlane.xlu0 %4115
    %v4117 = vadd.f32 %v3957, %v3959
    %4118 = vadd.xlane.f32.xlu0 %v4117
    %v4119 = vpop.xlane.xlu0 %4118
    %v4120 = vadd.f32 %v3961, %v3963
    %4121 = vadd.xlane.f32.xlu0 %v4120
    %v4122 = vpop.xlane.xlu0 %4121
    %v4123 = vadd.f32 %v3967, %v3969
    %4124 = vadd.xlane.f32.xlu0 %v4123
    %v4125 = vpop.xlane.xlu0 %4124
    %v4126 = vadd.f32 %v3971, %v3973
    %4127 = vadd.xlane.f32.xlu0 %v4126
    %v4128 = vpop.xlane.xlu0 %4127
    %v4129 = vadd.f32 %v3977, %v3979
    %4130 = vadd.xlane.f32.xlu0 %v4129
    %v4131 = vpop.xlane.xlu0 %4130
    %v4132 = vadd.f32 %v3981, %v3983
    %4133 = vadd.xlane.f32.xlu0 %v4132
    %v4134 = vpop.xlane.xlu0 %4133
    %v4135 = vadd.f32 %v3987, %v3989
    %4136 = vadd.xlane.f32.xlu0 %v4135
    %v4137 = vpop.xlane.xlu0 %4136
    %v4138 = vadd.f32 %v3991, %v3993
    %4139 = vadd.xlane.f32.xlu0 %v4138
    %v4140 = vpop.xlane.xlu0 %4139
    %v4141 = vadd.f32 %v3997, %v3999
    %4142 = vadd.xlane.f32.xlu0 %v4141
    %v4143 = vpop.xlane.xlu0 %4142
    %v4144 = vadd.f32 %v4001, %v4003
    %4145 = vadd.xlane.f32.xlu0 %v4144
    %v4146 = vpop.xlane.xlu0 %4145
    %v4147 = vadd.f32 %v4007, %v4009
    %4148 = vadd.xlane.f32.xlu0 %v4147
    %v4149 = vpop.xlane.xlu0 %4148
    %v4150 = vadd.f32 %v4011, %v4013
    %4151 = vadd.xlane.f32.xlu0 %v4150
    %v4152 = vpop.xlane.xlu0 %4151
    %v4153 = vadd.f32 %v4017, %v4019
    %4154 = vadd.xlane.f32.xlu0 %v4153
    %v4155 = vpop.xlane.xlu0 %4154
    %v4156 = vadd.f32 %v4021, %v4023
    %4157 = vadd.xlane.f32.xlu0 %v4156
    %v4158 = vpop.xlane.xlu0 %4157
    %v4159 = vadd.f32 %v4027, %v4029
    %4160 = vadd.xlane.f32.xlu0 %v4159
    %v4161 = vpop.xlane.xlu0 %4160
    %v4162 = vadd.f32 %v4031, %v4033
    %4163 = vadd.xlane.f32.xlu0 %v4162
    %v4164 = vpop.xlane.xlu0 %4163
    %v4165 = vadd.f32 %v4037, %v4039
    %4166 = vadd.xlane.f32.xlu0 %v4165
    %v4167 = vpop.xlane.xlu0 %4166
    %v4168 = vadd.f32 %v4041, %v4043
    %4169 = vadd.xlane.f32.xlu0 %v4168
    %v4170 = vpop.xlane.xlu0 %4169
    %v4171 = vmul.f32 %v4047, 0.0051020407
    %v4172 = vmul.f32 %v4050, 0.0051020407
    %v4173 = vmul.f32 %v4053, 0.0051020407
    %v4174 = vmul.f32 %v4056, 0.0051020407
    %v4175 = vmul.f32 %v4059, 0.0051020407
    %v4176 = vmul.f32 %v4062, 0.0051020407
    %v4177 = vmul.f32 %v4065, 0.0051020407
    %v4178 = vmul.f32 %v4068, 0.0051020407
    %v4179 = vmul.f32 %v4071, 0.0051020407
    %v4180 = vmul.f32 %v4074, 0.0051020407
    %v4181 = vmul.f32 %v4077, 0.0051020407
    %v4182 = vmul.f32 %v4080, 0.0051020407
    %v4183 = vmul.f32 %v4083, 0.0051020407
    %v4184 = vmul.f32 %v4086, 0.0051020407
    %v4185 = vmul.f32 %v4089, 0.0051020407
    %v4186 = vmul.f32 %v4092, 0.0051020407
    %v4187 = vmul.f32 %v4095, 0.0051020407
    %v4188 = vmul.f32 %v4098, 0.0051020407
    %v4189 = vmul.f32 %v4101, 0.0051020407
    %v4190 = vmul.f32 %v4104, 0.0051020407
    %v4191 = vmul.f32 %v4107, 0.0051020407
    %v4192 = vmul.f32 %v4110, 0.0051020407
    %v4193 = vmul.f32 %v4113, 0.0051020407
    %v4194 = vmul.f32 %v4116, 0.0051020407
    %v4195 = vmul.f32 %v4119, 0.0051020407
    %v4196 = vmul.f32 %v4122, 0.0051020407
    %v4197 = vmul.f32 %v4125, 0.0051020407
    %v4198 = vmul.f32 %v4128, 0.0051020407
    %v4199 = vmul.f32 %v4131, 0.0051020407
    %v4200 = vmul.f32 %v4134, 0.0051020407
    %v4201 = vmul.f32 %v4137, 0.0051020407
    %v4202 = vmul.f32 %v4140, 0.0051020407
    %v4203 = vmul.f32 %v4143, 0.0051020407
    %v4204 = vmul.f32 %v4146, 0.0051020407
    %v4205 = vmul.f32 %v4149, 0.0051020407
    %v4206 = vmul.f32 %v4152, 0.0051020407
    %v4207 = vmul.f32 %v4155, 0.0051020407
    %v4208 = vmul.f32 %v4158, 0.0051020407
    %v4209 = vmul.f32 %v4161, 0.0051020407
    %v4210 = vmul.f32 %v4164, 0.0051020407
    %v4211 = vmul.f32 %v4167, 0.0051020407
    %v4212 = vmul.f32 %v4170, 0.0051020407
    %v4213 = vmul.f32 %v3837, %v3837
    %v4214 = vmul.f32 %v3839, %v3839
    %v4215 = vmul.f32 %v3841, %v3841
    %v4216 = vmul.f32 %v3843, %v3843
    %v4217 = vmul.f32 %v3847, %v3847
    %v4218 = vmul.f32 %v3849, %v3849
    %v4219 = vmul.f32 %v3851, %v3851
    %v4220 = vmul.f32 %v3853, %v3853
    %v4221 = vmul.f32 %v3857, %v3857
    %v4222 = vmul.f32 %v3859, %v3859
    %v4223 = vmul.f32 %v3861, %v3861
    %v4224 = vmul.f32 %v3863, %v3863
    %v4225 = vmul.f32 %v3867, %v3867
    %v4226 = vmul.f32 %v3869, %v3869
    %v4227 = vmul.f32 %v3871, %v3871
    %v4228 = vmul.f32 %v3873, %v3873
    %v4229 = vmul.f32 %v3877, %v3877
    %v4230 = vmul.f32 %v3879, %v3879
    %v4231 = vmul.f32 %v3881, %v3881
    %v4232 = vmul.f32 %v3883, %v3883
    %v4233 = vmul.f32 %v3887, %v3887
    %v4234 = vmul.f32 %v3889, %v3889
    %v4235 = vmul.f32 %v3891, %v3891
    %v4236 = vmul.f32 %v3893, %v3893
    %v4237 = vmul.f32 %v3897, %v3897
    %v4238 = vmul.f32 %v3899, %v3899
    %v4239 = vmul.f32 %v3901, %v3901
    %v4240 = vmul.f32 %v3903, %v3903
    %v4241 = vmul.f32 %v3907, %v3907
    %v4242 = vmul.f32 %v3909, %v3909
    %v4243 = vmul.f32 %v3911, %v3911
    %v4244 = vmul.f32 %v3913, %v3913
    %v4245 = vmul.f32 %v3917, %v3917
    %v4246 = vmul.f32 %v3919, %v3919
    %v4247 = vmul.f32 %v3921, %v3921
    %v4248 = vmul.f32 %v3923, %v3923
    %v4249 = vmul.f32 %v3927, %v3927
    %v4250 = vmul.f32 %v3929, %v3929
    %v4251 = vmul.f32 %v3931, %v3931
    %v4252 = vmul.f32 %v3933, %v3933
    %v4253 = vmul.f32 %v3937, %v3937
    %v4254 = vmul.f32 %v3939, %v3939
    %v4255 = vmul.f32 %v3941, %v3941
    %v4256 = vmul.f32 %v3943, %v3943
    %v4257 = vmul.f32 %v3947, %v3947
    %v4258 = vmul.f32 %v3949, %v3949
    %v4259 = vmul.f32 %v3951, %v3951
    %v4260 = vmul.f32 %v3953, %v3953
    %v4261 = vmul.f32 %v3957, %v3957
    %v4262 = vmul.f32 %v3959, %v3959
    %v4263 = vmul.f32 %v3961, %v3961
    %v4264 = vmul.f32 %v3963, %v3963
    %v4265 = vmul.f32 %v3967, %v3967
    %v4266 = vmul.f32 %v3969, %v3969
    %v4267 = vmul.f32 %v3971, %v3971
    %v4268 = vmul.f32 %v3973, %v3973
    %v4269 = vmul.f32 %v3977, %v3977
    %v4270 = vmul.f32 %v3979, %v3979
    %v4271 = vmul.f32 %v3981, %v3981
    %v4272 = vmul.f32 %v3983, %v3983
    %v4273 = vmul.f32 %v3987, %v3987
    %v4274 = vmul.f32 %v3989, %v3989
    %v4275 = vmul.f32 %v3991, %v3991
    %v4276 = vmul.f32 %v3993, %v3993
    %v4277 = vmul.f32 %v3997, %v3997
    %v4278 = vmul.f32 %v3999, %v3999
    %v4279 = vmul.f32 %v4001, %v4001
    %v4280 = vmul.f32 %v4003, %v4003
    %v4281 = vmul.f32 %v4007, %v4007
    %v4282 = vmul.f32 %v4009, %v4009
    %v4283 = vmul.f32 %v4011, %v4011
    %v4284 = vmul.f32 %v4013, %v4013
    %v4285 = vmul.f32 %v4017, %v4017
    %v4286 = vmul.f32 %v4019, %v4019
    %v4287 = vmul.f32 %v4021, %v4021
    %v4288 = vmul.f32 %v4023, %v4023
    %v4289 = vmul.f32 %v4027, %v4027
    %v4290 = vmul.f32 %v4029, %v4029
    %v4291 = vmul.f32 %v4031, %v4031
    %v4292 = vmul.f32 %v4033, %v4033
    %v4293 = vmul.f32 %v4037, %v4037
    %v4294 = vmul.f32 %v4039, %v4039
    %v4295 = vmul.f32 %v4041, %v4041
    %v4296 = vmul.f32 %v4043, %v4043
    %v4297 = vadd.f32 %v4213, %v4214
    %4298 = vadd.xlane.f32.xlu0 %v4297
    %v4299 = vpop.xlane.xlu0 %4298
    %v4300 = vadd.f32 %v4215, %v4216
    %4301 = vadd.xlane.f32.xlu0 %v4300
    %v4302 = vpop.xlane.xlu0 %4301
    %v4303 = vadd.f32 %v4217, %v4218
    %4304 = vadd.xlane.f32.xlu0 %v4303
    %v4305 = vpop.xlane.xlu0 %4304
    %v4306 = vadd.f32 %v4219, %v4220
    %4307 = vadd.xlane.f32.xlu0 %v4306
    %v4308 = vpop.xlane.xlu0 %4307
    %v4309 = vadd.f32 %v4221, %v4222
    %4310 = vadd.xlane.f32.xlu0 %v4309
    %v4311 = vpop.xlane.xlu0 %4310
    %v4312 = vadd.f32 %v4223, %v4224
    %4313 = vadd.xlane.f32.xlu0 %v4312
    %v4314 = vpop.xlane.xlu0 %4313
    %v4315 = vadd.f32 %v4225, %v4226
    %4316 = vadd.xlane.f32.xlu0 %v4315
    %v4317 = vpop.xlane.xlu0 %4316
    %v4318 = vadd.f32 %v4227, %v4228
    %4319 = vadd.xlane.f32.xlu0 %v4318
    %v4320 = vpop.xlane.xlu0 %4319
    %v4321 = vadd.f32 %v4229, %v4230
    %4322 = vadd.xlane.f32.xlu0 %v4321
    %v4323 = vpop.xlane.xlu0 %4322
    %v4324 = vadd.f32 %v4231, %v4232
    %4325 = vadd.xlane.f32.xlu0 %v4324
    %v4326 = vpop.xlane.xlu0 %4325
    %v4327 = vadd.f32 %v4233, %v4234
    %4328 = vadd.xlane.f32.xlu0 %v4327
    %v4329 = vpop.xlane.xlu0 %4328
    %v4330 = vadd.f32 %v4235, %v4236
    %4331 = vadd.xlane.f32.xlu0 %v4330
    %v4332 = vpop.xlane.xlu0 %4331
    %v4333 = vadd.f32 %v4237, %v4238
    %4334 = vadd.xlane.f32.xlu0 %v4333
    %v4335 = vpop.xlane.xlu0 %4334
    %v4336 = vadd.f32 %v4239, %v4240
    %4337 = vadd.xlane.f32.xlu0 %v4336
    %v4338 = vpop.xlane.xlu0 %4337
    %v4339 = vadd.f32 %v4241, %v4242
    %4340 = vadd.xlane.f32.xlu0 %v4339
    %v4341 = vpop.xlane.xlu0 %4340
    %v4342 = vadd.f32 %v4243, %v4244
    %4343 = vadd.xlane.f32.xlu0 %v4342
    %v4344 = vpop.xlane.xlu0 %4343
    %v4345 = vadd.f32 %v4245, %v4246
    %4346 = vadd.xlane.f32.xlu0 %v4345
    %v4347 = vpop.xlane.xlu0 %4346
    %v4348 = vadd.f32 %v4247, %v4248
    %4349 = vadd.xlane.f32.xlu0 %v4348
    %v4350 = vpop.xlane.xlu0 %4349
    %v4351 = vadd.f32 %v4249, %v4250
    %4352 = vadd.xlane.f32.xlu0 %v4351
    %v4353 = vpop.xlane.xlu0 %4352
    %v4354 = vadd.f32 %v4251, %v4252
    %4355 = vadd.xlane.f32.xlu0 %v4354
    %v4356 = vpop.xlane.xlu0 %4355
    %v4357 = vadd.f32 %v4253, %v4254
    %4358 = vadd.xlane.f32.xlu0 %v4357
    %v4359 = vpop.xlane.xlu0 %4358
    %v4360 = vadd.f32 %v4255, %v4256
    %4361 = vadd.xlane.f32.xlu0 %v4360
    %v4362 = vpop.xlane.xlu0 %4361
    %v4363 = vadd.f32 %v4257, %v4258
    %4364 = vadd.xlane.f32.xlu0 %v4363
    %v4365 = vpop.xlane.xlu0 %4364
    %v4366 = vadd.f32 %v4259, %v4260
    %4367 = vadd.xlane.f32.xlu0 %v4366
    %v4368 = vpop.xlane.xlu0 %4367
    %v4369 = vadd.f32 %v4261, %v4262
    %4370 = vadd.xlane.f32.xlu0 %v4369
    %v4371 = vpop.xlane.xlu0 %4370
    %v4372 = vadd.f32 %v4263, %v4264
    %4373 = vadd.xlane.f32.xlu0 %v4372
    %v4374 = vpop.xlane.xlu0 %4373
    %v4375 = vadd.f32 %v4265, %v4266
    %4376 = vadd.xlane.f32.xlu0 %v4375
    %v4377 = vpop.xlane.xlu0 %4376
    %v4378 = vadd.f32 %v4267, %v4268
    %4379 = vadd.xlane.f32.xlu0 %v4378
    %v4380 = vpop.xlane.xlu0 %4379
    %v4381 = vadd.f32 %v4269, %v4270
    %4382 = vadd.xlane.f32.xlu0 %v4381
    %v4383 = vpop.xlane.xlu0 %4382
    %v4384 = vadd.f32 %v4271, %v4272
    %4385 = vadd.xlane.f32.xlu0 %v4384
    %v4386 = vpop.xlane.xlu0 %4385
    %v4387 = vadd.f32 %v4273, %v4274
    %4388 = vadd.xlane.f32.xlu0 %v4387
    %v4389 = vpop.xlane.xlu0 %4388
    %v4390 = vadd.f32 %v4275, %v4276
    %4391 = vadd.xlane.f32.xlu0 %v4390
    %v4392 = vpop.xlane.xlu0 %4391
    %v4393 = vadd.f32 %v4277, %v4278
    %4394 = vadd.xlane.f32.xlu0 %v4393
    %v4395 = vpop.xlane.xlu0 %4394
    %v4396 = vadd.f32 %v4279, %v4280
    %4397 = vadd.xlane.f32.xlu0 %v4396
    %v4398 = vpop.xlane.xlu0 %4397
    %v4399 = vadd.f32 %v4281, %v4282
    %4400 = vadd.xlane.f32.xlu0 %v4399
    %v4401 = vpop.xlane.xlu0 %4400
    %v4402 = vadd.f32 %v4283, %v4284
    %4403 = vadd.xlane.f32.xlu0 %v4402
    %v4404 = vpop.xlane.xlu0 %4403
    %v4405 = vadd.f32 %v4285, %v4286
    %4406 = vadd.xlane.f32.xlu0 %v4405
    %v4407 = vpop.xlane.xlu0 %4406
    %v4408 = vadd.f32 %v4287, %v4288
    %4409 = vadd.xlane.f32.xlu0 %v4408
    %v4410 = vpop.xlane.xlu0 %4409
    %v4411 = vadd.f32 %v4289, %v4290
    %4412 = vadd.xlane.f32.xlu0 %v4411
    %v4413 = vpop.xlane.xlu0 %4412
    %v4414 = vadd.f32 %v4291, %v4292
    %4415 = vadd.xlane.f32.xlu0 %v4414
    %v4416 = vpop.xlane.xlu0 %4415
    %v4417 = vadd.f32 %v4293, %v4294
    %4418 = vadd.xlane.f32.xlu0 %v4417
    %v4419 = vpop.xlane.xlu0 %4418
    %v4420 = vadd.f32 %v4295, %v4296
    %4421 = vadd.xlane.f32.xlu0 %v4420
    %v4422 = vpop.xlane.xlu0 %4421
    %v4423 = vmul.f32 %v4299, 0.0051020407
    %v4424 = vmul.f32 %v4302, 0.0051020407
    %v4425 = vmul.f32 %v4305, 0.0051020407
    %v4426 = vmul.f32 %v4308, 0.0051020407
    %v4427 = vmul.f32 %v4311, 0.0051020407
    %v4428 = vmul.f32 %v4314, 0.0051020407
    %v4429 = vmul.f32 %v4317, 0.0051020407
    %v4430 = vmul.f32 %v4320, 0.0051020407
    %v4431 = vmul.f32 %v4323, 0.0051020407
    %v4432 = vmul.f32 %v4326, 0.0051020407
    %v4433 = vmul.f32 %v4329, 0.0051020407
    %v4434 = vmul.f32 %v4332, 0.0051020407
    %v4435 = vmul.f32 %v4335, 0.0051020407
    %v4436 = vmul.f32 %v4338, 0.0051020407
    %v4437 = vmul.f32 %v4341, 0.0051020407
    %v4438 = vmul.f32 %v4344, 0.0051020407
    %v4439 = vmul.f32 %v4347, 0.0051020407
    %v4440 = vmul.f32 %v4350, 0.0051020407
    %v4441 = vmul.f32 %v4353, 0.0051020407
    %v4442 = vmul.f32 %v4356, 0.0051020407
    %v4443 = vmul.f32 %v4359, 0.0051020407
    %v4444 = vmul.f32 %v4362, 0.0051020407
    %v4445 = vmul.f32 %v4365, 0.0051020407
    %v4446 = vmul.f32 %v4368, 0.0051020407
    %v4447 = vmul.f32 %v4371, 0.0051020407
    %v4448 = vmul.f32 %v4374, 0.0051020407
    %v4449 = vmul.f32 %v4377, 0.0051020407
    %v4450 = vmul.f32 %v4380, 0.0051020407
    %v4451 = vmul.f32 %v4383, 0.0051020407
    %v4452 = vmul.f32 %v4386, 0.0051020407
    %v4453 = vmul.f32 %v4389, 0.0051020407
    %v4454 = vmul.f32 %v4392, 0.0051020407
    %v4455 = vmul.f32 %v4395, 0.0051020407
    %v4456 = vmul.f32 %v4398, 0.0051020407
    %v4457 = vmul.f32 %v4401, 0.0051020407
    %v4458 = vmul.f32 %v4404, 0.0051020407
    %v4459 = vmul.f32 %v4407, 0.0051020407
    %v4460 = vmul.f32 %v4410, 0.0051020407
    %v4461 = vmul.f32 %v4413, 0.0051020407
    %v4462 = vmul.f32 %v4416, 0.0051020407
    %v4463 = vmul.f32 %v4419, 0.0051020407
    %v4464 = vmul.f32 %v4422, 0.0051020407
    %v4465 = vmul.f32 %v4171, %v4171
    %v4466 = vmul.f32 %v4172, %v4172
    %v4467 = vmul.f32 %v4173, %v4173
    %v4468 = vmul.f32 %v4174, %v4174
    %v4469 = vmul.f32 %v4175, %v4175
    %v4470 = vmul.f32 %v4176, %v4176
    %v4471 = vmul.f32 %v4177, %v4177
    %v4472 = vmul.f32 %v4178, %v4178
    %v4473 = vmul.f32 %v4179, %v4179
    %v4474 = vmul.f32 %v4180, %v4180
    %v4475 = vmul.f32 %v4181, %v4181
    %v4476 = vmul.f32 %v4182, %v4182
    %v4477 = vmul.f32 %v4183, %v4183
    %v4478 = vmul.f32 %v4184, %v4184
    %v4479 = vmul.f32 %v4185, %v4185
    %v4480 = vmul.f32 %v4186, %v4186
    %v4481 = vmul.f32 %v4187, %v4187
    %v4482 = vmul.f32 %v4188, %v4188
    %v4483 = vmul.f32 %v4189, %v4189
    %v4484 = vmul.f32 %v4190, %v4190
    %v4485 = vmul.f32 %v4191, %v4191
    %v4486 = vmul.f32 %v4192, %v4192
    %v4487 = vmul.f32 %v4193, %v4193
    %v4488 = vmul.f32 %v4194, %v4194
    %v4489 = vmul.f32 %v4195, %v4195
    %v4490 = vmul.f32 %v4196, %v4196
    %v4491 = vmul.f32 %v4197, %v4197
    %v4492 = vmul.f32 %v4198, %v4198
    %v4493 = vmul.f32 %v4199, %v4199
    %v4494 = vmul.f32 %v4200, %v4200
    %v4495 = vmul.f32 %v4201, %v4201
    %v4496 = vmul.f32 %v4202, %v4202
    %v4497 = vmul.f32 %v4203, %v4203
    %v4498 = vmul.f32 %v4204, %v4204
    %v4499 = vmul.f32 %v4205, %v4205
    %v4500 = vmul.f32 %v4206, %v4206
    %v4501 = vmul.f32 %v4207, %v4207
    %v4502 = vmul.f32 %v4208, %v4208
    %v4503 = vmul.f32 %v4209, %v4209
    %v4504 = vmul.f32 %v4210, %v4210
    %v4505 = vmul.f32 %v4211, %v4211
    %v4506 = vmul.f32 %v4212, %v4212
    %v4507 = vsub.f32 %v4423, %v4465
    %v4508 = vsub.f32 %v4424, %v4466
    %v4509 = vsub.f32 %v4425, %v4467
    %v4510 = vsub.f32 %v4426, %v4468
    %v4511 = vsub.f32 %v4427, %v4469
    %v4512 = vsub.f32 %v4428, %v4470
    %v4513 = vsub.f32 %v4429, %v4471
    %v4514 = vsub.f32 %v4430, %v4472
    %v4515 = vsub.f32 %v4431, %v4473
    %v4516 = vsub.f32 %v4432, %v4474
    %v4517 = vsub.f32 %v4433, %v4475
    %v4518 = vsub.f32 %v4434, %v4476
    %v4519 = vsub.f32 %v4435, %v4477
    %v4520 = vsub.f32 %v4436, %v4478
    %v4521 = vsub.f32 %v4437, %v4479
    %v4522 = vsub.f32 %v4438, %v4480
    %v4523 = vsub.f32 %v4439, %v4481
    %v4524 = vsub.f32 %v4440, %v4482
    %v4525 = vsub.f32 %v4441, %v4483
    %v4526 = vsub.f32 %v4442, %v4484
    %v4527 = vsub.f32 %v4443, %v4485
    %v4528 = vsub.f32 %v4444, %v4486
    %v4529 = vsub.f32 %v4445, %v4487
    %v4530 = vsub.f32 %v4446, %v4488
    %v4531 = vsub.f32 %v4447, %v4489
    %v4532 = vsub.f32 %v4448, %v4490
    %v4533 = vsub.f32 %v4449, %v4491
    %v4534 = vsub.f32 %v4450, %v4492
    %v4535 = vsub.f32 %v4451, %v4493
    %v4536 = vsub.f32 %v4452, %v4494
    %v4537 = vsub.f32 %v4453, %v4495
    %v4538 = vsub.f32 %v4454, %v4496
    %v4539 = vsub.f32 %v4455, %v4497
    %v4540 = vsub.f32 %v4456, %v4498
    %v4541 = vsub.f32 %v4457, %v4499
    %v4542 = vsub.f32 %v4458, %v4500
    %v4543 = vsub.f32 %v4459, %v4501
    %v4544 = vsub.f32 %v4460, %v4502
    %v4545 = vsub.f32 %v4461, %v4503
    %v4546 = vsub.f32 %v4462, %v4504
    %v4547 = vsub.f32 %v4463, %v4505
    %v4548 = vsub.f32 %v4464, %v4506
    %v4549 = vsub.f32 %v3837, %v4171
    %v4550 = vsub.f32 %v3839, %v4171
    %v4551 = vsub.f32 %v3841, %v4172
    %v4552 = vsub.f32 %v3843, %v4172
    %v4553 = vsub.f32 %v3847, %v4173
    %v4554 = vsub.f32 %v3849, %v4173
    %v4555 = vsub.f32 %v3851, %v4174
    %v4556 = vsub.f32 %v3853, %v4174
    %v4557 = vsub.f32 %v3857, %v4175
    %v4558 = vsub.f32 %v3859, %v4175
    %v4559 = vsub.f32 %v3861, %v4176
    %v4560 = vsub.f32 %v3863, %v4176
    %v4561 = vsub.f32 %v3867, %v4177
    %v4562 = vsub.f32 %v3869, %v4177
    %v4563 = vsub.f32 %v3871, %v4178
    %v4564 = vsub.f32 %v3873, %v4178
    %v4565 = vsub.f32 %v3877, %v4179
    %v4566 = vsub.f32 %v3879, %v4179
    %v4567 = vsub.f32 %v3881, %v4180
    %v4568 = vsub.f32 %v3883, %v4180
    %v4569 = vsub.f32 %v3887, %v4181
    %v4570 = vsub.f32 %v3889, %v4181
    %v4571 = vsub.f32 %v3891, %v4182
    %v4572 = vsub.f32 %v3893, %v4182
    %v4573 = vsub.f32 %v3897, %v4183
    %v4574 = vsub.f32 %v3899, %v4183
    %v4575 = vsub.f32 %v3901, %v4184
    %v4576 = vsub.f32 %v3903, %v4184
    %v4577 = vsub.f32 %v3907, %v4185
    %v4578 = vsub.f32 %v3909, %v4185
    %v4579 = vsub.f32 %v3911, %v4186
    %v4580 = vsub.f32 %v3913, %v4186
    %v4581 = vsub.f32 %v3917, %v4187
    %v4582 = vsub.f32 %v3919, %v4187
    %v4583 = vsub.f32 %v3921, %v4188
    %v4584 = vsub.f32 %v3923, %v4188
    %v4585 = vsub.f32 %v3927, %v4189
    %v4586 = vsub.f32 %v3929, %v4189
    %v4587 = vsub.f32 %v3931, %v4190
    %v4588 = vsub.f32 %v3933, %v4190
    %v4589 = vsub.f32 %v3937, %v4191
    %v4590 = vsub.f32 %v3939, %v4191
    %v4591 = vsub.f32 %v3941, %v4192
    %v4592 = vsub.f32 %v3943, %v4192
    %v4593 = vsub.f32 %v3947, %v4193
    %v4594 = vsub.f32 %v3949, %v4193
    %v4595 = vsub.f32 %v3951, %v4194
    %v4596 = vsub.f32 %v3953, %v4194
    %v4597 = vsub.f32 %v3957, %v4195
    %v4598 = vsub.f32 %v3959, %v4195
    %v4599 = vsub.f32 %v3961, %v4196
    %v4600 = vsub.f32 %v3963, %v4196
    %v4601 = vsub.f32 %v3967, %v4197
    %v4602 = vsub.f32 %v3969, %v4197
    %v4603 = vsub.f32 %v3971, %v4198
    %v4604 = vsub.f32 %v3973, %v4198
    %v4605 = vsub.f32 %v3977, %v4199
    %v4606 = vsub.f32 %v3979, %v4199
    %v4607 = vsub.f32 %v3981, %v4200
    %v4608 = vsub.f32 %v3983, %v4200
    %v4609 = vsub.f32 %v3987, %v4201
    %v4610 = vsub.f32 %v3989, %v4201
    %v4611 = vsub.f32 %v3991, %v4202
    %v4612 = vsub.f32 %v3993, %v4202
    %v4613 = vsub.f32 %v3997, %v4203
    %v4614 = vsub.f32 %v3999, %v4203
    %v4615 = vsub.f32 %v4001, %v4204
    %v4616 = vsub.f32 %v4003, %v4204
    %v4617 = vsub.f32 %v4007, %v4205
    %v4618 = vsub.f32 %v4009, %v4205
    %v4619 = vsub.f32 %v4011, %v4206
    %v4620 = vsub.f32 %v4013, %v4206
    %v4621 = vsub.f32 %v4017, %v4207
    %v4622 = vsub.f32 %v4019, %v4207
    %v4623 = vsub.f32 %v4021, %v4208
    %v4624 = vsub.f32 %v4023, %v4208
    %v4625 = vsub.f32 %v4027, %v4209
    %v4626 = vsub.f32 %v4029, %v4209
    %v4627 = vsub.f32 %v4031, %v4210
    %v4628 = vsub.f32 %v4033, %v4210
    %v4629 = vsub.f32 %v4037, %v4211
    %v4630 = vsub.f32 %v4039, %v4211
    %v4631 = vsub.f32 %v4041, %v4212
    %v4632 = vsub.f32 %v4043, %v4212
    %v4633 = vadd.f32 %v4507, 1e-05
    %v4634 = vadd.f32 %v4508, 1e-05
    %v4635 = vadd.f32 %v4509, 1e-05
    %v4636 = vadd.f32 %v4510, 1e-05
    %v4637 = vadd.f32 %v4511, 1e-05
    %v4638 = vadd.f32 %v4512, 1e-05
    %v4639 = vadd.f32 %v4513, 1e-05
    %v4640 = vadd.f32 %v4514, 1e-05
    %v4641 = vadd.f32 %v4515, 1e-05
    %v4642 = vadd.f32 %v4516, 1e-05
    %v4643 = vadd.f32 %v4517, 1e-05
    %v4644 = vadd.f32 %v4518, 1e-05
    %v4645 = vadd.f32 %v4519, 1e-05
    %v4646 = vadd.f32 %v4520, 1e-05
    %v4647 = vadd.f32 %v4521, 1e-05
    %v4648 = vadd.f32 %v4522, 1e-05
    %v4649 = vadd.f32 %v4523, 1e-05
    %v4650 = vadd.f32 %v4524, 1e-05
    %v4651 = vadd.f32 %v4525, 1e-05
    %v4652 = vadd.f32 %v4526, 1e-05
    %v4653 = vadd.f32 %v4527, 1e-05
    %v4654 = vadd.f32 %v4528, 1e-05
    %v4655 = vadd.f32 %v4529, 1e-05
    %v4656 = vadd.f32 %v4530, 1e-05
    %v4657 = vadd.f32 %v4531, 1e-05
    %v4658 = vadd.f32 %v4532, 1e-05
    %v4659 = vadd.f32 %v4533, 1e-05
    %v4660 = vadd.f32 %v4534, 1e-05
    %v4661 = vadd.f32 %v4535, 1e-05
    %v4662 = vadd.f32 %v4536, 1e-05
    %v4663 = vadd.f32 %v4537, 1e-05
    %v4664 = vadd.f32 %v4538, 1e-05
    %v4665 = vadd.f32 %v4539, 1e-05
    %v4666 = vadd.f32 %v4540, 1e-05
    %v4667 = vadd.f32 %v4541, 1e-05
    %v4668 = vadd.f32 %v4542, 1e-05
    %v4669 = vadd.f32 %v4543, 1e-05
    %v4670 = vadd.f32 %v4544, 1e-05
    %v4671 = vadd.f32 %v4545, 1e-05
    %v4672 = vadd.f32 %v4546, 1e-05
    %v4673 = vadd.f32 %v4547, 1e-05
    %v4674 = vadd.f32 %v4548, 1e-05
    %v4675 = vrsqrt.pop %v4633
    %v4676 = vrsqrt.pop %v4634
    %v4677 = vrsqrt.pop %v4635
    %v4678 = vrsqrt.pop %v4636
    %v4679 = vrsqrt.pop %v4637
    %v4680 = vrsqrt.pop %v4638
    %v4681 = vrsqrt.pop %v4639
    %v4682 = vrsqrt.pop %v4640
    %v4683 = vrsqrt.pop %v4641
    %v4684 = vrsqrt.pop %v4642
    %v4685 = vrsqrt.pop %v4643
    %v4686 = vrsqrt.pop %v4644
    %v4687 = vrsqrt.pop %v4645
    %v4688 = vrsqrt.pop %v4646
    %v4689 = vrsqrt.pop %v4647
    %v4690 = vrsqrt.pop %v4648
    %v4691 = vrsqrt.pop %v4649
    %v4692 = vrsqrt.pop %v4650
    %v4693 = vrsqrt.pop %v4651
    %v4694 = vrsqrt.pop %v4652
    %v4695 = vrsqrt.pop %v4653
    %v4696 = vrsqrt.pop %v4654
    %v4697 = vrsqrt.pop %v4655
    %v4698 = vrsqrt.pop %v4656
    %v4699 = vrsqrt.pop %v4657
    %v4700 = vrsqrt.pop %v4658
    %v4701 = vrsqrt.pop %v4659
    %v4702 = vrsqrt.pop %v4660
    %v4703 = vrsqrt.pop %v4661
    %v4704 = vrsqrt.pop %v4662
    %v4705 = vrsqrt.pop %v4663
    %v4706 = vrsqrt.pop %v4664
    %v4707 = vrsqrt.pop %v4665
    %v4708 = vrsqrt.pop %v4666
    %v4709 = vrsqrt.pop %v4667
    %v4710 = vrsqrt.pop %v4668
    %v4711 = vrsqrt.pop %v4669
    %v4712 = vrsqrt.pop %v4670
    %v4713 = vrsqrt.pop %v4671
    %v4714 = vrsqrt.pop %v4672
    %v4715 = vrsqrt.pop %v4673
    %v4716 = vrsqrt.pop %v4674
    %v4717 = vmul.f32 %v4549, %v4675
    %v4718 = vmul.f32 %v4550, %v4675
    %v4719 = vmul.f32 %v4551, %v4676
    %v4720 = vmul.f32 %v4552, %v4676
    %v4721 = vmul.f32 %v4553, %v4677
    %v4722 = vmul.f32 %v4554, %v4677
    %v4723 = vmul.f32 %v4555, %v4678
    %v4724 = vmul.f32 %v4556, %v4678
    %v4725 = vmul.f32 %v4557, %v4679
    %v4726 = vmul.f32 %v4558, %v4679
    %v4727 = vmul.f32 %v4559, %v4680
    %v4728 = vmul.f32 %v4560, %v4680
    %v4729 = vmul.f32 %v4561, %v4681
    %v4730 = vmul.f32 %v4562, %v4681
    %v4731 = vmul.f32 %v4563, %v4682
    %v4732 = vmul.f32 %v4564, %v4682
    %v4733 = vmul.f32 %v4565, %v4683
    %v4734 = vmul.f32 %v4566, %v4683
    %v4735 = vmul.f32 %v4567, %v4684
    %v4736 = vmul.f32 %v4568, %v4684
    %v4737 = vmul.f32 %v4569, %v4685
    %v4738 = vmul.f32 %v4570, %v4685
    %v4739 = vmul.f32 %v4571, %v4686
    %v4740 = vmul.f32 %v4572, %v4686
    %v4741 = vmul.f32 %v4573, %v4687
    %v4742 = vmul.f32 %v4574, %v4687
    %v4743 = vmul.f32 %v4575, %v4688
    %v4744 = vmul.f32 %v4576, %v4688
    %v4745 = vmul.f32 %v4577, %v4689
    %v4746 = vmul.f32 %v4578, %v4689
    %v4747 = vmul.f32 %v4579, %v4690
    %v4748 = vmul.f32 %v4580, %v4690
    %v4749 = vmul.f32 %v4581, %v4691
    %v4750 = vmul.f32 %v4582, %v4691
    %v4751 = vmul.f32 %v4583, %v4692
    %v4752 = vmul.f32 %v4584, %v4692
    %v4753 = vmul.f32 %v4585, %v4693
    %v4754 = vmul.f32 %v4586, %v4693
    %v4755 = vmul.f32 %v4587, %v4694
    %v4756 = vmul.f32 %v4588, %v4694
    %v4757 = vmul.f32 %v4589, %v4695
    %v4758 = vmul.f32 %v4590, %v4695
    %v4759 = vmul.f32 %v4591, %v4696
    %v4760 = vmul.f32 %v4592, %v4696
    %v4761 = vmul.f32 %v4593, %v4697
    %v4762 = vmul.f32 %v4594, %v4697
    %v4763 = vmul.f32 %v4595, %v4698
    %v4764 = vmul.f32 %v4596, %v4698
    %v4765 = vmul.f32 %v4597, %v4699
    %v4766 = vmul.f32 %v4598, %v4699
    %v4767 = vmul.f32 %v4599, %v4700
    %v4768 = vmul.f32 %v4600, %v4700
    %v4769 = vmul.f32 %v4601, %v4701
    %v4770 = vmul.f32 %v4602, %v4701
    %v4771 = vmul.f32 %v4603, %v4702
    %v4772 = vmul.f32 %v4604, %v4702
    %v4773 = vmul.f32 %v4605, %v4703
    %v4774 = vmul.f32 %v4606, %v4703
    %v4775 = vmul.f32 %v4607, %v4704
    %v4776 = vmul.f32 %v4608, %v4704
    %v4777 = vmul.f32 %v4609, %v4705
    %v4778 = vmul.f32 %v4610, %v4705
    %v4779 = vmul.f32 %v4611, %v4706
    %v4780 = vmul.f32 %v4612, %v4706
    %v4781 = vmul.f32 %v4613, %v4707
    %v4782 = vmul.f32 %v4614, %v4707
    %v4783 = vmul.f32 %v4615, %v4708
    %v4784 = vmul.f32 %v4616, %v4708
    %v4785 = vmul.f32 %v4617, %v4709
    %v4786 = vmul.f32 %v4618, %v4709
    %v4787 = vmul.f32 %v4619, %v4710
    %v4788 = vmul.f32 %v4620, %v4710
    %v4789 = vmul.f32 %v4621, %v4711
    %v4790 = vmul.f32 %v4622, %v4711
    %v4791 = vmul.f32 %v4623, %v4712
    %v4792 = vmul.f32 %v4624, %v4712
    %v4793 = vmul.f32 %v4625, %v4713
    %v4794 = vmul.f32 %v4626, %v4713
    %v4795 = vmul.f32 %v4627, %v4714
    %v4796 = vmul.f32 %v4628, %v4714
    %v4797 = vmul.f32 %v4629, %v4715
    %v4798 = vmul.f32 %v4630, %v4715
    %v4799 = vmul.f32 %v4631, %v4716
    %v4800 = vmul.f32 %v4632, %v4716
    %v4801 = vld [vmem:[%s7] sm:$0xff]
    %v4802 = vld [vmem:[%s7 + $0x8] sm:$0xff]
    %v4803 = vld [vmem:[%s7 + $0x10] sm:$0xff]
    %v4804 = vld [vmem:[%s7 + $0x18] sm:$0xff]
    %v4805 = vld [vmem:[%s7 + $0x20] sm:$0xff]
    %v4806 = vld [vmem:[%s7 + $0x28] sm:$0xff]
    %v4807 = vld [vmem:[%s7 + $0x30] sm:$0xff]
    %v4808 = vld [vmem:[%s7 + $0x38] sm:$0xff]
    %v4809 = vld [vmem:[%s7 + $0x40] sm:$0xff]
    %v4810 = vld [vmem:[%s7 + $0x48] sm:$0xff]
    %v4811 = vld [vmem:[%s7 + $0x50] sm:$0xff]
    %v4812 = vld [vmem:[%s7 + $0x58] sm:$0xff]
    %v4813 = vld [vmem:[%s7 + $0x60] sm:$0xff]
    %v4814 = vld [vmem:[%s7 + $0x68] sm:$0xff]
    %v4815 = vld [vmem:[%s7 + $0x70] sm:$0xff]
    %v4816 = vld [vmem:[%s7 + $0x78] sm:$0xff]
    %v4817 = vld [vmem:[%s7 + $0x80] sm:$0xff]
    %v4818 = vld [vmem:[%s7 + $0x88] sm:$0xff]
    %v4819 = vld [vmem:[%s7 + $0x90] sm:$0xff]
    %v4820 = vld [vmem:[%s7 + $0x98] sm:$0xff]
    %v4821 = vld [vmem:[%s7 + $0xa0] sm:$0xff]
    %v4822 = vld [vmem:[%s7 + $0xa8] sm:$0xff]
    %v4823 = vld [vmem:[%s7 + $0xb0] sm:$0xff]
    %v4824 = vld [vmem:[%s7 + $0xb8] sm:$0xff]
    %v4825 = vld [vmem:[%s7 + $0xc0] sm:$0xff]
    %v4826 = vld [vmem:[%s7 + $0xc8] sm:$0xff]
    %v4827 = vld [vmem:[%s7 + $0xd0] sm:$0xff]
    %v4828 = vld [vmem:[%s7 + $0xd8] sm:$0xff]
    %v4829 = vld [vmem:[%s7 + $0xe0] sm:$0xff]
    %v4830 = vld [vmem:[%s7 + $0xe8] sm:$0xff]
    %v4831 = vld [vmem:[%s7 + $0xf0] sm:$0xff]
    %v4832 = vld [vmem:[%s7 + $0xf8] sm:$0xff]
    %v4833 = vld [vmem:[%s7 + $0x100] sm:$0xff]
    %v4834 = vld [vmem:[%s7 + $0x108] sm:$0xff]
    %v4835 = vld [vmem:[%s7 + $0x110] sm:$0xff]
    %v4836 = vld [vmem:[%s7 + $0x118] sm:$0xff]
    %v4837 = vld [vmem:[%s7 + $0x120] sm:$0xff]
    %v4838 = vld [vmem:[%s7 + $0x128] sm:$0xff]
    %v4839 = vld [vmem:[%s7 + $0x130] sm:$0xff]
    %v4840 = vld [vmem:[%s7 + $0x138] sm:$0xff]
    %v4841 = vld [vmem:[%s7 + $0x140] sm:$0xff]
    %v4842 = vld [vmem:[%s7 + $0x148] sm:$0xff]
    %4844 = vset.pattern.permute.xlu0 0
    %4845 = vperm.xlu0 %4844, %v4801
    %v4846 = vpop.permute.xlu0 %4845
    %4849 = vset.pattern.permute.xlu0 0
    %4850 = vperm.xlu0 %4849, %v4802
    %v4851 = vpop.permute.xlu0 %4850
    %4854 = vset.pattern.permute.xlu0 0
    %4855 = vperm.xlu0 %4854, %v4803
    %v4856 = vpop.permute.xlu0 %4855
    %4859 = vset.pattern.permute.xlu0 0
    %4860 = vperm.xlu0 %4859, %v4804
    %v4861 = vpop.permute.xlu0 %4860
    %4864 = vset.pattern.permute.xlu0 0
    %4865 = vperm.xlu0 %4864, %v4805
    %v4866 = vpop.permute.xlu0 %4865
    %4869 = vset.pattern.permute.xlu0 0
    %4870 = vperm.xlu0 %4869, %v4806
    %v4871 = vpop.permute.xlu0 %4870
    %4874 = vset.pattern.permute.xlu0 0
    %4875 = vperm.xlu0 %4874, %v4807
    %v4876 = vpop.permute.xlu0 %4875
    %4879 = vset.pattern.permute.xlu0 0
    %4880 = vperm.xlu0 %4879, %v4808
    %v4881 = vpop.permute.xlu0 %4880
    %4884 = vset.pattern.permute.xlu0 0
    %4885 = vperm.xlu0 %4884, %v4809
    %v4886 = vpop.permute.xlu0 %4885
    %4889 = vset.pattern.permute.xlu0 0
    %4890 = vperm.xlu0 %4889, %v4810
    %v4891 = vpop.permute.xlu0 %4890
    %4894 = vset.pattern.permute.xlu0 0
    %4895 = vperm.xlu0 %4894, %v4811
    %v4896 = vpop.permute.xlu0 %4895
    %4899 = vset.pattern.permute.xlu0 0
    %4900 = vperm.xlu0 %4899, %v4812
    %v4901 = vpop.permute.xlu0 %4900
    %4904 = vset.pattern.permute.xlu0 0
    %4905 = vperm.xlu0 %4904, %v4813
    %v4906 = vpop.permute.xlu0 %4905
    %4909 = vset.pattern.permute.xlu0 0
    %4910 = vperm.xlu0 %4909, %v4814
    %v4911 = vpop.permute.xlu0 %4910
    %4914 = vset.pattern.permute.xlu0 0
    %4915 = vperm.xlu0 %4914, %v4815
    %v4916 = vpop.permute.xlu0 %4915
    %4919 = vset.pattern.permute.xlu0 0
    %4920 = vperm.xlu0 %4919, %v4816
    %v4921 = vpop.permute.xlu0 %4920
    %4924 = vset.pattern.permute.xlu0 0
    %4925 = vperm.xlu0 %4924, %v4817
    %v4926 = vpop.permute.xlu0 %4925
    %4929 = vset.pattern.permute.xlu0 0
    %4930 = vperm.xlu0 %4929, %v4818
    %v4931 = vpop.permute.xlu0 %4930
    %4934 = vset.pattern.permute.xlu0 0
    %4935 = vperm.xlu0 %4934, %v4819
    %v4936 = vpop.permute.xlu0 %4935
    %4939 = vset.pattern.permute.xlu0 0
    %4940 = vperm.xlu0 %4939, %v4820
    %v4941 = vpop.permute.xlu0 %4940
    %4944 = vset.pattern.permute.xlu0 0
    %4945 = vperm.xlu0 %4944, %v4821
    %v4946 = vpop.permute.xlu0 %4945
    %4949 = vset.pattern.permute.xlu0 0
    %4950 = vperm.xlu0 %4949, %v4822
    %v4951 = vpop.permute.xlu0 %4950
    %4954 = vset.pattern.permute.xlu0 0
    %4955 = vperm.xlu0 %4954, %v4823
    %v4956 = vpop.permute.xlu0 %4955
    %4959 = vset.pattern.permute.xlu0 0
    %4960 = vperm.xlu0 %4959, %v4824
    %v4961 = vpop.permute.xlu0 %4960
    %4964 = vset.pattern.permute.xlu0 0
    %4965 = vperm.xlu0 %4964, %v4825
    %v4966 = vpop.permute.xlu0 %4965
    %4969 = vset.pattern.permute.xlu0 0
    %4970 = vperm.xlu0 %4969, %v4826
    %v4971 = vpop.permute.xlu0 %4970
    %4974 = vset.pattern.permute.xlu0 0
    %4975 = vperm.xlu0 %4974, %v4827
    %v4976 = vpop.permute.xlu0 %4975
    %4979 = vset.pattern.permute.xlu0 0
    %4980 = vperm.xlu0 %4979, %v4828
    %v4981 = vpop.permute.xlu0 %4980
    %4984 = vset.pattern.permute.xlu0 0
    %4985 = vperm.xlu0 %4984, %v4829
    %v4986 = vpop.permute.xlu0 %4985
    %4989 = vset.pattern.permute.xlu0 0
    %4990 = vperm.xlu0 %4989, %v4830
    %v4991 = vpop.permute.xlu0 %4990
    %4994 = vset.pattern.permute.xlu0 0
    %4995 = vperm.xlu0 %4994, %v4831
    %v4996 = vpop.permute.xlu0 %4995
    %4999 = vset.pattern.permute.xlu0 0
    %5000 = vperm.xlu0 %4999, %v4832
    %v5001 = vpop.permute.xlu0 %5000
    %5004 = vset.pattern.permute.xlu0 0
    %5005 = vperm.xlu0 %5004, %v4833
    %v5006 = vpop.permute.xlu0 %5005
    %5009 = vset.pattern.permute.xlu0 0
    %5010 = vperm.xlu0 %5009, %v4834
    %v5011 = vpop.permute.xlu0 %5010
    %5014 = vset.pattern.permute.xlu0 0
    %5015 = vperm.xlu0 %5014, %v4835
    %v5016 = vpop.permute.xlu0 %5015
    %5019 = vset.pattern.permute.xlu0 0
    %5020 = vperm.xlu0 %5019, %v4836
    %v5021 = vpop.permute.xlu0 %5020
    %5024 = vset.pattern.permute.xlu0 0
    %5025 = vperm.xlu0 %5024, %v4837
    %v5026 = vpop.permute.xlu0 %5025
    %5029 = vset.pattern.permute.xlu0 0
    %5030 = vperm.xlu0 %5029, %v4838
    %v5031 = vpop.permute.xlu0 %5030
    %5034 = vset.pattern.permute.xlu0 0
    %5035 = vperm.xlu0 %5034, %v4839
    %v5036 = vpop.permute.xlu0 %5035
    %5039 = vset.pattern.permute.xlu0 0
    %5040 = vperm.xlu0 %5039, %v4840
    %v5041 = vpop.permute.xlu0 %5040
    %5044 = vset.pattern.permute.xlu0 0
    %5045 = vperm.xlu0 %5044, %v4841
    %v5046 = vpop.permute.xlu0 %5045
    %5049 = vset.pattern.permute.xlu0 0
    %5050 = vperm.xlu0 %5049, %v4842
    %v5051 = vpop.permute.xlu0 %5050
    %v5053 = vmul.f32 %v4717, %v4846
    %v5054 = vmul.f32 %v4718, %v4846
    %v5055 = vmul.f32 %v4719, %v4851
    %v5056 = vmul.f32 %v4720, %v4851
    %v5057 = vmul.f32 %v4721, %v4856
    %v5058 = vmul.f32 %v4722, %v4856
    %v5059 = vmul.f32 %v4723, %v4861
    %v5060 = vmul.f32 %v4724, %v4861
    %v5061 = vmul.f32 %v4725, %v4866
    %v5062 = vmul.f32 %v4726, %v4866
    %v5063 = vmul.f32 %v4727, %v4871
    %v5064 = vmul.f32 %v4728, %v4871
    %v5065 = vmul.f32 %v4729, %v4876
    %v5066 = vmul.f32 %v4730, %v4876
    %v5067 = vmul.f32 %v4731, %v4881
    %v5068 = vmul.f32 %v4732, %v4881
    %v5069 = vmul.f32 %v4733, %v4886
    %v5070 = vmul.f32 %v4734, %v4886
    %v5071 = vmul.f32 %v4735, %v4891
    %v5072 = vmul.f32 %v4736, %v4891
    %v5073 = vmul.f32 %v4737, %v4896
    %v5074 = vmul.f32 %v4738, %v4896
    %v5075 = vmul.f32 %v4739, %v4901
    %v5076 = vmul.f32 %v4740, %v4901
    %v5077 = vmul.f32 %v4741, %v4906
    %v5078 = vmul.f32 %v4742, %v4906
    %v5079 = vmul.f32 %v4743, %v4911
    %v5080 = vmul.f32 %v4744, %v4911
    %v5081 = vmul.f32 %v4745, %v4916
    %v5082 = vmul.f32 %v4746, %v4916
    %v5083 = vmul.f32 %v4747, %v4921
    %v5084 = vmul.f32 %v4748, %v4921
    %v5085 = vmul.f32 %v4749, %v4926
    %v5086 = vmul.f32 %v4750, %v4926
    %v5087 = vmul.f32 %v4751, %v4931
    %v5088 = vmul.f32 %v4752, %v4931
    %v5089 = vmul.f32 %v4753, %v4936
    %v5090 = vmul.f32 %v4754, %v4936
    %v5091 = vmul.f32 %v4755, %v4941
    %v5092 = vmul.f32 %v4756, %v4941
    %v5093 = vmul.f32 %v4757, %v4946
    %v5094 = vmul.f32 %v4758, %v4946
    %v5095 = vmul.f32 %v4759, %v4951
    %v5096 = vmul.f32 %v4760, %v4951
    %v5097 = vmul.f32 %v4761, %v4956
    %v5098 = vmul.f32 %v4762, %v4956
    %v5099 = vmul.f32 %v4763, %v4961
    %v5100 = vmul.f32 %v4764, %v4961
    %v5101 = vmul.f32 %v4765, %v4966
    %v5102 = vmul.f32 %v4766, %v4966
    %v5103 = vmul.f32 %v4767, %v4971
    %v5104 = vmul.f32 %v4768, %v4971
    %v5105 = vmul.f32 %v4769, %v4976
    %v5106 = vmul.f32 %v4770, %v4976
    %v5107 = vmul.f32 %v4771, %v4981
    %v5108 = vmul.f32 %v4772, %v4981
    %v5109 = vmul.f32 %v4773, %v4986
    %v5110 = vmul.f32 %v4774, %v4986
    %v5111 = vmul.f32 %v4775, %v4991
    %v5112 = vmul.f32 %v4776, %v4991
    %v5113 = vmul.f32 %v4777, %v4996
    %v5114 = vmul.f32 %v4778, %v4996
    %v5115 = vmul.f32 %v4779, %v5001
    %v5116 = vmul.f32 %v4780, %v5001
    %v5117 = vmul.f32 %v4781, %v5006
    %v5118 = vmul.f32 %v4782, %v5006
    %v5119 = vmul.f32 %v4783, %v5011
    %v5120 = vmul.f32 %v4784, %v5011
    %v5121 = vmul.f32 %v4785, %v5016
    %v5122 = vmul.f32 %v4786, %v5016
    %v5123 = vmul.f32 %v4787, %v5021
    %v5124 = vmul.f32 %v4788, %v5021
    %v5125 = vmul.f32 %v4789, %v5026
    %v5126 = vmul.f32 %v4790, %v5026
    %v5127 = vmul.f32 %v4791, %v5031
    %v5128 = vmul.f32 %v4792, %v5031
    %v5129 = vmul.f32 %v4793, %v5036
    %v5130 = vmul.f32 %v4794, %v5036
    %v5131 = vmul.f32 %v4795, %v5041
    %v5132 = vmul.f32 %v4796, %v5041
    %v5133 = vmul.f32 %v4797, %v5046
    %v5134 = vmul.f32 %v4798, %v5046
    %v5135 = vmul.f32 %v4799, %v5051
    %v5136 = vmul.f32 %v4800, %v5051
    %v5137 = vld [vmem:[%s8] sm:$0xff]
    %v5138 = vld [vmem:[%s8 + $0x8] sm:$0xff]
    %v5139 = vld [vmem:[%s8 + $0x10] sm:$0xff]
    %v5140 = vld [vmem:[%s8 + $0x18] sm:$0xff]
    %v5141 = vld [vmem:[%s8 + $0x20] sm:$0xff]
    %v5142 = vld [vmem:[%s8 + $0x28] sm:$0xff]
    %v5143 = vld [vmem:[%s8 + $0x30] sm:$0xff]
    %v5144 = vld [vmem:[%s8 + $0x38] sm:$0xff]
    %v5145 = vld [vmem:[%s8 + $0x40] sm:$0xff]
    %v5146 = vld [vmem:[%s8 + $0x48] sm:$0xff]
    %v5147 = vld [vmem:[%s8 + $0x50] sm:$0xff]
    %v5148 = vld [vmem:[%s8 + $0x58] sm:$0xff]
    %v5149 = vld [vmem:[%s8 + $0x60] sm:$0xff]
    %v5150 = vld [vmem:[%s8 + $0x68] sm:$0xff]
    %v5151 = vld [vmem:[%s8 + $0x70] sm:$0xff]
    %v5152 = vld [vmem:[%s8 + $0x78] sm:$0xff]
    %v5153 = vld [vmem:[%s8 + $0x80] sm:$0xff]
    %v5154 = vld [vmem:[%s8 + $0x88] sm:$0xff]
    %v5155 = vld [vmem:[%s8 + $0x90] sm:$0xff]
    %v5156 = vld [vmem:[%s8 + $0x98] sm:$0xff]
    %v5157 = vld [vmem:[%s8 + $0xa0] sm:$0xff]
    %v5158 = vld [vmem:[%s8 + $0xa8] sm:$0xff]
    %v5159 = vld [vmem:[%s8 + $0xb0] sm:$0xff]
    %v5160 = vld [vmem:[%s8 + $0xb8] sm:$0xff]
    %v5161 = vld [vmem:[%s8 + $0xc0] sm:$0xff]
    %v5162 = vld [vmem:[%s8 + $0xc8] sm:$0xff]
    %v5163 = vld [vmem:[%s8 + $0xd0] sm:$0xff]
    %v5164 = vld [vmem:[%s8 + $0xd8] sm:$0xff]
    %v5165 = vld [vmem:[%s8 + $0xe0] sm:$0xff]
    %v5166 = vld [vmem:[%s8 + $0xe8] sm:$0xff]
    %v5167 = vld [vmem:[%s8 + $0xf0] sm:$0xff]
    %v5168 = vld [vmem:[%s8 + $0xf8] sm:$0xff]
    %v5169 = vld [vmem:[%s8 + $0x100] sm:$0xff]
    %v5170 = vld [vmem:[%s8 + $0x108] sm:$0xff]
    %v5171 = vld [vmem:[%s8 + $0x110] sm:$0xff]
    %v5172 = vld [vmem:[%s8 + $0x118] sm:$0xff]
    %v5173 = vld [vmem:[%s8 + $0x120] sm:$0xff]
    %v5174 = vld [vmem:[%s8 + $0x128] sm:$0xff]
    %v5175 = vld [vmem:[%s8 + $0x130] sm:$0xff]
    %v5176 = vld [vmem:[%s8 + $0x138] sm:$0xff]
    %v5177 = vld [vmem:[%s8 + $0x140] sm:$0xff]
    %v5178 = vld [vmem:[%s8 + $0x148] sm:$0xff]
    %5180 = vset.pattern.permute.xlu0 0
    %5181 = vperm.xlu0 %5180, %v5137
    %v5182 = vpop.permute.xlu0 %5181
    %5185 = vset.pattern.permute.xlu0 0
    %5186 = vperm.xlu0 %5185, %v5138
    %v5187 = vpop.permute.xlu0 %5186
    %5190 = vset.pattern.permute.xlu0 0
    %5191 = vperm.xlu0 %5190, %v5139
    %v5192 = vpop.permute.xlu0 %5191
    %5195 = vset.pattern.permute.xlu0 0
    %5196 = vperm.xlu0 %5195, %v5140
    %v5197 = vpop.permute.xlu0 %5196
    %5200 = vset.pattern.permute.xlu0 0
    %5201 = vperm.xlu0 %5200, %v5141
    %v5202 = vpop.permute.xlu0 %5201
    %5205 = vset.pattern.permute.xlu0 0
    %5206 = vperm.xlu0 %5205, %v5142
    %v5207 = vpop.permute.xlu0 %5206
    %5210 = vset.pattern.permute.xlu0 0
    %5211 = vperm.xlu0 %5210, %v5143
    %v5212 = vpop.permute.xlu0 %5211
    %5215 = vset.pattern.permute.xlu0 0
    %5216 = vperm.xlu0 %5215, %v5144
    %v5217 = vpop.permute.xlu0 %5216
    %5220 = vset.pattern.permute.xlu0 0
    %5221 = vperm.xlu0 %5220, %v5145
    %v5222 = vpop.permute.xlu0 %5221
    %5225 = vset.pattern.permute.xlu0 0
    %5226 = vperm.xlu0 %5225, %v5146
    %v5227 = vpop.permute.xlu0 %5226
    %5230 = vset.pattern.permute.xlu0 0
    %5231 = vperm.xlu0 %5230, %v5147
    %v5232 = vpop.permute.xlu0 %5231
    %5235 = vset.pattern.permute.xlu0 0
    %5236 = vperm.xlu0 %5235, %v5148
    %v5237 = vpop.permute.xlu0 %5236
    %5240 = vset.pattern.permute.xlu0 0
    %5241 = vperm.xlu0 %5240, %v5149
    %v5242 = vpop.permute.xlu0 %5241
    %5245 = vset.pattern.permute.xlu0 0
    %5246 = vperm.xlu0 %5245, %v5150
    %v5247 = vpop.permute.xlu0 %5246
    %5250 = vset.pattern.permute.xlu0 0
    %5251 = vperm.xlu0 %5250, %v5151
    %v5252 = vpop.permute.xlu0 %5251
    %5255 = vset.pattern.permute.xlu0 0
    %5256 = vperm.xlu0 %5255, %v5152
    %v5257 = vpop.permute.xlu0 %5256
    %5260 = vset.pattern.permute.xlu0 0
    %5261 = vperm.xlu0 %5260, %v5153
    %v5262 = vpop.permute.xlu0 %5261
    %5265 = vset.pattern.permute.xlu0 0
    %5266 = vperm.xlu0 %5265, %v5154
    %v5267 = vpop.permute.xlu0 %5266
    %5270 = vset.pattern.permute.xlu0 0
    %5271 = vperm.xlu0 %5270, %v5155
    %v5272 = vpop.permute.xlu0 %5271
    %5275 = vset.pattern.permute.xlu0 0
    %5276 = vperm.xlu0 %5275, %v5156
    %v5277 = vpop.permute.xlu0 %5276
    %5280 = vset.pattern.permute.xlu0 0
    %5281 = vperm.xlu0 %5280, %v5157
    %v5282 = vpop.permute.xlu0 %5281
    %5285 = vset.pattern.permute.xlu0 0
    %5286 = vperm.xlu0 %5285, %v5158
    %v5287 = vpop.permute.xlu0 %5286
    %5290 = vset.pattern.permute.xlu0 0
    %5291 = vperm.xlu0 %5290, %v5159
    %v5292 = vpop.permute.xlu0 %5291
    %5295 = vset.pattern.permute.xlu0 0
    %5296 = vperm.xlu0 %5295, %v5160
    %v5297 = vpop.permute.xlu0 %5296
    %5300 = vset.pattern.permute.xlu0 0
    %5301 = vperm.xlu0 %5300, %v5161
    %v5302 = vpop.permute.xlu0 %5301
    %5305 = vset.pattern.permute.xlu0 0
    %5306 = vperm.xlu0 %5305, %v5162
    %v5307 = vpop.permute.xlu0 %5306
    %5310 = vset.pattern.permute.xlu0 0
    %5311 = vperm.xlu0 %5310, %v5163
    %v5312 = vpop.permute.xlu0 %5311
    %5315 = vset.pattern.permute.xlu0 0
    %5316 = vperm.xlu0 %5315, %v5164
    %v5317 = vpop.permute.xlu0 %5316
    %5320 = vset.pattern.permute.xlu0 0
    %5321 = vperm.xlu0 %5320, %v5165
    %v5322 = vpop.permute.xlu0 %5321
    %5325 = vset.pattern.permute.xlu0 0
    %5326 = vperm.xlu0 %5325, %v5166
    %v5327 = vpop.permute.xlu0 %5326
    %5330 = vset.pattern.permute.xlu0 0
    %5331 = vperm.xlu0 %5330, %v5167
    %v5332 = vpop.permute.xlu0 %5331
    %5335 = vset.pattern.permute.xlu0 0
    %5336 = vperm.xlu0 %5335, %v5168
    %v5337 = vpop.permute.xlu0 %5336
    %5340 = vset.pattern.permute.xlu0 0
    %5341 = vperm.xlu0 %5340, %v5169
    %v5342 = vpop.permute.xlu0 %5341
    %5345 = vset.pattern.permute.xlu0 0
    %5346 = vperm.xlu0 %5345, %v5170
    %v5347 = vpop.permute.xlu0 %5346
    %5350 = vset.pattern.permute.xlu0 0
    %5351 = vperm.xlu0 %5350, %v5171
    %v5352 = vpop.permute.xlu0 %5351
    %5355 = vset.pattern.permute.xlu0 0
    %5356 = vperm.xlu0 %5355, %v5172
    %v5357 = vpop.permute.xlu0 %5356
    %5360 = vset.pattern.permute.xlu0 0
    %5361 = vperm.xlu0 %5360, %v5173
    %v5362 = vpop.permute.xlu0 %5361
    %5365 = vset.pattern.permute.xlu0 0
    %5366 = vperm.xlu0 %5365, %v5174
    %v5367 = vpop.permute.xlu0 %5366
    %5370 = vset.pattern.permute.xlu0 0
    %5371 = vperm.xlu0 %5370, %v5175
    %v5372 = vpop.permute.xlu0 %5371
    %5375 = vset.pattern.permute.xlu0 0
    %5376 = vperm.xlu0 %5375, %v5176
    %v5377 = vpop.permute.xlu0 %5376
    %5380 = vset.pattern.permute.xlu0 0
    %5381 = vperm.xlu0 %5380, %v5177
    %v5382 = vpop.permute.xlu0 %5381
    %5385 = vset.pattern.permute.xlu0 0
    %5386 = vperm.xlu0 %5385, %v5178
    %v5387 = vpop.permute.xlu0 %5386
    %v5389 = vadd.f32 %v5053, %v5182
    %v5390 = vadd.f32 %v5054, %v5182
    %v5391 = vadd.f32 %v5055, %v5187
    %v5392 = vadd.f32 %v5056, %v5187
    %v5393 = vadd.f32 %v5057, %v5192
    %v5394 = vadd.f32 %v5058, %v5192
    %v5395 = vadd.f32 %v5059, %v5197
    %v5396 = vadd.f32 %v5060, %v5197
    %v5397 = vadd.f32 %v5061, %v5202
    %v5398 = vadd.f32 %v5062, %v5202
    %v5399 = vadd.f32 %v5063, %v5207
    %v5400 = vadd.f32 %v5064, %v5207
    %v5401 = vadd.f32 %v5065, %v5212
    %v5402 = vadd.f32 %v5066, %v5212
    %v5403 = vadd.f32 %v5067, %v5217
    %v5404 = vadd.f32 %v5068, %v5217
    %v5405 = vadd.f32 %v5069, %v5222
    %v5406 = vadd.f32 %v5070, %v5222
    %v5407 = vadd.f32 %v5071, %v5227
    %v5408 = vadd.f32 %v5072, %v5227
    %v5409 = vadd.f32 %v5073, %v5232
    %v5410 = vadd.f32 %v5074, %v5232
    %v5411 = vadd.f32 %v5075, %v5237
    %v5412 = vadd.f32 %v5076, %v5237
    %v5413 = vadd.f32 %v5077, %v5242
    %v5414 = vadd.f32 %v5078, %v5242
    %v5415 = vadd.f32 %v5079, %v5247
    %v5416 = vadd.f32 %v5080, %v5247
    %v5417 = vadd.f32 %v5081, %v5252
    %v5418 = vadd.f32 %v5082, %v5252
    %v5419 = vadd.f32 %v5083, %v5257
    %v5420 = vadd.f32 %v5084, %v5257
    %v5421 = vadd.f32 %v5085, %v5262
    %v5422 = vadd.f32 %v5086, %v5262
    %v5423 = vadd.f32 %v5087, %v5267
    %v5424 = vadd.f32 %v5088, %v5267
    %v5425 = vadd.f32 %v5089, %v5272
    %v5426 = vadd.f32 %v5090, %v5272
    %v5427 = vadd.f32 %v5091, %v5277
    %v5428 = vadd.f32 %v5092, %v5277
    %v5429 = vadd.f32 %v5093, %v5282
    %v5430 = vadd.f32 %v5094, %v5282
    %v5431 = vadd.f32 %v5095, %v5287
    %v5432 = vadd.f32 %v5096, %v5287
    %v5433 = vadd.f32 %v5097, %v5292
    %v5434 = vadd.f32 %v5098, %v5292
    %v5435 = vadd.f32 %v5099, %v5297
    %v5436 = vadd.f32 %v5100, %v5297
    %v5437 = vadd.f32 %v5101, %v5302
    %v5438 = vadd.f32 %v5102, %v5302
    %v5439 = vadd.f32 %v5103, %v5307
    %v5440 = vadd.f32 %v5104, %v5307
    %v5441 = vadd.f32 %v5105, %v5312
    %v5442 = vadd.f32 %v5106, %v5312
    %v5443 = vadd.f32 %v5107, %v5317
    %v5444 = vadd.f32 %v5108, %v5317
    %v5445 = vadd.f32 %v5109, %v5322
    %v5446 = vadd.f32 %v5110, %v5322
    %v5447 = vadd.f32 %v5111, %v5327
    %v5448 = vadd.f32 %v5112, %v5327
    %v5449 = vadd.f32 %v5113, %v5332
    %v5450 = vadd.f32 %v5114, %v5332
    %v5451 = vadd.f32 %v5115, %v5337
    %v5452 = vadd.f32 %v5116, %v5337
    %v5453 = vadd.f32 %v5117, %v5342
    %v5454 = vadd.f32 %v5118, %v5342
    %v5455 = vadd.f32 %v5119, %v5347
    %v5456 = vadd.f32 %v5120, %v5347
    %v5457 = vadd.f32 %v5121, %v5352
    %v5458 = vadd.f32 %v5122, %v5352
    %v5459 = vadd.f32 %v5123, %v5357
    %v5460 = vadd.f32 %v5124, %v5357
    %v5461 = vadd.f32 %v5125, %v5362
    %v5462 = vadd.f32 %v5126, %v5362
    %v5463 = vadd.f32 %v5127, %v5367
    %v5464 = vadd.f32 %v5128, %v5367
    %v5465 = vadd.f32 %v5129, %v5372
    %v5466 = vadd.f32 %v5130, %v5372
    %v5467 = vadd.f32 %v5131, %v5377
    %v5468 = vadd.f32 %v5132, %v5377
    %v5469 = vadd.f32 %v5133, %v5382
    %v5470 = vadd.f32 %v5134, %v5382
    %v5471 = vadd.f32 %v5135, %v5387
    %v5472 = vadd.f32 %v5136, %v5387
    %5473 = vst [vmem:[#allocation7] sm:$0xff] %v5389
    %5474 = vst [vmem:[#allocation7 + $0x8] sm:$0xff] %v5390
    %5475 = vst [vmem:[#allocation7 + $0x10] sm:$0xff] %v5391
    %5476 = vst [vmem:[#allocation7 + $0x18] sm:$0xff] %v5392
    %5477 = vst [vmem:[#allocation7 + $0x20] sm:$0xff] %v5393
    %5478 = vst [vmem:[#allocation7 + $0x28] sm:$0xff] %v5394
    %5479 = vst [vmem:[#allocation7 + $0x30] sm:$0xff] %v5395
    %5480 = vst [vmem:[#allocation7 + $0x38] sm:$0xff] %v5396
    %5481 = vst [vmem:[#allocation7 + $0x40] sm:$0xff] %v5397
    %5482 = vst [vmem:[#allocation7 + $0x48] sm:$0xff] %v5398
    %5483 = vst [vmem:[#allocation7 + $0x50] sm:$0xff] %v5399
    %5484 = vst [vmem:[#allocation7 + $0x58] sm:$0xff] %v5400
    %5485 = vst [vmem:[#allocation7 + $0x60] sm:$0xff] %v5401
    %5486 = vst [vmem:[#allocation7 + $0x68] sm:$0xff] %v5402
    %5487 = vst [vmem:[#allocation7 + $0x70] sm:$0xff] %v5403
    %5488 = vst [vmem:[#allocation7 + $0x78] sm:$0xff] %v5404
    %5489 = vst [vmem:[#allocation7 + $0x80] sm:$0xff] %v5405
    %5490 = vst [vmem:[#allocation7 + $0x88] sm:$0xff] %v5406
    %5491 = vst [vmem:[#allocation7 + $0x90] sm:$0xff] %v5407
    %5492 = vst [vmem:[#allocation7 + $0x98] sm:$0xff] %v5408
    %5493 = vst [vmem:[#allocation7 + $0xa0] sm:$0xff] %v5409
    %5494 = vst [vmem:[#allocation7 + $0xa8] sm:$0xff] %v5410
    %5495 = vst [vmem:[#allocation7 + $0xb0] sm:$0xff] %v5411
    %5496 = vst [vmem:[#allocation7 + $0xb8] sm:$0xff] %v5412
    %5497 = vst [vmem:[#allocation7 + $0xc0] sm:$0xff] %v5413
    %5498 = vst [vmem:[#allocation7 + $0xc8] sm:$0xff] %v5414
    %5499 = vst [vmem:[#allocation7 + $0xd0] sm:$0xff] %v5415
    %5500 = vst [vmem:[#allocation7 + $0xd8] sm:$0xff] %v5416
    %5501 = vst [vmem:[#allocation7 + $0xe0] sm:$0xff] %v5417
    %5502 = vst [vmem:[#allocation7 + $0xe8] sm:$0xff] %v5418
    %5503 = vst [vmem:[#allocation7 + $0xf0] sm:$0xff] %v5419
    %5504 = vst [vmem:[#allocation7 + $0xf8] sm:$0xff] %v5420
    %5505 = vst [vmem:[#allocation7 + $0x100] sm:$0xff] %v5421
    %5506 = vst [vmem:[#allocation7 + $0x108] sm:$0xff] %v5422
    %5507 = vst [vmem:[#allocation7 + $0x110] sm:$0xff] %v5423
    %5508 = vst [vmem:[#allocation7 + $0x118] sm:$0xff] %v5424
    %5509 = vst [vmem:[#allocation7 + $0x120] sm:$0xff] %v5425
    %5510 = vst [vmem:[#allocation7 + $0x128] sm:$0xff] %v5426
    %5511 = vst [vmem:[#allocation7 + $0x130] sm:$0xff] %v5427
    %5512 = vst [vmem:[#allocation7 + $0x138] sm:$0xff] %v5428
    %5513 = vst [vmem:[#allocation7 + $0x140] sm:$0xff] %v5429
    %5514 = vst [vmem:[#allocation7 + $0x148] sm:$0xff] %v5430
    %5515 = vst [vmem:[#allocation7 + $0x150] sm:$0xff] %v5431
    %5516 = vst [vmem:[#allocation7 + $0x158] sm:$0xff] %v5432
    %5517 = vst [vmem:[#allocation7 + $0x160] sm:$0xff] %v5433
    %5518 = vst [vmem:[#allocation7 + $0x168] sm:$0xff] %v5434
    %5519 = vst [vmem:[#allocation7 + $0x170] sm:$0xff] %v5435
    %5520 = vst [vmem:[#allocation7 + $0x178] sm:$0xff] %v5436
    %5521 = vst [vmem:[#allocation7 + $0x180] sm:$0xff] %v5437
    %5522 = vst [vmem:[#allocation7 + $0x188] sm:$0xff] %v5438
    %5523 = vst [vmem:[#allocation7 + $0x190] sm:$0xff] %v5439
    %5524 = vst [vmem:[#allocation7 + $0x198] sm:$0xff] %v5440
    %5525 = vst [vmem:[#allocation7 + $0x1a0] sm:$0xff] %v5441
    %5526 = vst [vmem:[#allocation7 + $0x1a8] sm:$0xff] %v5442
    %5527 = vst [vmem:[#allocation7 + $0x1b0] sm:$0xff] %v5443
    %5528 = vst [vmem:[#allocation7 + $0x1b8] sm:$0xff] %v5444
    %5529 = vst [vmem:[#allocation7 + $0x1c0] sm:$0xff] %v5445
    %5530 = vst [vmem:[#allocation7 + $0x1c8] sm:$0xff] %v5446
    %5531 = vst [vmem:[#allocation7 + $0x1d0] sm:$0xff] %v5447
    %5532 = vst [vmem:[#allocation7 + $0x1d8] sm:$0xff] %v5448
    %5533 = vst [vmem:[#allocation7 + $0x1e0] sm:$0xff] %v5449
    %5534 = vst [vmem:[#allocation7 + $0x1e8] sm:$0xff] %v5450
    %5535 = vst [vmem:[#allocation7 + $0x1f0] sm:$0xff] %v5451
    %5536 = vst [vmem:[#allocation7 + $0x1f8] sm:$0xff] %v5452
    %5537 = vst [vmem:[#allocation7 + $0x200] sm:$0xff] %v5453
    %5538 = vst [vmem:[#allocation7 + $0x208] sm:$0xff] %v5454
    %5539 = vst [vmem:[#allocation7 + $0x210] sm:$0xff] %v5455
    %5540 = vst [vmem:[#allocation7 + $0x218] sm:$0xff] %v5456
    %5541 = vst [vmem:[#allocation7 + $0x220] sm:$0xff] %v5457
    %5542 = vst [vmem:[#allocation7 + $0x228] sm:$0xff] %v5458
    %5543 = vst [vmem:[#allocation7 + $0x230] sm:$0xff] %v5459
    %5544 = vst [vmem:[#allocation7 + $0x238] sm:$0xff] %v5460
    %5545 = vst [vmem:[#allocation7 + $0x240] sm:$0xff] %v5461
    %5546 = vst [vmem:[#allocation7 + $0x248] sm:$0xff] %v5462
    %5547 = vst [vmem:[#allocation7 + $0x250] sm:$0xff] %v5463
    %5548 = vst [vmem:[#allocation7 + $0x258] sm:$0xff] %v5464
    %5549 = vst [vmem:[#allocation7 + $0x260] sm:$0xff] %v5465
    %5550 = vst [vmem:[#allocation7 + $0x268] sm:$0xff] %v5466
    %5551 = vst [vmem:[#allocation7 + $0x270] sm:$0xff] %v5467
    %5552 = vst [vmem:[#allocation7 + $0x278] sm:$0xff] %v5468
    %5553 = vst [vmem:[#allocation7 + $0x280] sm:$0xff] %v5469
    %5554 = vst [vmem:[#allocation7 + $0x288] sm:$0xff] %v5470
    %5555 = vst [vmem:[#allocation7 + $0x290] sm:$0xff] %v5471
    %5556 = vst [vmem:[#allocation7 + $0x298] sm:$0xff] %v5472
    // Predicated region
    $region46: #{tpu_custom_call.1} parent=1 // pred_check
      _
    $region47: #{tpu_custom_call.1} parent=1 // pred_check_branch
      %5558 = sbr.rel (0) target = $region49
    $region48: #{tpu_custom_call.1} parent=1 // pred_region
      %s5560 = ssub.s32 10752, 10752
      %5561 = vsyncadd [#allocation4], %s5560
      %s5562 = sshll.u32 [#allocation7], 4
      %s5563 = int_to_ptr.vmem [resolvable:$true] %s5562
      %5568 = dma.vmem_to_hbm [thread:$0]  %s5563, 10752, %s9, [#allocation4], 256, 256, 16
    $region49: #{tpu_custom_call.1} parent=1 // pred_fallthru
      _
    // Predicated region
    $region50: #{tpu_custom_call.1} parent=1 // pred_check
      _
    $region51: #{tpu_custom_call.1} parent=1 // pred_check_branch
      %5570 = sbr.rel (0) target = $region53
    $region52: #{tpu_custom_call.1} parent=1 // pred_region
      %5571 = dma.done [#allocation4], 10752
    $region53: #{tpu_custom_call.1} parent=1 // pred_fallthru
      _
    %5572 = vsyncpa [#allocation3], 1
    %5573 = vsyncpa [#allocation6], 1
    %5574 = vsyncpa [#allocation4], 1

</llo_original>
